<compile_context>
chip_gen: v7x
topology: tpu7x:2x2x1
jax: 0.10.0
libtpu: 0.0.40
codegen_flags: <defaults>
</compile_context>

<pallas_src>
import jax
import jax.numpy as jnp
from jax import lax
from jax.experimental import pallas as pl
from jax.experimental.pallas import tpu as pltpu

_LANE = 128
_SUBLANE = 8
_VMEM_LIMIT = 32 * 1024 * 1024          # legal on v5e/v6e/v7x


def _round_up(x, m):
    return (x + m - 1) // m * m


def _pick_tile(n_rows, per_row_bytes, *, budget_bytes=16 * 1024 * 1024, min_steps=4):
    """Row tile (multiple of 8).

    per_row_bytes must already account for (8,128) lane padding AND the x2
    double-buffering of pipelined blocks.  The tile is capped so the pipelined
    buffers fit `budget_bytes` (well under the 32 MiB scoped limit we request)
    and, when possible, so the 1-D grid has at least `min_steps` steps (lets
    dimension_semantics=("parallel",) shard tiles across v7x's 2 TensorCores).
    """
    by_budget = max(_SUBLANE, (budget_bytes // max(per_row_bytes, 1)) // _SUBLANE * _SUBLANE)
    by_steps = _round_up((n_rows + min_steps - 1) // min_steps, _SUBLANE)
    return max(_SUBLANE, min(by_budget, by_steps, _round_up(n_rows, _SUBLANE)))


# --------------- fused conv3x3(pad=1) + maxpool2x2 + bias + ReLU --------------

def _conv_relu_pool_kernel(col_ref, w_ref, b_ref, o_ref):
    # col_ref: [4, T, 9*Cin] bf16   leading axis = position inside the 2x2 pool window
    # w_ref:   [9*Cin, Cout] bf16
    # b_ref:   [1, Cout]     f32
    # o_ref:   [T, Cout]            rows = (b, ho, wo) of the pooled output
    w = w_ref[...]
    acc = jnp.dot(col_ref[0], w, preferred_element_type=jnp.float32)
    for k in range(1, 4):  # static unroll over the 4 pixels of each pool window
        acc = jnp.maximum(acc, jnp.dot(col_ref[k], w, preferred_element_type=jnp.float32))
    # bias + ReLU applied once, after the pool max (bias const, ReLU monotone).
    o_ref[...] = jnp.maximum(acc + b_ref[...], 0.0).astype(o_ref.dtype)


def _im2col_pool_blocked(x):
    """x: [B, H, W, Cin] -> [4, B*(H//2)*(W//2), 9*Cin].

    Row r of block k = py*2+px holds the 3x3 patch (tap-major, channel-minor)
    around pixel (h, w) = (2*ho+py, 2*wo+px), with r = (b*Ho + ho)*Wo + wo.
    With allow_input_fusion this whole pad/slice/concat/transpose chain can be
    fused by XLA into the pallas_call input (no 9x HBM materialization).
    """
    B, H, W, Cin = x.shape
    Ho, Wo = H // 2, W // 2
    xp = jnp.pad(x, ((0, 0), (1, 1), (1, 1), (0, 0)))
    taps = [xp[:, dy:dy + H, dx:dx + W, :] for dy in range(3) for dx in range(3)]
    col = jnp.concatenate(taps, axis=-1)                      # [B, H, W, 9*Cin]
    col = col.reshape(B, Ho, 2, Wo, 2, 9 * Cin)
    col = col.transpose(2, 4, 0, 1, 3, 5)                     # [py, px, B, Ho, Wo, 9Cin]
    return col.reshape(4, B * Ho * Wo, 9 * Cin)


def conv3x3_relu_pool(x, w, b, *, out_dtype=jnp.float32):
    """x: [B,H,W,Cin], w: [3,3,Cin,Cout] (HWIO), b: [Cout].
    conv(stride=1, pad=1) -> ReLU -> maxpool(2,2).  Returns [B, H//2, W//2, Cout]."""
    B, H, W, Cin = x.shape
    Cout = w.shape[-1]
    Ho, Wo = H // 2, W // 2
    K = 9 * Cin
    N = B * Ho * Wo

    col = _im2col_pool_blocked(x.astype(jnp.bfloat16))        # [4, N, K] bf16
    wm = w.reshape(K, Cout).astype(jnp.bfloat16)
    bm = b.reshape(1, Cout).astype(jnp.float32)

    # Real (lane-padded, double-buffered) VMEM bytes per output row.
    per_row = (2 * 4 * _round_up(K, _LANE) * 2                 # col blocks (bf16)
               + 2 * _round_up(Cout, _LANE) * jnp.dtype(out_dtype).itemsize)
    tile = _pick_tile(N, per_row)
    n_pad = _round_up(N, tile)                                 # cdiv grid via row padding
    if n_pad != N:
        col = jnp.pad(col, ((0, 0), (0, n_pad - N), (0, 0)))

    out = pl.pallas_call(
        _conv_relu_pool_kernel,
        out_shape=jax.ShapeDtypeStruct((n_pad, Cout), out_dtype),
        grid=(n_pad // tile,),
        in_specs=[
            pl.BlockSpec((4, tile, K), lambda i: (0, i, 0)),
            pl.BlockSpec((K, Cout), lambda i: (0, 0)),
            pl.BlockSpec((1, Cout), lambda i: (0, 0)),
        ],
        out_specs=pl.BlockSpec((tile, Cout), lambda i: (i, 0)),
        compiler_params=pltpu.CompilerParams(
            dimension_semantics=("parallel",),
            allow_input_fusion=[True, False, False],           # fuse im2col producer
            vmem_limit_bytes=_VMEM_LIMIT,
        ),
    )(col, wm, bm)
    return out[:N].reshape(B, Ho, Wo, Cout)


# ----------------------- fused fc1 + ReLU + fc2 head --------------------------

def _mlp_kernel(x_ref, w1_ref, b1_ref, w2_ref, b2_ref, o_ref):
    h = jnp.dot(x_ref[...], w1_ref[...], preferred_element_type=jnp.float32) + b1_ref[...]
    h = jnp.maximum(h, 0.0)     # hidden activations stay in VMEM (no HBM round-trip)
    # TODO(synk): Dropout(p=0.3) before fc1 and fc2 is identity in eval mode; not applied.
    o_ref[...] = (jnp.dot(h, w2_ref[...], preferred_element_type=jnp.float32)
                  + b2_ref[...]).astype(o_ref.dtype)


def mlp_head(x, w1, b1, w2, b2):
    """x: [B, Din] -> relu(x@w1+b1)@w2+b2, one fused kernel, grid over row tiles."""
    B, Din = x.shape
    Dh = w1.shape[1]
    Dout = w2.shape[1]

    per_row = 2 * _round_up(Din, _LANE) * 4 + 2 * _round_up(Dout, _LANE) * 4
    tile = _pick_tile(B, per_row, budget_bytes=12 * 1024 * 1024)
    b_pad = _round_up(B, tile)
    xp = jnp.pad(x, ((0, b_pad - B), (0, 0))) if b_pad != B else x

    out = pl.pallas_call(
        _mlp_kernel,
        out_shape=jax.ShapeDtypeStruct((b_pad, Dout), jnp.float32),
        grid=(b_pad // tile,),
        in_specs=[
            pl.BlockSpec((tile, Din), lambda i: (i, 0)),
            pl.BlockSpec((Din, Dh), lambda i: (0, 0)),
            pl.BlockSpec((1, Dh), lambda i: (0, 0)),
            pl.BlockSpec((Dh, Dout), lambda i: (0, 0)),
            pl.BlockSpec((1, Dout), lambda i: (0, 0)),
        ],
        out_specs=pl.BlockSpec((tile, Dout), lambda i: (i, 0)),
        compiler_params=pltpu.CompilerParams(
            dimension_semantics=("parallel",),
            allow_input_fusion=[True, False, False, False, False],
            vmem_limit_bytes=_VMEM_LIMIT,
        ),
    )(xp, w1, b1.reshape(1, Dh), w2, b2.reshape(1, Dout))
    return out[:B]


# ------------------------------ full forward ---------------------------------

def prepare_params(params):
    """One-time (outside jit) inference-param prep: permute fc1's weight rows
    from PyTorch's NCHW-flatten (c,h,w) order to the kernel's (h,w,c) order so
    the forward pass never has to transpose activations or weights."""
    p = dict(params)
    p['fw1'] = (params['fw1'].reshape(32, 7, 7, 128)
                .transpose(1, 2, 0, 3).reshape(32 * 7 * 7, 128))
    return p


@jax.jit
def mnist_cnn_forward(x, params):
    """x: [B, 1, 28, 28] float32 (PyTorch NCHW). `params` must be prepare_params()-ed."""
    B = x.shape[0]
    xh = jnp.transpose(x, (0, 2, 3, 1))                               # NHWC [B,28,28,1]
    y = conv3x3_relu_pool(xh, params['w1'], params['b1'],
                          out_dtype=jnp.bfloat16)                     # [B,14,14,16]
    y = conv3x3_relu_pool(y, params['w2'], params['b2'],
                          out_dtype=jnp.float32)                      # [B,7,7,32]
    flat = y.reshape(B, 7 * 7 * 32)                                   # (h,w,c)-ordered features
    return mlp_head(flat, params['fw1'], params['fb1'], params['fw2'], params['fb2'])


def init_params(key):
    ks = jax.random.split(key, 8)

    def u(k, shape, fan_in):
        bound = 1.0 / (fan_in ** 0.5)
        return jax.random.uniform(k, shape, jnp.float32, -bound, bound)

    return {
        'w1': u(ks[0], (3, 3, 1, 16), 9 * 1),         # conv1 weight (HWIO)
        'b1': u(ks[1], (16,), 9 * 1),
        'w2': u(ks[2], (3, 3, 16, 32), 9 * 16),       # conv2 weight (HWIO)
        'b2': u(ks[3], (32,), 9 * 16),
        'fw1': u(ks[4], (32 * 7 * 7, 128), 32 * 7 * 7),   # rows in PyTorch (c,h,w) order
        'fb1': u(ks[5], (128,), 32 * 7 * 7),
        'fw2': u(ks[6], (128, 10), 128),
        'fb2': u(ks[7], (10,), 128),
    }


# ------------------------- pure-XLA reference check ---------------------------

def _reference_forward(x, params):
    dn = ('NHWC', 'HWIO', 'NHWC')
    hp = lax.Precision.HIGHEST

    def conv_relu_pool_ref(t, w, b):
        t = lax.conv_general_dilated(t, w, (1, 1), [(1, 1), (1, 1)],
                                     dimension_numbers=dn, precision=hp) + b
        t = jnp.maximum(t, 0.0)
        B, H, W, C = t.shape
        return jnp.max(t.reshape(B, H // 2, 2, W // 2, 2, C), axis=(2, 4))

    t = jnp.transpose(x, (0, 2, 3, 1))
    t = conv_relu_pool_ref(t, params['w1'], params['b1'])
    t = conv_relu_pool_ref(t, params['w2'], params['b2'])
    flat = jnp.transpose(t, (0, 3, 1, 2)).reshape(x.shape[0], 32 * 7 * 7)   # NCHW flatten
    h = jnp.maximum(jnp.dot(flat, params['fw1'], precision=hp) + params['fb1'], 0.0)
    return jnp.dot(h, params['fw2'], precision=hp) + params['fb2']


if __name__ == "__main__":
    key = jax.random.PRNGKey(0)
    pkey, xkey = jax.random.split(key)
    params = init_params(pkey)
    infer_params = prepare_params(params)      # one-time weight permutation (outside jit)
    # MNIST-shaped input (28x28 is required by fc1 = 32*7*7), small batch.
    x = jax.random.normal(xkey, (2, 1, 28, 28), dtype=jnp.float32)
    out = jax.block_until_ready(mnist_cnn_forward(x, infer_params))
    assert out.shape == (2, 10) and out.dtype == jnp.float32
    ref = _reference_forward(x, params)
    err = float(jnp.max(jnp.abs(out - ref)))
    assert err < 5e-2, f"kernel/reference mismatch: max abs err = {err}"
    print("KERNEL_OK")
</pallas_src>

<mosaic_0001>
module attributes {stable_mosaic.version = 11 : i64} {
  func.func @_conv_relu_pool_kernel(%arg0: i32, %arg1: memref<4x104x9xbf16, #tpu.memory_space<vmem>>, %arg2: memref<9x16xbf16, #tpu.memory_space<vmem>>, %arg3: memref<1x16xf32, #tpu.memory_space<vmem>>, %arg4: memref<104x16xbf16, #tpu.memory_space<vmem>>) attributes {dimension_semantics = [#tpu.dimension_semantics<parallel>], iteration_bounds = array<i64: 4>, scalar_prefetch = 0 : i64, scratch_operands = 0 : i64, tpu.core_type = #tpu.core_type<tc>, window_params = [{transform_indices = @transform_0, window_bounds = array<i64: 4, 104, 9>}, {pipeline_mode = #tpu.pipeline_mode<synchronous>, transform_indices = @transform_1, window_bounds = array<i64: 9, 16>}, {pipeline_mode = #tpu.pipeline_mode<synchronous>, transform_indices = @transform_2, window_bounds = array<i64: 1, 16>}, {transform_indices = @transform_3, window_bounds = array<i64: 104, 16>}]} {
    %c0 = arith.constant 0 : index
    %c0_0 = arith.constant 0 : index
    %0 = vector.load %arg2[%c0, %c0_0] : memref<9x16xbf16, #tpu.memory_space<vmem>>, vector<9x16xbf16>
    %c0_1 = arith.constant 0 : index
    %c0_2 = arith.constant 0 : index
    %c0_3 = arith.constant 0 : index
    %1 = vector.load %arg1[%c0_1, %c0_2, %c0_3] : memref<4x104x9xbf16, #tpu.memory_space<vmem>>, vector<1x104x9xbf16>
    %2 = vector.shape_cast %1 : vector<1x104x9xbf16> to vector<104x9xbf16>
    %cst = arith.constant dense<0.000000e+00> : vector<104x16xf32>
    %3 = tpu.matmul %2, %0, %cst {dimension_numbers = #tpu.dot_dimension_numbers<[1], [0], [0], [1], [0, 0, 1, 1], [], []>} : vector<104x9xbf16>, vector<9x16xbf16>, vector<104x16xf32> -> vector<104x16xf32>
    %c1 = arith.constant 1 : index
    %c0_4 = arith.constant 0 : index
    %c0_5 = arith.constant 0 : index
    %4 = vector.load %arg1[%c1, %c0_4, %c0_5] : memref<4x104x9xbf16, #tpu.memory_space<vmem>>, vector<1x104x9xbf16>
    %5 = vector.shape_cast %4 : vector<1x104x9xbf16> to vector<104x9xbf16>
    %cst_6 = arith.constant dense<0.000000e+00> : vector<104x16xf32>
    %6 = tpu.matmul %5, %0, %cst_6 {dimension_numbers = #tpu.dot_dimension_numbers<[1], [0], [0], [1], [0, 0, 1, 1], [], []>} : vector<104x9xbf16>, vector<9x16xbf16>, vector<104x16xf32> -> vector<104x16xf32>
    %7 = arith.maximumf %3, %6 : vector<104x16xf32>
    %c2 = arith.constant 2 : index
    %c0_7 = arith.constant 0 : index
    %c0_8 = arith.constant 0 : index
    %8 = vector.load %arg1[%c2, %c0_7, %c0_8] : memref<4x104x9xbf16, #tpu.memory_space<vmem>>, vector<1x104x9xbf16>
    %9 = vector.shape_cast %8 : vector<1x104x9xbf16> to vector<104x9xbf16>
    %cst_9 = arith.constant dense<0.000000e+00> : vector<104x16xf32>
    %10 = tpu.matmul %9, %0, %cst_9 {dimension_numbers = #tpu.dot_dimension_numbers<[1], [0], [0], [1], [0, 0, 1, 1], [], []>} : vector<104x9xbf16>, vector<9x16xbf16>, vector<104x16xf32> -> vector<104x16xf32>
    %11 = arith.maximumf %7, %10 : vector<104x16xf32>
    %c3 = arith.constant 3 : index
    %c0_10 = arith.constant 0 : index
    %c0_11 = arith.constant 0 : index
    %12 = vector.load %arg1[%c3, %c0_10, %c0_11] : memref<4x104x9xbf16, #tpu.memory_space<vmem>>, vector<1x104x9xbf16>
    %13 = vector.shape_cast %12 : vector<1x104x9xbf16> to vector<104x9xbf16>
    %cst_12 = arith.constant dense<0.000000e+00> : vector<104x16xf32>
    %14 = tpu.matmul %13, %0, %cst_12 {dimension_numbers = #tpu.dot_dimension_numbers<[1], [0], [0], [1], [0, 0, 1, 1], [], []>} : vector<104x9xbf16>, vector<9x16xbf16>, vector<104x16xf32> -> vector<104x16xf32>
    %15 = arith.maximumf %11, %14 : vector<104x16xf32>
    %c0_13 = arith.constant 0 : index
    %c0_14 = arith.constant 0 : index
    %16 = vector.load %arg3[%c0_13, %c0_14] : memref<1x16xf32, #tpu.memory_space<vmem>>, vector<1x16xf32>
    %17 = vector.broadcast %16 : vector<1x16xf32> to vector<104x16xf32>
    %18 = arith.addf %15, %17 : vector<104x16xf32>
    %cst_15 = arith.constant 0.000000e+00 : f32
    %19 = vector.broadcast %cst_15 : f32 to vector<104x16xf32>
    %20 = arith.maximumf %18, %19 : vector<104x16xf32>
    %21 = arith.truncf %20 : vector<104x16xf32> to vector<104x16xbf16>
    %c0_16 = arith.constant 0 : index
    %c0_17 = arith.constant 0 : index
    %22 = vector.load %arg4[%c0_16, %c0_17] : memref<104x16xbf16, #tpu.memory_space<vmem>>, vector<104x16xbf16>
    tpu.vector_store %arg4[%c0_16, %c0_17], %21 {strides = array<i32>} : memref<104x16xbf16, #tpu.memory_space<vmem>>, vector<104x16xbf16>,
    return
  }
  func.func @transform_0(%arg0: i32) -> (i32, i32, i32) {
    %c0_i32 = arith.constant 0 : i32
    %c0_i32_0 = arith.constant 0 : i32
    %c0_i32_1 = arith.constant 0 : i32
    return %c0_i32, %arg0, %c0_i32_0 : i32, i32, i32
  }
  func.func @transform_1(%arg0: i32) -> (i32, i32) {
    %c0_i32 = arith.constant 0 : i32
    %c0_i32_0 = arith.constant 0 : i32
    %c0_i32_1 = arith.constant 0 : i32
    return %c0_i32, %c0_i32_0 : i32, i32
  }
  func.func @transform_2(%arg0: i32) -> (i32, i32) {
    %c0_i32 = arith.constant 0 : i32
    %c0_i32_0 = arith.constant 0 : i32
    %c0_i32_1 = arith.constant 0 : i32
    return %c0_i32, %c0_i32_0 : i32, i32
  }
  func.func @transform_3(%arg0: i32) -> (i32, i32) {
    %c0_i32 = arith.constant 0 : i32
    %c0_i32_0 = arith.constant 0 : i32
    return %arg0, %c0_i32 : i32, i32
  }
}

module attributes {stable_mosaic.version = 11 : i64} {
  func.func @_conv_relu_pool_kernel(%arg0: i32, %arg1: memref<4x32x144xbf16, #tpu.memory_space<vmem>>, %arg2: memref<144x32xbf16, #tpu.memory_space<vmem>>, %arg3: memref<1x32xf32, #tpu.memory_space<vmem>>, %arg4: memref<32x32xf32, #tpu.memory_space<vmem>>) attributes {dimension_semantics = [#tpu.dimension_semantics<parallel>], iteration_bounds = array<i64: 4>, scalar_prefetch = 0 : i64, scratch_operands = 0 : i64, tpu.core_type = #tpu.core_type<tc>, window_params = [{transform_indices = @transform_0, window_bounds = array<i64: 4, 32, 144>}, {pipeline_mode = #tpu.pipeline_mode<synchronous>, transform_indices = @transform_1, window_bounds = array<i64: 144, 32>}, {pipeline_mode = #tpu.pipeline_mode<synchronous>, transform_indices = @transform_2, window_bounds = array<i64: 1, 32>}, {transform_indices = @transform_3, window_bounds = array<i64: 32, 32>}]} {
    %c0 = arith.constant 0 : index
    %c0_0 = arith.constant 0 : index
    %0 = vector.load %arg2[%c0, %c0_0] : memref<144x32xbf16, #tpu.memory_space<vmem>>, vector<144x32xbf16>
    %c0_1 = arith.constant 0 : index
    %c0_2 = arith.constant 0 : index
    %c0_3 = arith.constant 0 : index
    %1 = vector.load %arg1[%c0_1, %c0_2, %c0_3] : memref<4x32x144xbf16, #tpu.memory_space<vmem>>, vector<1x32x144xbf16>
    %2 = vector.shape_cast %1 : vector<1x32x144xbf16> to vector<32x144xbf16>
    %cst = arith.constant dense<0.000000e+00> : vector<32x32xf32>
    %3 = tpu.matmul %2, %0, %cst {dimension_numbers = #tpu.dot_dimension_numbers<[1], [0], [0], [1], [0, 0, 1, 1], [], []>} : vector<32x144xbf16>, vector<144x32xbf16>, vector<32x32xf32> -> vector<32x32xf32>
    %c1 = arith.constant 1 : index
    %c0_4 = arith.constant 0 : index
    %c0_5 = arith.constant 0 : index
    %4 = vector.load %arg1[%c1, %c0_4, %c0_5] : memref<4x32x144xbf16, #tpu.memory_space<vmem>>, vector<1x32x144xbf16>
    %5 = vector.shape_cast %4 : vector<1x32x144xbf16> to vector<32x144xbf16>
    %cst_6 = arith.constant dense<0.000000e+00> : vector<32x32xf32>
    %6 = tpu.matmul %5, %0, %cst_6 {dimension_numbers = #tpu.dot_dimension_numbers<[1], [0], [0], [1], [0, 0, 1, 1], [], []>} : vector<32x144xbf16>, vector<144x32xbf16>, vector<32x32xf32> -> vector<32x32xf32>
    %7 = arith.maximumf %3, %6 : vector<32x32xf32>
    %c2 = arith.constant 2 : index
    %c0_7 = arith.constant 0 : index
    %c0_8 = arith.constant 0 : index
    %8 = vector.load %arg1[%c2, %c0_7, %c0_8] : memref<4x32x144xbf16, #tpu.memory_space<vmem>>, vector<1x32x144xbf16>
    %9 = vector.shape_cast %8 : vector<1x32x144xbf16> to vector<32x144xbf16>
    %cst_9 = arith.constant dense<0.000000e+00> : vector<32x32xf32>
    %10 = tpu.matmul %9, %0, %cst_9 {dimension_numbers = #tpu.dot_dimension_numbers<[1], [0], [0], [1], [0, 0, 1, 1], [], []>} : vector<32x144xbf16>, vector<144x32xbf16>, vector<32x32xf32> -> vector<32x32xf32>
    %11 = arith.maximumf %7, %10 : vector<32x32xf32>
    %c3 = arith.constant 3 : index
    %c0_10 = arith.constant 0 : index
    %c0_11 = arith.constant 0 : index
    %12 = vector.load %arg1[%c3, %c0_10, %c0_11] : memref<4x32x144xbf16, #tpu.memory_space<vmem>>, vector<1x32x144xbf16>
    %13 = vector.shape_cast %12 : vector<1x32x144xbf16> to vector<32x144xbf16>
    %cst_12 = arith.constant dense<0.000000e+00> : vector<32x32xf32>
    %14 = tpu.matmul %13, %0, %cst_12 {dimension_numbers = #tpu.dot_dimension_numbers<[1], [0], [0], [1], [0, 0, 1, 1], [], []>} : vector<32x144xbf16>, vector<144x32xbf16>, vector<32x32xf32> -> vector<32x32xf32>
    %15 = arith.maximumf %11, %14 : vector<32x32xf32>
    %c0_13 = arith.constant 0 : index
    %c0_14 = arith.constant 0 : index
    %16 = vector.load %arg3[%c0_13, %c0_14] : memref<1x32xf32, #tpu.memory_space<vmem>>, vector<1x32xf32>
    %17 = vector.broadcast %16 : vector<1x32xf32> to vector<32x32xf32>
    %18 = arith.addf %15, %17 : vector<32x32xf32>
    %cst_15 = arith.constant 0.000000e+00 : f32
    %19 = vector.broadcast %cst_15 : f32 to vector<32x32xf32>
    %20 = arith.maximumf %18, %19 : vector<32x32xf32>
    %c0_16 = arith.constant 0 : index
    %c0_17 = arith.constant 0 : index
    %21 = vector.load %arg4[%c0_16, %c0_17] : memref<32x32xf32, #tpu.memory_space<vmem>>, vector<32x32xf32>
    tpu.vector_store %arg4[%c0_16, %c0_17], %20 {strides = array<i32>} : memref<32x32xf32, #tpu.memory_space<vmem>>, vector<32x32xf32>,
    return
  }
  func.func @transform_0(%arg0: i32) -> (i32, i32, i32) {
    %c0_i32 = arith.constant 0 : i32
    %c0_i32_0 = arith.constant 0 : i32
    %c0_i32_1 = arith.constant 0 : i32
    return %c0_i32, %arg0, %c0_i32_0 : i32, i32, i32
  }
  func.func @transform_1(%arg0: i32) -> (i32, i32) {
    %c0_i32 = arith.constant 0 : i32
    %c0_i32_0 = arith.constant 0 : i32
    %c0_i32_1 = arith.constant 0 : i32
    return %c0_i32, %c0_i32_0 : i32, i32
  }
  func.func @transform_2(%arg0: i32) -> (i32, i32) {
    %c0_i32 = arith.constant 0 : i32
    %c0_i32_0 = arith.constant 0 : i32
    %c0_i32_1 = arith.constant 0 : i32
    return %c0_i32, %c0_i32_0 : i32, i32
  }
  func.func @transform_3(%arg0: i32) -> (i32, i32) {
    %c0_i32 = arith.constant 0 : i32
    %c0_i32_0 = arith.constant 0 : i32
    return %arg0, %c0_i32 : i32, i32
  }
}

module attributes {stable_mosaic.version = 11 : i64} {
  func.func @_mlp_kernel(%arg0: i32, %arg1: memref<8x1568xf32, #tpu.memory_space<vmem>>, %arg2: memref<1568x128xf32, #tpu.memory_space<vmem>>, %arg3: memref<1x128xf32, #tpu.memory_space<vmem>>, %arg4: memref<128x10xf32, #tpu.memory_space<vmem>>, %arg5: memref<1x10xf32, #tpu.memory_space<vmem>>, %arg6: memref<8x10xf32, #tpu.memory_space<vmem>>) attributes {dimension_semantics = [#tpu.dimension_semantics<parallel>], iteration_bounds = array<i64: 1>, scalar_prefetch = 0 : i64, scratch_operands = 0 : i64, tpu.core_type = #tpu.core_type<tc>, window_params = [{transform_indices = @transform_0, window_bounds = array<i64: 8, 1568>}, {pipeline_mode = #tpu.pipeline_mode<synchronous>, transform_indices = @transform_1, window_bounds = array<i64: 1568, 128>}, {pipeline_mode = #tpu.pipeline_mode<synchronous>, transform_indices = @transform_2, window_bounds = array<i64: 1, 128>}, {pipeline_mode = #tpu.pipeline_mode<synchronous>, transform_indices = @transform_3, window_bounds = array<i64: 128, 10>}, {pipeline_mode = #tpu.pipeline_mode<synchronous>, transform_indices = @transform_4, window_bounds = array<i64: 1, 10>}, {transform_indices = @transform_5, window_bounds = array<i64: 8, 10>}]} {
    %c0 = arith.constant 0 : index
    %c0_0 = arith.constant 0 : index
    %0 = vector.load %arg1[%c0, %c0_0] : memref<8x1568xf32, #tpu.memory_space<vmem>>, vector<8x1568xf32>
    %c0_1 = arith.constant 0 : index
    %c0_2 = arith.constant 0 : index
    %1 = vector.load %arg2[%c0_1, %c0_2] : memref<1568x128xf32, #tpu.memory_space<vmem>>, vector<1568x128xf32>
    %cst = arith.constant dense<0.000000e+00> : vector<8x128xf32>
    %2 = tpu.matmul %0, %1, %cst {dimension_numbers = #tpu.dot_dimension_numbers<[1], [0], [0], [1], [0, 0, 1, 1], [], []>} : vector<8x1568xf32>, vector<1568x128xf32>, vector<8x128xf32> -> vector<8x128xf32>
    %c0_3 = arith.constant 0 : index
    %c0_4 = arith.constant 0 : index
    %3 = vector.load %arg3[%c0_3, %c0_4] : memref<1x128xf32, #tpu.memory_space<vmem>>, vector<1x128xf32>
    %4 = vector.broadcast %3 : vector<1x128xf32> to vector<8x128xf32>
    %5 = arith.addf %2, %4 : vector<8x128xf32>
    %cst_5 = arith.constant 0.000000e+00 : f32
    %6 = vector.broadcast %cst_5 : f32 to vector<8x128xf32>
    %7 = arith.maximumf %5, %6 : vector<8x128xf32>
    %c0_6 = arith.constant 0 : index
    %c0_7 = arith.constant 0 : index
    %8 = vector.load %arg4[%c0_6, %c0_7] : memref<128x10xf32, #tpu.memory_space<vmem>>, vector<128x10xf32>
    %cst_8 = arith.constant dense<0.000000e+00> : vector<8x10xf32>
    %9 = tpu.matmul %7, %8, %cst_8 {dimension_numbers = #tpu.dot_dimension_numbers<[1], [0], [0], [1], [0, 0, 1, 1], [], []>} : vector<8x128xf32>, vector<128x10xf32>, vector<8x10xf32> -> vector<8x10xf32>
    %c0_9 = arith.constant 0 : index
    %c0_10 = arith.constant 0 : index
    %10 = vector.load %arg5[%c0_9, %c0_10] : memref<1x10xf32, #tpu.memory_space<vmem>>, vector<1x10xf32>
    %11 = vector.broadcast %10 : vector<1x10xf32> to vector<8x10xf32>
    %12 = arith.addf %9, %11 : vector<8x10xf32>
    %c0_11 = arith.constant 0 : index
    %c0_12 = arith.constant 0 : index
    %13 = vector.load %arg6[%c0_11, %c0_12] : memref<8x10xf32, #tpu.memory_space<vmem>>, vector<8x10xf32>
    tpu.vector_store %arg6[%c0_11, %c0_12], %12 {strides = array<i32>} : memref<8x10xf32, #tpu.memory_space<vmem>>, vector<8x10xf32>,
    return
  }
  func.func @transform_0(%arg0: i32) -> (i32, i32) {
    %c0_i32 = arith.constant 0 : i32
    %c0_i32_0 = arith.constant 0 : i32
    return %arg0, %c0_i32 : i32, i32
  }
  func.func @transform_1(%arg0: i32) -> (i32, i32) {
    %c0_i32 = arith.constant 0 : i32
    %c0_i32_0 = arith.constant 0 : i32
    %c0_i32_1 = arith.constant 0 : i32
    return %c0_i32, %c0_i32_0 : i32, i32
  }
  func.func @transform_2(%arg0: i32) -> (i32, i32) {
    %c0_i32 = arith.constant 0 : i32
    %c0_i32_0 = arith.constant 0 : i32
    %c0_i32_1 = arith.constant 0 : i32
    return %c0_i32, %c0_i32_0 : i32, i32
  }
  func.func @transform_3(%arg0: i32) -> (i32, i32) {
    %c0_i32 = arith.constant 0 : i32
    %c0_i32_0 = arith.constant 0 : i32
    %c0_i32_1 = arith.constant 0 : i32
    return %c0_i32, %c0_i32_0 : i32, i32
  }
  func.func @transform_4(%arg0: i32) -> (i32, i32) {
    %c0_i32 = arith.constant 0 : i32
    %c0_i32_0 = arith.constant 0 : i32
    %c0_i32_1 = arith.constant 0 : i32
    return %c0_i32, %c0_i32_0 : i32, i32
  }
  func.func @transform_5(%arg0: i32) -> (i32, i32) {
    %c0_i32 = arith.constant 0 : i32
    %c0_i32_0 = arith.constant 0 : i32
    return %arg0, %c0_i32 : i32, i32
  }
}

</mosaic_0001>

<llo_original>
// kernel: mnist_cnn_forward.6
$region0: #{mnist_cnn_forward.6}
  #allocation0 [shape = 'u32[]', space=smem, size = 0x4, offset = 0x4, fixed_abs, tag = 'smem constant byte address 0x4 - core index']
  #allocation1 [shape = 'u32[144,128]{1,0:T(1,128)}', space=vmem, size = 0x12000, scoped, tag = 'internal scratch']
  #allocation2 [shape = 'u32[2048]{0}', space=vmem, size = 0x2000, scoped, tag = 'scoped memory for mnist_cnn_forward.6']
  #allocation3 [shape = 'u32[2048]{0}', space=vmem, size = 0x2000, scoped, tag = 'scoped memory for mnist_cnn_forward.6']
  #allocation4 [shape = 'u32[2048]{0}', space=vmem, size = 0x2000, scoped, tag = 'scoped memory for mnist_cnn_forward.6']
  #allocation5 [shape = 'u32[2048]{0}', space=vmem, size = 0x2000, scoped, tag = 'scoped memory for mnist_cnn_forward.6']
  #allocation6 [shape = 'u32[2048]{0}', space=vmem, size = 0x2000, scoped, tag = 'scoped memory for mnist_cnn_forward.6']
  %s0 = inlined_call_operand.vmem [shape: bf16[9,16], index: 0, kind: input, shape index: {}]
  %s1 = inlined_call_operand.vmem [shape: f32[1,16], index: 1, kind: input, shape index: {}]
  %s2 = inlined_call_operand.vmem [shape: bf16[4,392,9], index: 2, kind: input, shape index: {}]
  %s3 = inlined_call_operand.<no memory space> [shape: bf16[], index: 3, kind: input, shape index: {}]
  %s4 = inlined_call_operand.vmem [shape: bf16[416,16], index: 4, kind: output, shape index: {}]
  %s5 = sld [smem:[#allocation0]]
  $region45: #{mnist_cnn_forward.6} parent=0
    _
  %s7 = ssub.s32 1, %s5
  %s8 = scalar_select 0, %s7, %s5
  %v9 = vstv %s3
  %v10 = vunpack.i.l.bf16 %v9
  %v12 = vunpack.i.h.bf16 %v9
  loop: start=0, step=1, limit=6
  $region2: #{mnist_cnn_forward.6} parent=0 // loop_pre_header
    _
  $region3: #{mnist_cnn_forward.6} parent=0 // loop_header
    %s15 = sphi 0, %s19
    %p16 = scmp.ge.s32.totalorder %s15, 6
    %s25 = sphi 0, %s27
    %s28 = sphi 0, %s25
    %s29 = sphi 0, %s28
    %s45 = sphi 0, %s29
    %s49 = sphi 0, %s49
    %s51 = sphi 0, %s49
    %s52 = sphi 0, %s51
    %s66 = sphi 0, %s52
    %s70 = sphi 0, %s70
    %s72 = sphi 0, %s70
    %s73 = sphi 0, %s72
    %s87 = sphi 0, %s73
    %s93 = sphi 0, %s95
    %s96 = sphi 0, %s93
    %s97 = sphi 0, %s96
    %s113 = sphi 0, %s97
  $region4: #{mnist_cnn_forward.6} parent=0 // loop_header_branch
    %18 = sbr.rel (%p16) target = $region8
  $region5: #{mnist_cnn_forward.6} parent=0 // loop_body
    %s20 = ssub.s32 %s15, 1
    %s21 = ssub.s32 %s15, 2
    %s22 = sadd.s32 %s15, 1
    %s23 = ssub.s32 %s15, %s22
    %p24 = scmp.eq.s32.totalorder %s23, 0
    %s26 = sadd.s32 %s25, 1
    %s27 = scalar_select %p24, %s25, %s26
    %p30 = pneg %p24
    %p31 = scmp.eq.s32.totalorder %s15, 3
    %p32 = por %p30, %p31
    %p33 = scmp.ne.s32.totalorder %s25, %s28
    %p34 = scmp.eq.s32.totalorder %s15, 0
    %p35 = por %p33, %p34
    %p36 = scmp.ne.s32.totalorder %s25, %s28
    %p37 = scmp.eq.s32.totalorder %s20, 3
    %p38 = por %p36, %p37
    %p39 = scmp.ne.s32.totalorder %s28, %s29
    %p40 = scmp.eq.s32.totalorder %s20, 0
    %p41 = por %p39, %p40
    %p42 = scmp.ne.s32.totalorder %s28, %s29
    %p43 = scmp.eq.s32.totalorder %s21, 3
    %p44 = por %p42, %p43
    %p46 = scmp.ne.s32.totalorder %s29, %s45
    %p47 = scmp.eq.s32.totalorder %s21, 0
    %p48 = por %p46, %p47
    %s50 = sadd.s32 %s49, 1
    %p53 = scmp.eq.s32.totalorder %s15, 3
    %p54 = scmp.ne.s32.totalorder %s49, %s51
    %p55 = scmp.eq.s32.totalorder %s15, 0
    %p56 = por %p54, %p55
    %p57 = scmp.ne.s32.totalorder %s49, %s51
    %p58 = scmp.eq.s32.totalorder %s20, 3
    %p59 = por %p57, %p58
    %p60 = scmp.ne.s32.totalorder %s51, %s52
    %p61 = scmp.eq.s32.totalorder %s20, 0
    %p62 = por %p60, %p61
    %p63 = scmp.ne.s32.totalorder %s51, %s52
    %p64 = scmp.eq.s32.totalorder %s21, 3
    %p65 = por %p63, %p64
    %p67 = scmp.ne.s32.totalorder %s52, %s66
    %p68 = scmp.eq.s32.totalorder %s21, 0
    %p69 = por %p67, %p68
    %s71 = sadd.s32 %s70, 1
    %p74 = scmp.eq.s32.totalorder %s15, 3
    %p75 = scmp.ne.s32.totalorder %s70, %s72
    %p76 = scmp.eq.s32.totalorder %s15, 0
    %p77 = por %p75, %p76
    %p78 = scmp.ne.s32.totalorder %s70, %s72
    %p79 = scmp.eq.s32.totalorder %s20, 3
    %p80 = por %p78, %p79
    %p81 = scmp.ne.s32.totalorder %s72, %s73
    %p82 = scmp.eq.s32.totalorder %s20, 0
    %p83 = por %p81, %p82
    %p84 = scmp.ne.s32.totalorder %s72, %s73
    %p85 = scmp.eq.s32.totalorder %s21, 3
    %p86 = por %p84, %p85
    %p88 = scmp.ne.s32.totalorder %s73, %s87
    %p89 = scmp.eq.s32.totalorder %s21, 0
    %p90 = por %p88, %p89
    %s91 = ssub.s32 %s15, %s22
    %p92 = scmp.eq.s32.totalorder %s91, 0
    %s94 = sadd.s32 %s93, 1
    %s95 = scalar_select %p92, %s93, %s94
    %p98 = pneg %p92
    %p99 = scmp.eq.s32.totalorder %s15, 3
    %p100 = por %p98, %p99
    %p101 = scmp.ne.s32.totalorder %s93, %s96
    %p102 = scmp.eq.s32.totalorder %s15, 0
    %p103 = por %p101, %p102
    %p104 = scmp.ne.s32.totalorder %s93, %s96
    %p105 = scmp.eq.s32.totalorder %s20, 3
    %p106 = por %p104, %p105
    %p107 = scmp.ne.s32.totalorder %s96, %s97
    %p108 = scmp.eq.s32.totalorder %s20, 0
    %p109 = por %p107, %p108
    %p110 = scmp.ne.s32.totalorder %s96, %s97
    %p111 = scmp.eq.s32.totalorder %s21, 3
    %p112 = por %p110, %p111
    %p114 = scmp.ne.s32.totalorder %s97, %s113
    %p115 = scmp.eq.s32.totalorder %s21, 0
    %p116 = por %p114, %p115
    %p117 = scmp.le.s32.totalorder 1, %s15
    %p118 = scmp.lt.s32.totalorder %s15, 5
    %p119 = pnand %p117, %p118
    %p120 = pneg %p119
    // Predicated region
    $region9: #{mnist_cnn_forward.6} parent=5 // pred_check
      _
    $region10: #{mnist_cnn_forward.6} parent=5 // pred_check_branch
      %122 = sbr.rel (%p119) target = $region12
    $region11: #{mnist_cnn_forward.6} parent=5 // pred_region
      %s123 = ssub.s32 %s15, 1
      // Predicated region
      $region13: #{mnist_cnn_forward.6} parent=11 // pred_check
        %p124 = pneg %p62
      $region14: #{mnist_cnn_forward.6} parent=11 // pred_check_branch
        %126 = sbr.rel (%p124) target = $region16
      $region15: #{mnist_cnn_forward.6} parent=11 // pred_region
        _
      $region16: #{mnist_cnn_forward.6} parent=11 // pred_fallthru
        _
      // Predicated region
      $region17: #{mnist_cnn_forward.6} parent=11 // pred_check
        %p127 = pneg %p83
      $region18: #{mnist_cnn_forward.6} parent=11 // pred_check_branch
        %129 = sbr.rel (%p127) target = $region20
      $region19: #{mnist_cnn_forward.6} parent=11 // pred_region
        _
      $region20: #{mnist_cnn_forward.6} parent=11 // pred_fallthru
        _
    $region12: #{mnist_cnn_forward.6} parent=5 // pred_fallthru
      _
    %p130 = scmp.lt.s32.totalorder %s15, 4
    // Predicated region
    $region21: #{mnist_cnn_forward.6} parent=5 // pred_check
      %p131 = pneg %p130
    $region22: #{mnist_cnn_forward.6} parent=5 // pred_check_branch
      %133 = sbr.rel (%p131) target = $region24
    $region23: #{mnist_cnn_forward.6} parent=5 // pred_region
      // Predicated region
      $region25: #{mnist_cnn_forward.6} parent=23 // pred_check
        %p134 = pneg %p35
      $region26: #{mnist_cnn_forward.6} parent=23 // pred_check_branch
        %136 = sbr.rel (%p134) target = $region28
      $region27: #{mnist_cnn_forward.6} parent=23 // pred_region
        %s137 = smul.u32 13, %s15
        %s138 = ssub.s32 49, %s137
        %p139 = scmp.lt.s32.totalorder %s138, 13
        %s140 = scalar_select %p139, %s138, 13
        %s141 = smul.u32 256, %s140
        %p142 = scmp.lt.s32.totalorder %s137, 48
        %s143 = scalar_select %p142, %s137, 48
        %s144 = smul.addr %s143, 4
        %s145 = scalar_lea.vmem %s2, %s144
        %s146 = smul.u32 13, %s15
        %s147 = ssub.s32 49, %s146
        %p148 = scmp.lt.s32.totalorder %s147, 13
        %s149 = scalar_select %p148, %s147, 13
        %s150 = smul.u32 256, %s149
      $region28: #{mnist_cnn_forward.6} parent=23 // pred_fallthru
        _
    $region24: #{mnist_cnn_forward.6} parent=5 // pred_fallthru
      _
    %p151 = scmp.le.s32.totalorder 1, %s15
    %p152 = scmp.lt.s32.totalorder %s15, 5
    %p153 = pnand %p151, %p152
    %p154 = pneg %p153
    // Predicated region
    $region29: #{mnist_cnn_forward.6} parent=5 // pred_check
      _
    $region30: #{mnist_cnn_forward.6} parent=5 // pred_check_branch
      %156 = sbr.rel (%p153) target = $region32
    $region31: #{mnist_cnn_forward.6} parent=5 // pred_region
      #allocation7 [shape = 'u8[106496]{0}', space=vmem, size = 0x1a000, dematerialized = true, scoped, tag = 'FusionAdapter Buffer %fusion.1 = bf16[4,416,9]{2,1,0:T(8,128)(2,1)} fusion(%param_2.1, %param_3), kind=kLoop, calls=%fused_computation.1.clone, metadata={op_name="jit(mnist_cnn_forward)/jit(_pad)/pad" stack_frame_id=21}']
      %s157 = ssub.s32 %s15, 1
      %s158 = smul.u32 13, %s20
      %s159 = ssub.s32 49, %s158
      %p160 = scmp.lt.s32.totalorder %s159, 13
      %s161 = scalar_select %p160, %s159, 13
      %s162 = smul.u32 256, %s161
      %p163 = scmp.lt.s32.totalorder %s158, 48
      %s164 = scalar_select %p163, %s158, 48
      %s165 = smul.addr %s164, 4
      %s166 = scalar_lea.vmem %s2, %s165
      %p167 = pneg %p41
      %p168 = pneg %p38
      %p169 = pneg %p62
      %p170 = pneg %p59
      %p171 = pneg %p83
      %p172 = pneg %p80
      %p173 = pneg %p109
      %p174 = pneg %p106
      %s175 = smul.u32 13, %s20
      %p176 = scmp.lt.s32.totalorder %s175, 51
      %s177 = scalar_select %p176, %s175, 51
      %s178 = smul.addr %s177, 4
      %s179 = scalar_lea.vmem %s4, %s178
      %s180 = smul.u32 13, %s20
      %s181 = ssub.s32 49, %s180
      %p182 = scmp.lt.s32.totalorder %s181, 13
      %s183 = scalar_select %p182, %s181, 13
      %s184 = smul.u32 256, %s183
      %p185 = scmp.lt.s32.totalorder %s180, 48
      %s186 = scalar_select %p185, %s180, 48
      %s187 = smul.addr %s186, 4
      %s188 = scalar_lea.vmem %s2, %s187
      %s189 = smul.u32 13, %s20
      %s190 = ssub.s32 49, %s189
      %p191 = scmp.lt.s32.totalorder %s190, 13
      %s192 = scalar_select %p191, %s190, 13
      %s193 = smul.u32 256, %s192
      %s194 = smul.u32 13, %s20
      %p195 = scmp.lt.s32.totalorder %s194, 51
      %s196 = scalar_select %p195, %s194, 51
      %s197 = smul.addr %s196, 4
      %s198 = scalar_lea.vmem %s4, %s197
      %s199 = smul.u32 13, %s20
      %v200 = vld [vmem:[%s188] sm:$0xf]
      %v201 = vunpack.c.l.bf16 %v200
      %v202 = vunpack.c.h.bf16 %v200
      %v203 = vlaneseq
      %v204 = vand.u32 %v203, 127
      %vm206 = vcmp.lt.s32.totalorder %v204, 9
      %v207 = vsel %vm206, %v201, %v10
      %v208 = vpack.c.bf16 0.0, %v207
      %210 = vst [vmem:[#allocation7] sm:$0xf] %v208
      %s211 = scalar_lea.vmem %s188, 4
      %v212 = vld [vmem:[%s211] sm:$0xf]
      %v213 = vunpack.c.l.bf16 %v212
      %v214 = vunpack.c.h.bf16 %v212
      %v215 = vlaneseq
      %v216 = vand.u32 %v215, 127
      %vm218 = vcmp.lt.s32.totalorder %v216, 9
      %v219 = vsel %vm218, %v213, %v10
      %s220 = scalar_lea.vmem [#allocation7], 4
      %v221 = vpack.c.bf16 0.0, %v219
      %223 = vst [vmem:[%s220] sm:$0xf] %v221
      %s224 = scalar_lea.vmem %s188, 8
      %v225 = vld [vmem:[%s224] sm:$0xf]
      %v226 = vunpack.c.l.bf16 %v225
      %v227 = vunpack.c.h.bf16 %v225
      %v228 = vlaneseq
      %v229 = vand.u32 %v228, 127
      %vm231 = vcmp.lt.s32.totalorder %v229, 9
      %v232 = vsel %vm231, %v226, %v10
      %s233 = scalar_lea.vmem [#allocation7], 8
      %v234 = vpack.c.bf16 0.0, %v232
      %236 = vst [vmem:[%s233] sm:$0xf] %v234
      %s237 = scalar_lea.vmem %s188, 12
      %v238 = vld [vmem:[%s237] sm:$0xf]
      %v239 = vunpack.c.l.bf16 %v238
      %v240 = vunpack.c.h.bf16 %v238
      %v241 = vlaneseq
      %v242 = vand.u32 %v241, 127
      %vm244 = vcmp.lt.s32.totalorder %v242, 9
      %v245 = vsel %vm244, %v239, %v10
      %s246 = scalar_lea.vmem [#allocation7], 12
      %v247 = vpack.c.bf16 0.0, %v245
      %249 = vst [vmem:[%s246] sm:$0xf] %v247
      %s250 = scalar_lea.vmem %s188, 16
      %v251 = vld [vmem:[%s250] sm:$0xf]
      %v252 = vunpack.c.l.bf16 %v251
      %v253 = vunpack.c.h.bf16 %v251
      %v254 = vlaneseq
      %v255 = vand.u32 %v254, 127
      %vm257 = vcmp.lt.s32.totalorder %v255, 9
      %v258 = vsel %vm257, %v252, %v10
      %s259 = scalar_lea.vmem [#allocation7], 16
      %v260 = vpack.c.bf16 0.0, %v258
      %262 = vst [vmem:[%s259] sm:$0xf] %v260
      %s263 = scalar_lea.vmem %s188, 20
      %v264 = vld [vmem:[%s263] sm:$0xf]
      %v265 = vunpack.c.l.bf16 %v264
      %v266 = vunpack.c.h.bf16 %v264
      %v267 = vlaneseq
      %v268 = vand.u32 %v267, 127
      %vm270 = vcmp.lt.s32.totalorder %v268, 9
      %v271 = vsel %vm270, %v265, %v10
      %s272 = scalar_lea.vmem [#allocation7], 20
      %v273 = vpack.c.bf16 0.0, %v271
      %275 = vst [vmem:[%s272] sm:$0xf] %v273
      %s276 = scalar_lea.vmem %s188, 24
      %v277 = vld [vmem:[%s276] sm:$0xf]
      %v278 = vunpack.c.l.bf16 %v277
      %v279 = vunpack.c.h.bf16 %v277
      %v280 = vlaneseq
      %v281 = vand.u32 %v280, 127
      %vm283 = vcmp.lt.s32.totalorder %v281, 9
      %v284 = vsel %vm283, %v278, %v10
      %s285 = scalar_lea.vmem [#allocation7], 24
      %v286 = vpack.c.bf16 0.0, %v284
      %288 = vst [vmem:[%s285] sm:$0xf] %v286
      %s289 = scalar_lea.vmem %s188, 28
      %v290 = vld [vmem:[%s289] sm:$0xf]
      %v291 = vunpack.c.l.bf16 %v290
      %v292 = vunpack.c.h.bf16 %v290
      %v293 = vlaneseq
      %v294 = vand.u32 %v293, 127
      %vm296 = vcmp.lt.s32.totalorder %v294, 9
      %v297 = vsel %vm296, %v291, %v10
      %s298 = scalar_lea.vmem [#allocation7], 28
      %v299 = vpack.c.bf16 0.0, %v297
      %301 = vst [vmem:[%s298] sm:$0xf] %v299
      %s302 = scalar_lea.vmem %s188, 32
      %v303 = vld [vmem:[%s302] sm:$0xf]
      %v304 = vunpack.c.l.bf16 %v303
      %v305 = vunpack.c.h.bf16 %v303
      %v306 = vlaneseq
      %v307 = vand.u32 %v306, 127
      %vm309 = vcmp.lt.s32.totalorder %v307, 9
      %v310 = vsel %vm309, %v304, %v10
      %s311 = scalar_lea.vmem [#allocation7], 32
      %v312 = vpack.c.bf16 0.0, %v310
      %314 = vst [vmem:[%s311] sm:$0xf] %v312
      %s315 = scalar_lea.vmem %s188, 36
      %v316 = vld [vmem:[%s315] sm:$0xf]
      %v317 = vunpack.c.l.bf16 %v316
      %v318 = vunpack.c.h.bf16 %v316
      %v319 = vlaneseq
      %v320 = vand.u32 %v319, 127
      %vm322 = vcmp.lt.s32.totalorder %v320, 9
      %v323 = vsel %vm322, %v317, %v10
      %s324 = scalar_lea.vmem [#allocation7], 36
      %v325 = vpack.c.bf16 0.0, %v323
      %327 = vst [vmem:[%s324] sm:$0xf] %v325
      %s328 = scalar_lea.vmem %s188, 40
      %s329 = sadd.s32 %s189, 10
      %s330 = ssub.s32 48, %s329
      %p331 = scmp.lt.s32.totalorder %s330, 0
      %s332 = scalar_select %p331, 0, 255
      %s333 = sshrl.u32 %s332, 1
      %s334 = sor.u32 %s332, %s333
      %s335 = sand.u32 %s334, 85
      %s336 = sshrl.u32 %s335, 1
      %s337 = sor.u32 %s335, %s336
      %s338 = sand.u32 51, %s337
      %s339 = sshrl.u32 %s338, 2
      %s340 = sor.u32 %s338, %s339
      %s341 = sand.u32 15, %s340
      %v342 = vld [vmem:[%s328] sm:%s341]
      %v343 = vunpack.c.l.bf16 %v342
      %v344 = vunpack.c.h.bf16 %v342
      %s345 = sadd.s32 %s189, 10
      %s346 = ssub.s32 48, %s345
      %v347 = vstv %s346
      %vm348 = vcmp.lt.s32.totalorder %v347, 0
      %v349 = vsel %vm348, %v10, %v343
      %v350 = vlaneseq
      %v351 = vand.u32 %v350, 127
      %vm353 = vcmp.lt.s32.totalorder %v351, 9
      %v354 = vsel %vm353, %v349, %v10
      %s355 = scalar_lea.vmem [#allocation7], 40
      %v356 = vpack.c.bf16 0.0, %v354
      %358 = vst [vmem:[%s355] sm:$0xf] %v356
      %s359 = scalar_lea.vmem %s188, 44
      %s360 = sadd.s32 %s189, 11
      %s361 = ssub.s32 48, %s360
      %p362 = scmp.lt.s32.totalorder %s361, 0
      %s363 = scalar_select %p362, 0, 255
      %s364 = sshrl.u32 %s363, 1
      %s365 = sor.u32 %s363, %s364
      %s366 = sand.u32 %s365, 85
      %s367 = sshrl.u32 %s366, 1
      %s368 = sor.u32 %s366, %s367
      %s369 = sand.u32 51, %s368
      %s370 = sshrl.u32 %s369, 2
      %s371 = sor.u32 %s369, %s370
      %s372 = sand.u32 15, %s371
      %v373 = vld [vmem:[%s359] sm:%s372]
      %v374 = vunpack.c.l.bf16 %v373
      %v375 = vunpack.c.h.bf16 %v373
      %s376 = sadd.s32 %s189, 11
      %s377 = ssub.s32 48, %s376
      %v378 = vstv %s377
      %vm379 = vcmp.lt.s32.totalorder %v378, 0
      %v380 = vsel %vm379, %v10, %v374
      %v381 = vlaneseq
      %v382 = vand.u32 %v381, 127
      %vm384 = vcmp.lt.s32.totalorder %v382, 9
      %v385 = vsel %vm384, %v380, %v10
      %s386 = scalar_lea.vmem [#allocation7], 44
      %v387 = vpack.c.bf16 0.0, %v385
      %389 = vst [vmem:[%s386] sm:$0xf] %v387
      %s390 = scalar_lea.vmem %s188, 48
      %s391 = sadd.s32 %s189, 12
      %s392 = ssub.s32 48, %s391
      %p393 = scmp.lt.s32.totalorder %s392, 0
      %s394 = scalar_select %p393, 0, 255
      %s395 = sshrl.u32 %s394, 1
      %s396 = sor.u32 %s394, %s395
      %s397 = sand.u32 %s396, 85
      %s398 = sshrl.u32 %s397, 1
      %s399 = sor.u32 %s397, %s398
      %s400 = sand.u32 51, %s399
      %s401 = sshrl.u32 %s400, 2
      %s402 = sor.u32 %s400, %s401
      %s403 = sand.u32 15, %s402
      %v404 = vld [vmem:[%s390] sm:%s403]
      %v405 = vunpack.c.l.bf16 %v404
      %v406 = vunpack.c.h.bf16 %v404
      %s407 = sadd.s32 %s189, 12
      %s408 = ssub.s32 48, %s407
      %v409 = vstv %s408
      %vm410 = vcmp.lt.s32.totalorder %v409, 0
      %v411 = vsel %vm410, %v10, %v405
      %v412 = vlaneseq
      %v413 = vand.u32 %v412, 127
      %vm415 = vcmp.lt.s32.totalorder %v413, 9
      %v416 = vsel %vm415, %v411, %v10
      %s417 = scalar_lea.vmem [#allocation7], 48
      %v418 = vpack.c.bf16 0.0, %v416
      %420 = vst [vmem:[%s417] sm:$0xf] %v418
      %s421 = scalar_lea.vmem %s188, 196
      %v422 = vld [vmem:[%s421] sm:$0xf]
      %v423 = vunpack.c.l.bf16 %v422
      %v424 = vunpack.c.h.bf16 %v422
      %v425 = vlaneseq
      %v426 = vand.u32 %v425, 127
      %vm428 = vcmp.lt.s32.totalorder %v426, 9
      %v429 = vsel %vm428, %v423, %v10
      %s430 = scalar_lea.vmem [#allocation7], 52
      %v431 = vpack.c.bf16 0.0, %v429
      %433 = vst [vmem:[%s430] sm:$0xf] %v431
      %s434 = scalar_lea.vmem %s188, 200
      %v435 = vld [vmem:[%s434] sm:$0xf]
      %v436 = vunpack.c.l.bf16 %v435
      %v437 = vunpack.c.h.bf16 %v435
      %v438 = vlaneseq
      %v439 = vand.u32 %v438, 127
      %vm441 = vcmp.lt.s32.totalorder %v439, 9
      %v442 = vsel %vm441, %v436, %v10
      %s443 = scalar_lea.vmem [#allocation7], 56
      %v444 = vpack.c.bf16 0.0, %v442
      %446 = vst [vmem:[%s443] sm:$0xf] %v444
      %s447 = scalar_lea.vmem %s188, 204
      %v448 = vld [vmem:[%s447] sm:$0xf]
      %v449 = vunpack.c.l.bf16 %v448
      %v450 = vunpack.c.h.bf16 %v448
      %v451 = vlaneseq
      %v452 = vand.u32 %v451, 127
      %vm454 = vcmp.lt.s32.totalorder %v452, 9
      %v455 = vsel %vm454, %v449, %v10
      %s456 = scalar_lea.vmem [#allocation7], 60
      %v457 = vpack.c.bf16 0.0, %v455
      %459 = vst [vmem:[%s456] sm:$0xf] %v457
      %s460 = scalar_lea.vmem %s188, 208
      %v461 = vld [vmem:[%s460] sm:$0xf]
      %v462 = vunpack.c.l.bf16 %v461
      %v463 = vunpack.c.h.bf16 %v461
      %v464 = vlaneseq
      %v465 = vand.u32 %v464, 127
      %vm467 = vcmp.lt.s32.totalorder %v465, 9
      %v468 = vsel %vm467, %v462, %v10
      %s469 = scalar_lea.vmem [#allocation7], 64
      %v470 = vpack.c.bf16 0.0, %v468
      %472 = vst [vmem:[%s469] sm:$0xf] %v470
      %s473 = scalar_lea.vmem %s188, 212
      %v474 = vld [vmem:[%s473] sm:$0xf]
      %v475 = vunpack.c.l.bf16 %v474
      %v476 = vunpack.c.h.bf16 %v474
      %v477 = vlaneseq
      %v478 = vand.u32 %v477, 127
      %vm480 = vcmp.lt.s32.totalorder %v478, 9
      %v481 = vsel %vm480, %v475, %v10
      %s482 = scalar_lea.vmem [#allocation7], 68
      %v483 = vpack.c.bf16 0.0, %v481
      %485 = vst [vmem:[%s482] sm:$0xf] %v483
      %s486 = scalar_lea.vmem %s188, 216
      %v487 = vld [vmem:[%s486] sm:$0xf]
      %v488 = vunpack.c.l.bf16 %v487
      %v489 = vunpack.c.h.bf16 %v487
      %v490 = vlaneseq
      %v491 = vand.u32 %v490, 127
      %vm493 = vcmp.lt.s32.totalorder %v491, 9
      %v494 = vsel %vm493, %v488, %v10
      %s495 = scalar_lea.vmem [#allocation7], 72
      %v496 = vpack.c.bf16 0.0, %v494
      %498 = vst [vmem:[%s495] sm:$0xf] %v496
      %s499 = scalar_lea.vmem %s188, 220
      %v500 = vld [vmem:[%s499] sm:$0xf]
      %v501 = vunpack.c.l.bf16 %v500
      %v502 = vunpack.c.h.bf16 %v500
      %v503 = vlaneseq
      %v504 = vand.u32 %v503, 127
      %vm506 = vcmp.lt.s32.totalorder %v504, 9
      %v507 = vsel %vm506, %v501, %v10
      %s508 = scalar_lea.vmem [#allocation7], 76
      %v509 = vpack.c.bf16 0.0, %v507
      %511 = vst [vmem:[%s508] sm:$0xf] %v509
      %s512 = scalar_lea.vmem %s188, 224
      %v513 = vld [vmem:[%s512] sm:$0xf]
      %v514 = vunpack.c.l.bf16 %v513
      %v515 = vunpack.c.h.bf16 %v513
      %v516 = vlaneseq
      %v517 = vand.u32 %v516, 127
      %vm519 = vcmp.lt.s32.totalorder %v517, 9
      %v520 = vsel %vm519, %v514, %v10
      %s521 = scalar_lea.vmem [#allocation7], 80
      %v522 = vpack.c.bf16 0.0, %v520
      %524 = vst [vmem:[%s521] sm:$0xf] %v522
      %s525 = scalar_lea.vmem %s188, 228
      %v526 = vld [vmem:[%s525] sm:$0xf]
      %v527 = vunpack.c.l.bf16 %v526
      %v528 = vunpack.c.h.bf16 %v526
      %v529 = vlaneseq
      %v530 = vand.u32 %v529, 127
      %vm532 = vcmp.lt.s32.totalorder %v530, 9
      %v533 = vsel %vm532, %v527, %v10
      %s534 = scalar_lea.vmem [#allocation7], 84
      %v535 = vpack.c.bf16 0.0, %v533
      %537 = vst [vmem:[%s534] sm:$0xf] %v535
      %s538 = scalar_lea.vmem %s188, 232
      %v539 = vld [vmem:[%s538] sm:$0xf]
      %v540 = vunpack.c.l.bf16 %v539
      %v541 = vunpack.c.h.bf16 %v539
      %v542 = vlaneseq
      %v543 = vand.u32 %v542, 127
      %vm545 = vcmp.lt.s32.totalorder %v543, 9
      %v546 = vsel %vm545, %v540, %v10
      %s547 = scalar_lea.vmem [#allocation7], 88
      %v548 = vpack.c.bf16 0.0, %v546
      %550 = vst [vmem:[%s547] sm:$0xf] %v548
      %s551 = scalar_lea.vmem %s188, 236
      %s552 = sadd.s32 %s189, 10
      %s553 = ssub.s32 48, %s552
      %p554 = scmp.lt.s32.totalorder %s553, 0
      %s555 = scalar_select %p554, 0, 255
      %s556 = sshrl.u32 %s555, 1
      %s557 = sor.u32 %s555, %s556
      %s558 = sand.u32 %s557, 85
      %s559 = sshrl.u32 %s558, 1
      %s560 = sor.u32 %s558, %s559
      %s561 = sand.u32 51, %s560
      %s562 = sshrl.u32 %s561, 2
      %s563 = sor.u32 %s561, %s562
      %s564 = sand.u32 15, %s563
      %v565 = vld [vmem:[%s551] sm:%s564]
      %v566 = vunpack.c.l.bf16 %v565
      %v567 = vunpack.c.h.bf16 %v565
      %s568 = sadd.s32 %s189, 10
      %s569 = ssub.s32 48, %s568
      %v570 = vstv %s569
      %vm571 = vcmp.lt.s32.totalorder %v570, 0
      %v572 = vsel %vm571, %v10, %v566
      %v573 = vlaneseq
      %v574 = vand.u32 %v573, 127
      %vm576 = vcmp.lt.s32.totalorder %v574, 9
      %v577 = vsel %vm576, %v572, %v10
      %s578 = scalar_lea.vmem [#allocation7], 92
      %v579 = vpack.c.bf16 0.0, %v577
      %581 = vst [vmem:[%s578] sm:$0xf] %v579
      %s582 = scalar_lea.vmem %s188, 240
      %s583 = sadd.s32 %s189, 11
      %s584 = ssub.s32 48, %s583
      %p585 = scmp.lt.s32.totalorder %s584, 0
      %s586 = scalar_select %p585, 0, 255
      %s587 = sshrl.u32 %s586, 1
      %s588 = sor.u32 %s586, %s587
      %s589 = sand.u32 %s588, 85
      %s590 = sshrl.u32 %s589, 1
      %s591 = sor.u32 %s589, %s590
      %s592 = sand.u32 51, %s591
      %s593 = sshrl.u32 %s592, 2
      %s594 = sor.u32 %s592, %s593
      %s595 = sand.u32 15, %s594
      %v596 = vld [vmem:[%s582] sm:%s595]
      %v597 = vunpack.c.l.bf16 %v596
      %v598 = vunpack.c.h.bf16 %v596
      %s599 = sadd.s32 %s189, 11
      %s600 = ssub.s32 48, %s599
      %v601 = vstv %s600
      %vm602 = vcmp.lt.s32.totalorder %v601, 0
      %v603 = vsel %vm602, %v10, %v597
      %v604 = vlaneseq
      %v605 = vand.u32 %v604, 127
      %vm607 = vcmp.lt.s32.totalorder %v605, 9
      %v608 = vsel %vm607, %v603, %v10
      %s609 = scalar_lea.vmem [#allocation7], 96
      %v610 = vpack.c.bf16 0.0, %v608
      %612 = vst [vmem:[%s609] sm:$0xf] %v610
      %s613 = scalar_lea.vmem %s188, 244
      %s614 = sadd.s32 %s189, 12
      %s615 = ssub.s32 48, %s614
      %p616 = scmp.lt.s32.totalorder %s615, 0
      %s617 = scalar_select %p616, 0, 255
      %s618 = sshrl.u32 %s617, 1
      %s619 = sor.u32 %s617, %s618
      %s620 = sand.u32 %s619, 85
      %s621 = sshrl.u32 %s620, 1
      %s622 = sor.u32 %s620, %s621
      %s623 = sand.u32 51, %s622
      %s624 = sshrl.u32 %s623, 2
      %s625 = sor.u32 %s623, %s624
      %s626 = sand.u32 15, %s625
      %v627 = vld [vmem:[%s613] sm:%s626]
      %v628 = vunpack.c.l.bf16 %v627
      %v629 = vunpack.c.h.bf16 %v627
      %s630 = sadd.s32 %s189, 12
      %s631 = ssub.s32 48, %s630
      %v632 = vstv %s631
      %vm633 = vcmp.lt.s32.totalorder %v632, 0
      %v634 = vsel %vm633, %v10, %v628
      %v635 = vlaneseq
      %v636 = vand.u32 %v635, 127
      %vm638 = vcmp.lt.s32.totalorder %v636, 9
      %v639 = vsel %vm638, %v634, %v10
      %s640 = scalar_lea.vmem [#allocation7], 100
      %v641 = vpack.c.bf16 0.0, %v639
      %643 = vst [vmem:[%s640] sm:$0xf] %v641
      %s644 = scalar_lea.vmem %s188, 392
      %v645 = vld [vmem:[%s644] sm:$0xf]
      %v646 = vunpack.c.l.bf16 %v645
      %v647 = vunpack.c.h.bf16 %v645
      %v648 = vlaneseq
      %v649 = vand.u32 %v648, 127
      %vm651 = vcmp.lt.s32.totalorder %v649, 9
      %v652 = vsel %vm651, %v646, %v10
      %s653 = scalar_lea.vmem [#allocation7], 104
      %v654 = vpack.c.bf16 0.0, %v652
      %656 = vst [vmem:[%s653] sm:$0xf] %v654
      %s657 = scalar_lea.vmem %s188, 396
      %v658 = vld [vmem:[%s657] sm:$0xf]
      %v659 = vunpack.c.l.bf16 %v658
      %v660 = vunpack.c.h.bf16 %v658
      %v661 = vlaneseq
      %v662 = vand.u32 %v661, 127
      %vm664 = vcmp.lt.s32.totalorder %v662, 9
      %v665 = vsel %vm664, %v659, %v10
      %s666 = scalar_lea.vmem [#allocation7], 108
      %v667 = vpack.c.bf16 0.0, %v665
      %669 = vst [vmem:[%s666] sm:$0xf] %v667
      %s670 = scalar_lea.vmem %s188, 400
      %v671 = vld [vmem:[%s670] sm:$0xf]
      %v672 = vunpack.c.l.bf16 %v671
      %v673 = vunpack.c.h.bf16 %v671
      %v674 = vlaneseq
      %v675 = vand.u32 %v674, 127
      %vm677 = vcmp.lt.s32.totalorder %v675, 9
      %v678 = vsel %vm677, %v672, %v10
      %s679 = scalar_lea.vmem [#allocation7], 112
      %v680 = vpack.c.bf16 0.0, %v678
      %682 = vst [vmem:[%s679] sm:$0xf] %v680
      %s683 = scalar_lea.vmem %s188, 404
      %v684 = vld [vmem:[%s683] sm:$0xf]
      %v685 = vunpack.c.l.bf16 %v684
      %v686 = vunpack.c.h.bf16 %v684
      %v687 = vlaneseq
      %v688 = vand.u32 %v687, 127
      %vm690 = vcmp.lt.s32.totalorder %v688, 9
      %v691 = vsel %vm690, %v685, %v10
      %s692 = scalar_lea.vmem [#allocation7], 116
      %v693 = vpack.c.bf16 0.0, %v691
      %695 = vst [vmem:[%s692] sm:$0xf] %v693
      %s696 = scalar_lea.vmem %s188, 408
      %v697 = vld [vmem:[%s696] sm:$0xf]
      %v698 = vunpack.c.l.bf16 %v697
      %v699 = vunpack.c.h.bf16 %v697
      %v700 = vlaneseq
      %v701 = vand.u32 %v700, 127
      %vm703 = vcmp.lt.s32.totalorder %v701, 9
      %v704 = vsel %vm703, %v698, %v10
      %s705 = scalar_lea.vmem [#allocation7], 120
      %v706 = vpack.c.bf16 0.0, %v704
      %708 = vst [vmem:[%s705] sm:$0xf] %v706
      %s709 = scalar_lea.vmem %s188, 412
      %v710 = vld [vmem:[%s709] sm:$0xf]
      %v711 = vunpack.c.l.bf16 %v710
      %v712 = vunpack.c.h.bf16 %v710
      %v713 = vlaneseq
      %v714 = vand.u32 %v713, 127
      %vm716 = vcmp.lt.s32.totalorder %v714, 9
      %v717 = vsel %vm716, %v711, %v10
      %s718 = scalar_lea.vmem [#allocation7], 124
      %v719 = vpack.c.bf16 0.0, %v717
      %721 = vst [vmem:[%s718] sm:$0xf] %v719
      %s722 = scalar_lea.vmem %s188, 416
      %v723 = vld [vmem:[%s722] sm:$0xf]
      %v724 = vunpack.c.l.bf16 %v723
      %v725 = vunpack.c.h.bf16 %v723
      %v726 = vlaneseq
      %v727 = vand.u32 %v726, 127
      %vm729 = vcmp.lt.s32.totalorder %v727, 9
      %v730 = vsel %vm729, %v724, %v10
      %s731 = scalar_lea.vmem [#allocation7], 128
      %v732 = vpack.c.bf16 0.0, %v730
      %734 = vst [vmem:[%s731] sm:$0xf] %v732
      %s735 = scalar_lea.vmem %s188, 420
      %v736 = vld [vmem:[%s735] sm:$0xf]
      %v737 = vunpack.c.l.bf16 %v736
      %v738 = vunpack.c.h.bf16 %v736
      %v739 = vlaneseq
      %v740 = vand.u32 %v739, 127
      %vm742 = vcmp.lt.s32.totalorder %v740, 9
      %v743 = vsel %vm742, %v737, %v10
      %s744 = scalar_lea.vmem [#allocation7], 132
      %v745 = vpack.c.bf16 0.0, %v743
      %747 = vst [vmem:[%s744] sm:$0xf] %v745
      %s748 = scalar_lea.vmem %s188, 424
      %v749 = vld [vmem:[%s748] sm:$0xf]
      %v750 = vunpack.c.l.bf16 %v749
      %v751 = vunpack.c.h.bf16 %v749
      %v752 = vlaneseq
      %v753 = vand.u32 %v752, 127
      %vm755 = vcmp.lt.s32.totalorder %v753, 9
      %v756 = vsel %vm755, %v750, %v10
      %s757 = scalar_lea.vmem [#allocation7], 136
      %v758 = vpack.c.bf16 0.0, %v756
      %760 = vst [vmem:[%s757] sm:$0xf] %v758
      %s761 = scalar_lea.vmem %s188, 428
      %v762 = vld [vmem:[%s761] sm:$0xf]
      %v763 = vunpack.c.l.bf16 %v762
      %v764 = vunpack.c.h.bf16 %v762
      %v765 = vlaneseq
      %v766 = vand.u32 %v765, 127
      %vm768 = vcmp.lt.s32.totalorder %v766, 9
      %v769 = vsel %vm768, %v763, %v10
      %s770 = scalar_lea.vmem [#allocation7], 140
      %v771 = vpack.c.bf16 0.0, %v769
      %773 = vst [vmem:[%s770] sm:$0xf] %v771
      %s774 = scalar_lea.vmem %s188, 432
      %s775 = sadd.s32 %s189, 10
      %s776 = ssub.s32 48, %s775
      %p777 = scmp.lt.s32.totalorder %s776, 0
      %s778 = scalar_select %p777, 0, 255
      %s779 = sshrl.u32 %s778, 1
      %s780 = sor.u32 %s778, %s779
      %s781 = sand.u32 %s780, 85
      %s782 = sshrl.u32 %s781, 1
      %s783 = sor.u32 %s781, %s782
      %s784 = sand.u32 51, %s783
      %s785 = sshrl.u32 %s784, 2
      %s786 = sor.u32 %s784, %s785
      %s787 = sand.u32 15, %s786
      %v788 = vld [vmem:[%s774] sm:%s787]
      %v789 = vunpack.c.l.bf16 %v788
      %v790 = vunpack.c.h.bf16 %v788
      %s791 = sadd.s32 %s189, 10
      %s792 = ssub.s32 48, %s791
      %v793 = vstv %s792
      %vm794 = vcmp.lt.s32.totalorder %v793, 0
      %v795 = vsel %vm794, %v10, %v789
      %v796 = vlaneseq
      %v797 = vand.u32 %v796, 127
      %vm799 = vcmp.lt.s32.totalorder %v797, 9
      %v800 = vsel %vm799, %v795, %v10
      %s801 = scalar_lea.vmem [#allocation7], 144
      %v802 = vpack.c.bf16 0.0, %v800
      %804 = vst [vmem:[%s801] sm:$0xf] %v802
      %s805 = scalar_lea.vmem %s188, 436
      %s806 = sadd.s32 %s189, 11
      %s807 = ssub.s32 48, %s806
      %p808 = scmp.lt.s32.totalorder %s807, 0
      %s809 = scalar_select %p808, 0, 255
      %s810 = sshrl.u32 %s809, 1
      %s811 = sor.u32 %s809, %s810
      %s812 = sand.u32 %s811, 85
      %s813 = sshrl.u32 %s812, 1
      %s814 = sor.u32 %s812, %s813
      %s815 = sand.u32 51, %s814
      %s816 = sshrl.u32 %s815, 2
      %s817 = sor.u32 %s815, %s816
      %s818 = sand.u32 15, %s817
      %v819 = vld [vmem:[%s805] sm:%s818]
      %v820 = vunpack.c.l.bf16 %v819
      %v821 = vunpack.c.h.bf16 %v819
      %s822 = sadd.s32 %s189, 11
      %s823 = ssub.s32 48, %s822
      %v824 = vstv %s823
      %vm825 = vcmp.lt.s32.totalorder %v824, 0
      %v826 = vsel %vm825, %v10, %v820
      %v827 = vlaneseq
      %v828 = vand.u32 %v827, 127
      %vm830 = vcmp.lt.s32.totalorder %v828, 9
      %v831 = vsel %vm830, %v826, %v10
      %s832 = scalar_lea.vmem [#allocation7], 148
      %v833 = vpack.c.bf16 0.0, %v831
      %835 = vst [vmem:[%s832] sm:$0xf] %v833
      %s836 = scalar_lea.vmem %s188, 440
      %s837 = sadd.s32 %s189, 12
      %s838 = ssub.s32 48, %s837
      %p839 = scmp.lt.s32.totalorder %s838, 0
      %s840 = scalar_select %p839, 0, 255
      %s841 = sshrl.u32 %s840, 1
      %s842 = sor.u32 %s840, %s841
      %s843 = sand.u32 %s842, 85
      %s844 = sshrl.u32 %s843, 1
      %s845 = sor.u32 %s843, %s844
      %s846 = sand.u32 51, %s845
      %s847 = sshrl.u32 %s846, 2
      %s848 = sor.u32 %s846, %s847
      %s849 = sand.u32 15, %s848
      %v850 = vld [vmem:[%s836] sm:%s849]
      %v851 = vunpack.c.l.bf16 %v850
      %v852 = vunpack.c.h.bf16 %v850
      %s853 = sadd.s32 %s189, 12
      %s854 = ssub.s32 48, %s853
      %v855 = vstv %s854
      %vm856 = vcmp.lt.s32.totalorder %v855, 0
      %v857 = vsel %vm856, %v10, %v851
      %v858 = vlaneseq
      %v859 = vand.u32 %v858, 127
      %vm861 = vcmp.lt.s32.totalorder %v859, 9
      %v862 = vsel %vm861, %v857, %v10
      %s863 = scalar_lea.vmem [#allocation7], 152
      %v864 = vpack.c.bf16 0.0, %v862
      %866 = vst [vmem:[%s863] sm:$0xf] %v864
      %s867 = scalar_lea.vmem %s188, 588
      %v868 = vld [vmem:[%s867] sm:$0xf]
      %v869 = vunpack.c.l.bf16 %v868
      %v870 = vunpack.c.h.bf16 %v868
      %v871 = vlaneseq
      %v872 = vand.u32 %v871, 127
      %vm874 = vcmp.lt.s32.totalorder %v872, 9
      %v875 = vsel %vm874, %v869, %v10
      %s876 = scalar_lea.vmem [#allocation7], 156
      %v877 = vpack.c.bf16 0.0, %v875
      %879 = vst [vmem:[%s876] sm:$0xf] %v877
      %s880 = scalar_lea.vmem %s188, 592
      %v881 = vld [vmem:[%s880] sm:$0xf]
      %v882 = vunpack.c.l.bf16 %v881
      %v883 = vunpack.c.h.bf16 %v881
      %v884 = vlaneseq
      %v885 = vand.u32 %v884, 127
      %vm887 = vcmp.lt.s32.totalorder %v885, 9
      %v888 = vsel %vm887, %v882, %v10
      %s889 = scalar_lea.vmem [#allocation7], 160
      %v890 = vpack.c.bf16 0.0, %v888
      %892 = vst [vmem:[%s889] sm:$0xf] %v890
      %s893 = scalar_lea.vmem %s188, 596
      %v894 = vld [vmem:[%s893] sm:$0xf]
      %v895 = vunpack.c.l.bf16 %v894
      %v896 = vunpack.c.h.bf16 %v894
      %v897 = vlaneseq
      %v898 = vand.u32 %v897, 127
      %vm900 = vcmp.lt.s32.totalorder %v898, 9
      %v901 = vsel %vm900, %v895, %v10
      %s902 = scalar_lea.vmem [#allocation7], 164
      %v903 = vpack.c.bf16 0.0, %v901
      %905 = vst [vmem:[%s902] sm:$0xf] %v903
      %s906 = scalar_lea.vmem %s188, 600
      %v907 = vld [vmem:[%s906] sm:$0xf]
      %v908 = vunpack.c.l.bf16 %v907
      %v909 = vunpack.c.h.bf16 %v907
      %v910 = vlaneseq
      %v911 = vand.u32 %v910, 127
      %vm913 = vcmp.lt.s32.totalorder %v911, 9
      %v914 = vsel %vm913, %v908, %v10
      %s915 = scalar_lea.vmem [#allocation7], 168
      %v916 = vpack.c.bf16 0.0, %v914
      %918 = vst [vmem:[%s915] sm:$0xf] %v916
      %s919 = scalar_lea.vmem %s188, 604
      %v920 = vld [vmem:[%s919] sm:$0xf]
      %v921 = vunpack.c.l.bf16 %v920
      %v922 = vunpack.c.h.bf16 %v920
      %v923 = vlaneseq
      %v924 = vand.u32 %v923, 127
      %vm926 = vcmp.lt.s32.totalorder %v924, 9
      %v927 = vsel %vm926, %v921, %v10
      %s928 = scalar_lea.vmem [#allocation7], 172
      %v929 = vpack.c.bf16 0.0, %v927
      %931 = vst [vmem:[%s928] sm:$0xf] %v929
      %s932 = scalar_lea.vmem %s188, 608
      %v933 = vld [vmem:[%s932] sm:$0xf]
      %v934 = vunpack.c.l.bf16 %v933
      %v935 = vunpack.c.h.bf16 %v933
      %v936 = vlaneseq
      %v937 = vand.u32 %v936, 127
      %vm939 = vcmp.lt.s32.totalorder %v937, 9
      %v940 = vsel %vm939, %v934, %v10
      %s941 = scalar_lea.vmem [#allocation7], 176
      %v942 = vpack.c.bf16 0.0, %v940
      %944 = vst [vmem:[%s941] sm:$0xf] %v942
      %s945 = scalar_lea.vmem %s188, 612
      %v946 = vld [vmem:[%s945] sm:$0xf]
      %v947 = vunpack.c.l.bf16 %v946
      %v948 = vunpack.c.h.bf16 %v946
      %v949 = vlaneseq
      %v950 = vand.u32 %v949, 127
      %vm952 = vcmp.lt.s32.totalorder %v950, 9
      %v953 = vsel %vm952, %v947, %v10
      %s954 = scalar_lea.vmem [#allocation7], 180
      %v955 = vpack.c.bf16 0.0, %v953
      %957 = vst [vmem:[%s954] sm:$0xf] %v955
      %s958 = scalar_lea.vmem %s188, 616
      %v959 = vld [vmem:[%s958] sm:$0xf]
      %v960 = vunpack.c.l.bf16 %v959
      %v961 = vunpack.c.h.bf16 %v959
      %v962 = vlaneseq
      %v963 = vand.u32 %v962, 127
      %vm965 = vcmp.lt.s32.totalorder %v963, 9
      %v966 = vsel %vm965, %v960, %v10
      %s967 = scalar_lea.vmem [#allocation7], 184
      %v968 = vpack.c.bf16 0.0, %v966
      %970 = vst [vmem:[%s967] sm:$0xf] %v968
      %s971 = scalar_lea.vmem %s188, 620
      %v972 = vld [vmem:[%s971] sm:$0xf]
      %v973 = vunpack.c.l.bf16 %v972
      %v974 = vunpack.c.h.bf16 %v972
      %v975 = vlaneseq
      %v976 = vand.u32 %v975, 127
      %vm978 = vcmp.lt.s32.totalorder %v976, 9
      %v979 = vsel %vm978, %v973, %v10
      %s980 = scalar_lea.vmem [#allocation7], 188
      %v981 = vpack.c.bf16 0.0, %v979
      %983 = vst [vmem:[%s980] sm:$0xf] %v981
      %s984 = scalar_lea.vmem %s188, 624
      %v985 = vld [vmem:[%s984] sm:$0xf]
      %v986 = vunpack.c.l.bf16 %v985
      %v987 = vunpack.c.h.bf16 %v985
      %v988 = vlaneseq
      %v989 = vand.u32 %v988, 127
      %vm991 = vcmp.lt.s32.totalorder %v989, 9
      %v992 = vsel %vm991, %v986, %v10
      %s993 = scalar_lea.vmem [#allocation7], 192
      %v994 = vpack.c.bf16 0.0, %v992
      %996 = vst [vmem:[%s993] sm:$0xf] %v994
      %s997 = scalar_lea.vmem %s188, 628
      %s998 = sadd.s32 %s189, 10
      %s999 = ssub.s32 48, %s998
      %p1000 = scmp.lt.s32.totalorder %s999, 0
      %s1001 = scalar_select %p1000, 0, 255
      %s1002 = sshrl.u32 %s1001, 1
      %s1003 = sor.u32 %s1001, %s1002
      %s1004 = sand.u32 %s1003, 85
      %s1005 = sshrl.u32 %s1004, 1
      %s1006 = sor.u32 %s1004, %s1005
      %s1007 = sand.u32 51, %s1006
      %s1008 = sshrl.u32 %s1007, 2
      %s1009 = sor.u32 %s1007, %s1008
      %s1010 = sand.u32 15, %s1009
      %v1011 = vld [vmem:[%s997] sm:%s1010]
      %v1012 = vunpack.c.l.bf16 %v1011
      %v1013 = vunpack.c.h.bf16 %v1011
      %s1014 = sadd.s32 %s189, 10
      %s1015 = ssub.s32 48, %s1014
      %v1016 = vstv %s1015
      %vm1017 = vcmp.lt.s32.totalorder %v1016, 0
      %v1018 = vsel %vm1017, %v10, %v1012
      %v1019 = vlaneseq
      %v1020 = vand.u32 %v1019, 127
      %vm1022 = vcmp.lt.s32.totalorder %v1020, 9
      %v1023 = vsel %vm1022, %v1018, %v10
      %s1024 = scalar_lea.vmem [#allocation7], 196
      %v1025 = vpack.c.bf16 0.0, %v1023
      %1027 = vst [vmem:[%s1024] sm:$0xf] %v1025
      %s1028 = scalar_lea.vmem %s188, 632
      %s1029 = sadd.s32 %s189, 11
      %s1030 = ssub.s32 48, %s1029
      %p1031 = scmp.lt.s32.totalorder %s1030, 0
      %s1032 = scalar_select %p1031, 0, 255
      %s1033 = sshrl.u32 %s1032, 1
      %s1034 = sor.u32 %s1032, %s1033
      %s1035 = sand.u32 %s1034, 85
      %s1036 = sshrl.u32 %s1035, 1
      %s1037 = sor.u32 %s1035, %s1036
      %s1038 = sand.u32 51, %s1037
      %s1039 = sshrl.u32 %s1038, 2
      %s1040 = sor.u32 %s1038, %s1039
      %s1041 = sand.u32 15, %s1040
      %v1042 = vld [vmem:[%s1028] sm:%s1041]
      %v1043 = vunpack.c.l.bf16 %v1042
      %v1044 = vunpack.c.h.bf16 %v1042
      %s1045 = sadd.s32 %s189, 11
      %s1046 = ssub.s32 48, %s1045
      %v1047 = vstv %s1046
      %vm1048 = vcmp.lt.s32.totalorder %v1047, 0
      %v1049 = vsel %vm1048, %v10, %v1043
      %v1050 = vlaneseq
      %v1051 = vand.u32 %v1050, 127
      %vm1053 = vcmp.lt.s32.totalorder %v1051, 9
      %v1054 = vsel %vm1053, %v1049, %v10
      %s1055 = scalar_lea.vmem [#allocation7], 200
      %v1056 = vpack.c.bf16 0.0, %v1054
      %1058 = vst [vmem:[%s1055] sm:$0xf] %v1056
      %s1059 = scalar_lea.vmem %s188, 636
      %s1060 = sadd.s32 %s189, 12
      %s1061 = ssub.s32 48, %s1060
      %p1062 = scmp.lt.s32.totalorder %s1061, 0
      %s1063 = scalar_select %p1062, 0, 255
      %s1064 = sshrl.u32 %s1063, 1
      %s1065 = sor.u32 %s1063, %s1064
      %s1066 = sand.u32 %s1065, 85
      %s1067 = sshrl.u32 %s1066, 1
      %s1068 = sor.u32 %s1066, %s1067
      %s1069 = sand.u32 51, %s1068
      %s1070 = sshrl.u32 %s1069, 2
      %s1071 = sor.u32 %s1069, %s1070
      %s1072 = sand.u32 15, %s1071
      %v1073 = vld [vmem:[%s1059] sm:%s1072]
      %v1074 = vunpack.c.l.bf16 %v1073
      %v1075 = vunpack.c.h.bf16 %v1073
      %s1076 = sadd.s32 %s189, 12
      %s1077 = ssub.s32 48, %s1076
      %v1078 = vstv %s1077
      %vm1079 = vcmp.lt.s32.totalorder %v1078, 0
      %v1080 = vsel %vm1079, %v10, %v1074
      %v1081 = vlaneseq
      %v1082 = vand.u32 %v1081, 127
      %vm1084 = vcmp.lt.s32.totalorder %v1082, 9
      %v1085 = vsel %vm1084, %v1080, %v10
      %s1086 = scalar_lea.vmem [#allocation7], 204
      %v1087 = vpack.c.bf16 0.0, %v1085
      %1089 = vst [vmem:[%s1086] sm:$0xf] %v1087
      %v1091 = vld [vmem:[%s0] sm:$0xf]
      %v1092 = vld [vmem:[%s0 + $0x4] sm:$0x1]
      %v1093 = vld [vmem:[#allocation7] sm:$0xf]
      %v1094 = vld [vmem:[#allocation7 + $0x4] sm:$0xf]
      %v1095 = vld [vmem:[#allocation7 + $0x8] sm:$0xf]
      %v1096 = vld [vmem:[#allocation7 + $0xc] sm:$0xf]
      %v1097 = vld [vmem:[#allocation7 + $0x10] sm:$0xf]
      %v1098 = vld [vmem:[#allocation7 + $0x14] sm:$0xf]
      %v1099 = vld [vmem:[#allocation7 + $0x18] sm:$0xf]
      %v1100 = vld [vmem:[#allocation7 + $0x1c] sm:$0xf]
      %v1101 = vld [vmem:[#allocation7 + $0x20] sm:$0xf]
      %v1102 = vld [vmem:[#allocation7 + $0x24] sm:$0xf]
      %v1103 = vld [vmem:[#allocation7 + $0x28] sm:$0xf]
      %v1104 = vld [vmem:[#allocation7 + $0x2c] sm:$0xf]
      %v1105 = vld [vmem:[#allocation7 + $0x30] sm:$0xf]
      %v1119 = vunpack.c.l.b16 %v1093
      %v1120 = vunpack.c.l.b16 %v1094
      %v1121 = vunpack.c.l.b16 %v1095
      %v1122 = vunpack.c.l.b16 %v1096
      %v1123 = vunpack.c.l.b16 %v1097
      %v1124 = vunpack.c.l.b16 %v1098
      %v1125 = vunpack.c.l.b16 %v1099
      %v1126 = vunpack.c.l.b16 %v1100
      %v1127 = vunpack.c.l.b16 %v1101
      %v1128 = vunpack.c.l.b16 %v1102
      %v1129 = vunpack.c.l.b16 %v1103
      %v1130 = vunpack.c.l.b16 %v1104
      %v1131 = vunpack.c.l.b16 %v1105
      %v1132 = vpack.c.b16 %v1120, %v1119
      %v1133 = vpack.c.b16 %v1122, %v1121
      %v1134 = vpack.c.b16 %v1124, %v1123
      %v1135 = vpack.c.b16 %v1126, %v1125
      %v1136 = vpack.c.b16 %v1128, %v1127
      %v1137 = vpack.c.b16 %v1130, %v1129
      %v1138 = vpack.c.b16 %v1131, %v1131
      %v1141 = vunpack.c.l.b16 %v1091
      %v1142 = vunpack.c.l.b16 %v1092
      %v1143 = vpack.c.b16 %v1142, %v1141
      %vm1144 = vcmask 72704
      %v1146 = vsel %vm1144, %v1132, 0
      %v1149 = vsel %vm1144, %v1133, 0
      %v1152 = vsel %vm1144, %v1134, 0
      %v1155 = vsel %vm1144, %v1135, 0
      %v1158 = vsel %vm1144, %v1136, 0
      %v1161 = vsel %vm1144, %v1137, 0
      %v1164 = vsel %vm1144, %v1138, 0
      %vm1166 = vcmask 1043456
      %vm1167 = vcmask 1044480
      %v1168 = vsel %vm1166, 4294967295, 65535
      %v1169 = vsel %vm1167, %v1168, 0
      %v1171 = vand.u32 %v1143, %v1169
      %1173 = vmatprep.subr.bf16.mxu0 0
      %1174 = vmatpush1.bf16.msra.mxu0 %v1171
      %1175 = vmatprep.subr.bf16.mxu0 0
      %1176 = vmatpush1.bf16.msra.mxu0 0
      %1177 = vmatprep.subr.bf16.mxu0 0
      %1178 = vmatpush1.bf16.msra.mxu0 0
      %1179 = vmatprep.subr.bf16.mxu0 0
      %1180 = vmatpush1.bf16.msra.mxu0 0
      %1181 = vmatprep.subr.bf16.mxu0 0
      %1182 = vmatpush1.bf16.msra.mxu0 0
      %1183 = vmatprep.subr.bf16.mxu0 0
      %1184 = vmatpush1.bf16.msra.mxu0 0
      %1185 = vmatprep.subr.bf16.mxu0 0
      %1186 = vmatpush1.bf16.msra.mxu0 0
      %1187 = vmatprep.subr.bf16.mxu0 0
      %1188 = vmatpush1.bf16.msra.mxu0 0
      %1189 = vmatprep.subr.bf16.mxu0 0
      %1190 = vmatpush1.bf16.msra.mxu0 0
      %1191 = vmatprep.subr.bf16.mxu0 0
      %1192 = vmatpush1.bf16.msra.mxu0 0
      %1193 = vmatprep.subr.bf16.mxu0 0
      %1194 = vmatpush1.bf16.msra.mxu0 0
      %1195 = vmatprep.subr.bf16.mxu0 0
      %1196 = vmatpush1.bf16.msra.mxu0 0
      %1197 = vmatprep.subr.bf16.mxu0 0
      %1198 = vmatpush1.bf16.msra.mxu0 0
      %1199 = vmatprep.subr.bf16.mxu0 0
      %1200 = vmatpush1.bf16.msra.mxu0 0
      %1201 = vmatprep.subr.bf16.mxu0 0
      %1202 = vmatpush1.bf16.msra.mxu0 0
      %1203 = vmatprep.subr.bf16.mxu0 0
      %1204 = vmatpush1.bf16.msra.mxu0 0
      %1205 = vmatprep.mubr.bf16.mxu0 0
      %1206 = vmatmul.mubr.bf16.gmra.mrb[0].mxu0 %v1146
      %v1207 = vpop.f32.mrb[0].mxu0
      %v1208 = vadd.f32 0.0, %v1207
      %v1209 = vpop.f32.mrb[0].mxu0
      %v1210 = vpop.f32.mrb[0].mxu0
      %v1211 = vadd.f32 0.0, %v1210
      %v1212 = vpop.f32.mrb[0].mxu0
      %1213 = vmatprep.mubr.bf16.mxu0 0
      %1214 = vmatmul.mubr.bf16.gmra.mrb[0].mxu0 %v1149
      %v1215 = vpop.f32.mrb[0].mxu0
      %v1216 = vadd.f32 0.0, %v1215
      %v1217 = vpop.f32.mrb[0].mxu0
      %v1218 = vpop.f32.mrb[0].mxu0
      %v1219 = vadd.f32 0.0, %v1218
      %v1220 = vpop.f32.mrb[0].mxu0
      %1221 = vmatprep.mubr.bf16.mxu0 0
      %1222 = vmatmul.mubr.bf16.gmra.mrb[0].mxu0 %v1152
      %v1223 = vpop.f32.mrb[0].mxu0
      %v1224 = vadd.f32 0.0, %v1223
      %v1225 = vpop.f32.mrb[0].mxu0
      %v1226 = vpop.f32.mrb[0].mxu0
      %v1227 = vadd.f32 0.0, %v1226
      %v1228 = vpop.f32.mrb[0].mxu0
      %1229 = vmatprep.mubr.bf16.mxu0 0
      %1230 = vmatmul.mubr.bf16.gmra.mrb[0].mxu0 %v1155
      %v1231 = vpop.f32.mrb[0].mxu0
      %v1232 = vadd.f32 0.0, %v1231
      %v1233 = vpop.f32.mrb[0].mxu0
      %v1234 = vpop.f32.mrb[0].mxu0
      %v1235 = vadd.f32 0.0, %v1234
      %v1236 = vpop.f32.mrb[0].mxu0
      %1237 = vmatprep.mubr.bf16.mxu0 0
      %1238 = vmatmul.mubr.bf16.gmra.mrb[0].mxu0 %v1158
      %v1239 = vpop.f32.mrb[0].mxu0
      %v1240 = vadd.f32 0.0, %v1239
      %v1241 = vpop.f32.mrb[0].mxu0
      %v1242 = vpop.f32.mrb[0].mxu0
      %v1243 = vadd.f32 0.0, %v1242
      %v1244 = vpop.f32.mrb[0].mxu0
      %1245 = vmatprep.mubr.bf16.mxu0 0
      %1246 = vmatmul.mubr.bf16.gmra.mrb[0].mxu0 %v1161
      %v1247 = vpop.f32.mrb[0].mxu0
      %v1248 = vadd.f32 0.0, %v1247
      %v1249 = vpop.f32.mrb[0].mxu0
      %v1250 = vpop.f32.mrb[0].mxu0
      %v1251 = vadd.f32 0.0, %v1250
      %v1252 = vpop.f32.mrb[0].mxu0
      %1253 = vmatprep.mubr.bf16.mxu0 0
      %1254 = vmatmul.mubr.bf16.gmra.mrb[0].mxu0 %v1164
      %v1255 = vpop.f32.mrb[0].mxu0
      %v1256 = vadd.f32 0.0, %v1255
      %v1257 = vpop.f32.mrb[0].mxu0
      %v1258 = vpop.f32.mrb[0].mxu0
      %v1259 = vpop.f32.mrb[0].mxu0
      %1260 = vdwg.mxu0
      %s1261 = scalar_lea.vmem [#allocation7], 52
      %v1262 = vld [vmem:[%s1261] sm:$0xf]
      %v1263 = vld [vmem:[%s1261 + $0x4] sm:$0xf]
      %v1264 = vld [vmem:[%s1261 + $0x8] sm:$0xf]
      %v1265 = vld [vmem:[%s1261 + $0xc] sm:$0xf]
      %v1266 = vld [vmem:[%s1261 + $0x10] sm:$0xf]
      %v1267 = vld [vmem:[%s1261 + $0x14] sm:$0xf]
      %v1268 = vld [vmem:[%s1261 + $0x18] sm:$0xf]
      %v1269 = vld [vmem:[%s1261 + $0x1c] sm:$0xf]
      %v1270 = vld [vmem:[%s1261 + $0x20] sm:$0xf]
      %v1271 = vld [vmem:[%s1261 + $0x24] sm:$0xf]
      %v1272 = vld [vmem:[%s1261 + $0x28] sm:$0xf]
      %v1273 = vld [vmem:[%s1261 + $0x2c] sm:$0xf]
      %v1274 = vld [vmem:[%s1261 + $0x30] sm:$0xf]
      %v1288 = vunpack.c.l.b16 %v1262
      %v1289 = vunpack.c.l.b16 %v1263
      %v1290 = vunpack.c.l.b16 %v1264
      %v1291 = vunpack.c.l.b16 %v1265
      %v1292 = vunpack.c.l.b16 %v1266
      %v1293 = vunpack.c.l.b16 %v1267
      %v1294 = vunpack.c.l.b16 %v1268
      %v1295 = vunpack.c.l.b16 %v1269
      %v1296 = vunpack.c.l.b16 %v1270
      %v1297 = vunpack.c.l.b16 %v1271
      %v1298 = vunpack.c.l.b16 %v1272
      %v1299 = vunpack.c.l.b16 %v1273
      %v1300 = vunpack.c.l.b16 %v1274
      %v1301 = vpack.c.b16 %v1289, %v1288
      %v1302 = vpack.c.b16 %v1291, %v1290
      %v1303 = vpack.c.b16 %v1293, %v1292
      %v1304 = vpack.c.b16 %v1295, %v1294
      %v1305 = vpack.c.b16 %v1297, %v1296
      %v1306 = vpack.c.b16 %v1299, %v1298
      %v1307 = vpack.c.b16 %v1300, %v1300
      %v1309 = vsel %vm1144, %v1301, 0
      %v1312 = vsel %vm1144, %v1302, 0
      %v1315 = vsel %vm1144, %v1303, 0
      %v1318 = vsel %vm1144, %v1304, 0
      %v1321 = vsel %vm1144, %v1305, 0
      %v1324 = vsel %vm1144, %v1306, 0
      %v1327 = vsel %vm1144, %v1307, 0
      %1329 = vmatprep.subr.bf16.mxu0 0
      %1330 = vmatpush1.bf16.msra.mxu0 %v1171
      %1331 = vmatprep.subr.bf16.mxu0 0
      %1332 = vmatpush1.bf16.msra.mxu0 0
      %1333 = vmatprep.subr.bf16.mxu0 0
      %1334 = vmatpush1.bf16.msra.mxu0 0
      %1335 = vmatprep.subr.bf16.mxu0 0
      %1336 = vmatpush1.bf16.msra.mxu0 0
      %1337 = vmatprep.subr.bf16.mxu0 0
      %1338 = vmatpush1.bf16.msra.mxu0 0
      %1339 = vmatprep.subr.bf16.mxu0 0
      %1340 = vmatpush1.bf16.msra.mxu0 0
      %1341 = vmatprep.subr.bf16.mxu0 0
      %1342 = vmatpush1.bf16.msra.mxu0 0
      %1343 = vmatprep.subr.bf16.mxu0 0
      %1344 = vmatpush1.bf16.msra.mxu0 0
      %1345 = vmatprep.subr.bf16.mxu0 0
      %1346 = vmatpush1.bf16.msra.mxu0 0
      %1347 = vmatprep.subr.bf16.mxu0 0
      %1348 = vmatpush1.bf16.msra.mxu0 0
      %1349 = vmatprep.subr.bf16.mxu0 0
      %1350 = vmatpush1.bf16.msra.mxu0 0
      %1351 = vmatprep.subr.bf16.mxu0 0
      %1352 = vmatpush1.bf16.msra.mxu0 0
      %1353 = vmatprep.subr.bf16.mxu0 0
      %1354 = vmatpush1.bf16.msra.mxu0 0
      %1355 = vmatprep.subr.bf16.mxu0 0
      %1356 = vmatpush1.bf16.msra.mxu0 0
      %1357 = vmatprep.subr.bf16.mxu0 0
      %1358 = vmatpush1.bf16.msra.mxu0 0
      %1359 = vmatprep.subr.bf16.mxu0 0
      %1360 = vmatpush1.bf16.msra.mxu0 0
      %1361 = vmatprep.mubr.bf16.mxu0 0
      %1362 = vmatmul.mubr.bf16.gmra.mrb[0].mxu0 %v1309
      %v1363 = vpop.f32.mrb[0].mxu0
      %v1364 = vadd.f32 0.0, %v1363
      %v1365 = vpop.f32.mrb[0].mxu0
      %v1366 = vpop.f32.mrb[0].mxu0
      %v1367 = vadd.f32 0.0, %v1366
      %v1368 = vpop.f32.mrb[0].mxu0
      %1369 = vmatprep.mubr.bf16.mxu0 0
      %1370 = vmatmul.mubr.bf16.gmra.mrb[0].mxu0 %v1312
      %v1371 = vpop.f32.mrb[0].mxu0
      %v1372 = vadd.f32 0.0, %v1371
      %v1373 = vpop.f32.mrb[0].mxu0
      %v1374 = vpop.f32.mrb[0].mxu0
      %v1375 = vadd.f32 0.0, %v1374
      %v1376 = vpop.f32.mrb[0].mxu0
      %1377 = vmatprep.mubr.bf16.mxu0 0
      %1378 = vmatmul.mubr.bf16.gmra.mrb[0].mxu0 %v1315
      %v1379 = vpop.f32.mrb[0].mxu0
      %v1380 = vadd.f32 0.0, %v1379
      %v1381 = vpop.f32.mrb[0].mxu0
      %v1382 = vpop.f32.mrb[0].mxu0
      %v1383 = vadd.f32 0.0, %v1382
      %v1384 = vpop.f32.mrb[0].mxu0
      %1385 = vmatprep.mubr.bf16.mxu0 0
      %1386 = vmatmul.mubr.bf16.gmra.mrb[0].mxu0 %v1318
      %v1387 = vpop.f32.mrb[0].mxu0
      %v1388 = vadd.f32 0.0, %v1387
      %v1389 = vpop.f32.mrb[0].mxu0
      %v1390 = vpop.f32.mrb[0].mxu0
      %v1391 = vadd.f32 0.0, %v1390
      %v1392 = vpop.f32.mrb[0].mxu0
      %1393 = vmatprep.mubr.bf16.mxu0 0
      %1394 = vmatmul.mubr.bf16.gmra.mrb[0].mxu0 %v1321
      %v1395 = vpop.f32.mrb[0].mxu0
      %v1396 = vadd.f32 0.0, %v1395
      %v1397 = vpop.f32.mrb[0].mxu0
      %v1398 = vpop.f32.mrb[0].mxu0
      %v1399 = vadd.f32 0.0, %v1398
      %v1400 = vpop.f32.mrb[0].mxu0
      %1401 = vmatprep.mubr.bf16.mxu0 0
      %1402 = vmatmul.mubr.bf16.gmra.mrb[0].mxu0 %v1324
      %v1403 = vpop.f32.mrb[0].mxu0
      %v1404 = vadd.f32 0.0, %v1403
      %v1405 = vpop.f32.mrb[0].mxu0
      %v1406 = vpop.f32.mrb[0].mxu0
      %v1407 = vadd.f32 0.0, %v1406
      %v1408 = vpop.f32.mrb[0].mxu0
      %1409 = vmatprep.mubr.bf16.mxu0 0
      %1410 = vmatmul.mubr.bf16.gmra.mrb[0].mxu0 %v1327
      %v1411 = vpop.f32.mrb[0].mxu0
      %v1412 = vadd.f32 0.0, %v1411
      %v1413 = vpop.f32.mrb[0].mxu0
      %v1414 = vpop.f32.mrb[0].mxu0
      %v1415 = vpop.f32.mrb[0].mxu0
      %1416 = vdwg.mxu0
      %v1417 = vmax.f32 %v1208, %v1364
      %v1418 = vmax.f32 %v1211, %v1367
      %v1419 = vmax.f32 %v1216, %v1372
      %v1420 = vmax.f32 %v1219, %v1375
      %v1421 = vmax.f32 %v1224, %v1380
      %v1422 = vmax.f32 %v1227, %v1383
      %v1423 = vmax.f32 %v1232, %v1388
      %v1424 = vmax.f32 %v1235, %v1391
      %v1425 = vmax.f32 %v1240, %v1396
      %v1426 = vmax.f32 %v1243, %v1399
      %v1427 = vmax.f32 %v1248, %v1404
      %v1428 = vmax.f32 %v1251, %v1407
      %v1429 = vmax.f32 %v1256, %v1412
      %s1430 = scalar_lea.vmem [#allocation7], 104
      %v1431 = vld [vmem:[%s1430] sm:$0xf]
      %v1432 = vld [vmem:[%s1430 + $0x4] sm:$0xf]
      %v1433 = vld [vmem:[%s1430 + $0x8] sm:$0xf]
      %v1434 = vld [vmem:[%s1430 + $0xc] sm:$0xf]
      %v1435 = vld [vmem:[%s1430 + $0x10] sm:$0xf]
      %v1436 = vld [vmem:[%s1430 + $0x14] sm:$0xf]
      %v1437 = vld [vmem:[%s1430 + $0x18] sm:$0xf]
      %v1438 = vld [vmem:[%s1430 + $0x1c] sm:$0xf]
      %v1439 = vld [vmem:[%s1430 + $0x20] sm:$0xf]
      %v1440 = vld [vmem:[%s1430 + $0x24] sm:$0xf]
      %v1441 = vld [vmem:[%s1430 + $0x28] sm:$0xf]
      %v1442 = vld [vmem:[%s1430 + $0x2c] sm:$0xf]
      %v1443 = vld [vmem:[%s1430 + $0x30] sm:$0xf]
      %v1457 = vunpack.c.l.b16 %v1431
      %v1458 = vunpack.c.l.b16 %v1432
      %v1459 = vunpack.c.l.b16 %v1433
      %v1460 = vunpack.c.l.b16 %v1434
      %v1461 = vunpack.c.l.b16 %v1435
      %v1462 = vunpack.c.l.b16 %v1436
      %v1463 = vunpack.c.l.b16 %v1437
      %v1464 = vunpack.c.l.b16 %v1438
      %v1465 = vunpack.c.l.b16 %v1439
      %v1466 = vunpack.c.l.b16 %v1440
      %v1467 = vunpack.c.l.b16 %v1441
      %v1468 = vunpack.c.l.b16 %v1442
      %v1469 = vunpack.c.l.b16 %v1443
      %v1470 = vpack.c.b16 %v1458, %v1457
      %v1471 = vpack.c.b16 %v1460, %v1459
      %v1472 = vpack.c.b16 %v1462, %v1461
      %v1473 = vpack.c.b16 %v1464, %v1463
      %v1474 = vpack.c.b16 %v1466, %v1465
      %v1475 = vpack.c.b16 %v1468, %v1467
      %v1476 = vpack.c.b16 %v1469, %v1469
      %v1478 = vsel %vm1144, %v1470, 0
      %v1481 = vsel %vm1144, %v1471, 0
      %v1484 = vsel %vm1144, %v1472, 0
      %v1487 = vsel %vm1144, %v1473, 0
      %v1490 = vsel %vm1144, %v1474, 0
      %v1493 = vsel %vm1144, %v1475, 0
      %v1496 = vsel %vm1144, %v1476, 0
      %1498 = vmatprep.subr.bf16.mxu0 0
      %1499 = vmatpush1.bf16.msra.mxu0 %v1171
      %1500 = vmatprep.subr.bf16.mxu0 0
      %1501 = vmatpush1.bf16.msra.mxu0 0
      %1502 = vmatprep.subr.bf16.mxu0 0
      %1503 = vmatpush1.bf16.msra.mxu0 0
      %1504 = vmatprep.subr.bf16.mxu0 0
      %1505 = vmatpush1.bf16.msra.mxu0 0
      %1506 = vmatprep.subr.bf16.mxu0 0
      %1507 = vmatpush1.bf16.msra.mxu0 0
      %1508 = vmatprep.subr.bf16.mxu0 0
      %1509 = vmatpush1.bf16.msra.mxu0 0
      %1510 = vmatprep.subr.bf16.mxu0 0
      %1511 = vmatpush1.bf16.msra.mxu0 0
      %1512 = vmatprep.subr.bf16.mxu0 0
      %1513 = vmatpush1.bf16.msra.mxu0 0
      %1514 = vmatprep.subr.bf16.mxu0 0
      %1515 = vmatpush1.bf16.msra.mxu0 0
      %1516 = vmatprep.subr.bf16.mxu0 0
      %1517 = vmatpush1.bf16.msra.mxu0 0
      %1518 = vmatprep.subr.bf16.mxu0 0
      %1519 = vmatpush1.bf16.msra.mxu0 0
      %1520 = vmatprep.subr.bf16.mxu0 0
      %1521 = vmatpush1.bf16.msra.mxu0 0
      %1522 = vmatprep.subr.bf16.mxu0 0
      %1523 = vmatpush1.bf16.msra.mxu0 0
      %1524 = vmatprep.subr.bf16.mxu0 0
      %1525 = vmatpush1.bf16.msra.mxu0 0
      %1526 = vmatprep.subr.bf16.mxu0 0
      %1527 = vmatpush1.bf16.msra.mxu0 0
      %1528 = vmatprep.subr.bf16.mxu0 0
      %1529 = vmatpush1.bf16.msra.mxu0 0
      %1530 = vmatprep.mubr.bf16.mxu0 0
      %1531 = vmatmul.mubr.bf16.gmra.mrb[0].mxu0 %v1478
      %v1532 = vpop.f32.mrb[0].mxu0
      %v1533 = vadd.f32 0.0, %v1532
      %v1534 = vpop.f32.mrb[0].mxu0
      %v1535 = vpop.f32.mrb[0].mxu0
      %v1536 = vadd.f32 0.0, %v1535
      %v1537 = vpop.f32.mrb[0].mxu0
      %1538 = vmatprep.mubr.bf16.mxu0 0
      %1539 = vmatmul.mubr.bf16.gmra.mrb[0].mxu0 %v1481
      %v1540 = vpop.f32.mrb[0].mxu0
      %v1541 = vadd.f32 0.0, %v1540
      %v1542 = vpop.f32.mrb[0].mxu0
      %v1543 = vpop.f32.mrb[0].mxu0
      %v1544 = vadd.f32 0.0, %v1543
      %v1545 = vpop.f32.mrb[0].mxu0
      %1546 = vmatprep.mubr.bf16.mxu0 0
      %1547 = vmatmul.mubr.bf16.gmra.mrb[0].mxu0 %v1484
      %v1548 = vpop.f32.mrb[0].mxu0
      %v1549 = vadd.f32 0.0, %v1548
      %v1550 = vpop.f32.mrb[0].mxu0
      %v1551 = vpop.f32.mrb[0].mxu0
      %v1552 = vadd.f32 0.0, %v1551
      %v1553 = vpop.f32.mrb[0].mxu0
      %1554 = vmatprep.mubr.bf16.mxu0 0
      %1555 = vmatmul.mubr.bf16.gmra.mrb[0].mxu0 %v1487
      %v1556 = vpop.f32.mrb[0].mxu0
      %v1557 = vadd.f32 0.0, %v1556
      %v1558 = vpop.f32.mrb[0].mxu0
      %v1559 = vpop.f32.mrb[0].mxu0
      %v1560 = vadd.f32 0.0, %v1559
      %v1561 = vpop.f32.mrb[0].mxu0
      %1562 = vmatprep.mubr.bf16.mxu0 0
      %1563 = vmatmul.mubr.bf16.gmra.mrb[0].mxu0 %v1490
      %v1564 = vpop.f32.mrb[0].mxu0
      %v1565 = vadd.f32 0.0, %v1564
      %v1566 = vpop.f32.mrb[0].mxu0
      %v1567 = vpop.f32.mrb[0].mxu0
      %v1568 = vadd.f32 0.0, %v1567
      %v1569 = vpop.f32.mrb[0].mxu0
      %1570 = vmatprep.mubr.bf16.mxu0 0
      %1571 = vmatmul.mubr.bf16.gmra.mrb[0].mxu0 %v1493
      %v1572 = vpop.f32.mrb[0].mxu0
      %v1573 = vadd.f32 0.0, %v1572
      %v1574 = vpop.f32.mrb[0].mxu0
      %v1575 = vpop.f32.mrb[0].mxu0
      %v1576 = vadd.f32 0.0, %v1575
      %v1577 = vpop.f32.mrb[0].mxu0
      %1578 = vmatprep.mubr.bf16.mxu0 0
      %1579 = vmatmul.mubr.bf16.gmra.mrb[0].mxu0 %v1496
      %v1580 = vpop.f32.mrb[0].mxu0
      %v1581 = vadd.f32 0.0, %v1580
      %v1582 = vpop.f32.mrb[0].mxu0
      %v1583 = vpop.f32.mrb[0].mxu0
      %v1584 = vpop.f32.mrb[0].mxu0
      %1585 = vdwg.mxu0
      %v1586 = vmax.f32 %v1417, %v1533
      %v1587 = vmax.f32 %v1418, %v1536
      %v1588 = vmax.f32 %v1419, %v1541
      %v1589 = vmax.f32 %v1420, %v1544
      %v1590 = vmax.f32 %v1421, %v1549
      %v1591 = vmax.f32 %v1422, %v1552
      %v1592 = vmax.f32 %v1423, %v1557
      %v1593 = vmax.f32 %v1424, %v1560
      %v1594 = vmax.f32 %v1425, %v1565
      %v1595 = vmax.f32 %v1426, %v1568
      %v1596 = vmax.f32 %v1427, %v1573
      %v1597 = vmax.f32 %v1428, %v1576
      %v1598 = vmax.f32 %v1429, %v1581
      %s1599 = scalar_lea.vmem [#allocation7], 156
      %v1600 = vld [vmem:[%s1599] sm:$0xf]
      %v1601 = vld [vmem:[%s1599 + $0x4] sm:$0xf]
      %v1602 = vld [vmem:[%s1599 + $0x8] sm:$0xf]
      %v1603 = vld [vmem:[%s1599 + $0xc] sm:$0xf]
      %v1604 = vld [vmem:[%s1599 + $0x10] sm:$0xf]
      %v1605 = vld [vmem:[%s1599 + $0x14] sm:$0xf]
      %v1606 = vld [vmem:[%s1599 + $0x18] sm:$0xf]
      %v1607 = vld [vmem:[%s1599 + $0x1c] sm:$0xf]
      %v1608 = vld [vmem:[%s1599 + $0x20] sm:$0xf]
      %v1609 = vld [vmem:[%s1599 + $0x24] sm:$0xf]
      %v1610 = vld [vmem:[%s1599 + $0x28] sm:$0xf]
      %v1611 = vld [vmem:[%s1599 + $0x2c] sm:$0xf]
      %v1612 = vld [vmem:[%s1599 + $0x30] sm:$0xf]
      %v1626 = vunpack.c.l.b16 %v1600
      %v1627 = vunpack.c.l.b16 %v1601
      %v1628 = vunpack.c.l.b16 %v1602
      %v1629 = vunpack.c.l.b16 %v1603
      %v1630 = vunpack.c.l.b16 %v1604
      %v1631 = vunpack.c.l.b16 %v1605
      %v1632 = vunpack.c.l.b16 %v1606
      %v1633 = vunpack.c.l.b16 %v1607
      %v1634 = vunpack.c.l.b16 %v1608
      %v1635 = vunpack.c.l.b16 %v1609
      %v1636 = vunpack.c.l.b16 %v1610
      %v1637 = vunpack.c.l.b16 %v1611
      %v1638 = vunpack.c.l.b16 %v1612
      %v1639 = vpack.c.b16 %v1627, %v1626
      %v1640 = vpack.c.b16 %v1629, %v1628
      %v1641 = vpack.c.b16 %v1631, %v1630
      %v1642 = vpack.c.b16 %v1633, %v1632
      %v1643 = vpack.c.b16 %v1635, %v1634
      %v1644 = vpack.c.b16 %v1637, %v1636
      %v1645 = vpack.c.b16 %v1638, %v1638
      %v1647 = vsel %vm1144, %v1639, 0
      %v1650 = vsel %vm1144, %v1640, 0
      %v1653 = vsel %vm1144, %v1641, 0
      %v1656 = vsel %vm1144, %v1642, 0
      %v1659 = vsel %vm1144, %v1643, 0
      %v1662 = vsel %vm1144, %v1644, 0
      %v1665 = vsel %vm1144, %v1645, 0
      %1667 = vmatprep.subr.bf16.mxu0 0
      %1668 = vmatpush1.bf16.msra.mxu0 %v1171
      %1669 = vmatprep.subr.bf16.mxu0 0
      %1670 = vmatpush1.bf16.msra.mxu0 0
      %1671 = vmatprep.subr.bf16.mxu0 0
      %1672 = vmatpush1.bf16.msra.mxu0 0
      %1673 = vmatprep.subr.bf16.mxu0 0
      %1674 = vmatpush1.bf16.msra.mxu0 0
      %1675 = vmatprep.subr.bf16.mxu0 0
      %1676 = vmatpush1.bf16.msra.mxu0 0
      %1677 = vmatprep.subr.bf16.mxu0 0
      %1678 = vmatpush1.bf16.msra.mxu0 0
      %1679 = vmatprep.subr.bf16.mxu0 0
      %1680 = vmatpush1.bf16.msra.mxu0 0
      %1681 = vmatprep.subr.bf16.mxu0 0
      %1682 = vmatpush1.bf16.msra.mxu0 0
      %1683 = vmatprep.subr.bf16.mxu0 0
      %1684 = vmatpush1.bf16.msra.mxu0 0
      %1685 = vmatprep.subr.bf16.mxu0 0
      %1686 = vmatpush1.bf16.msra.mxu0 0
      %1687 = vmatprep.subr.bf16.mxu0 0
      %1688 = vmatpush1.bf16.msra.mxu0 0
      %1689 = vmatprep.subr.bf16.mxu0 0
      %1690 = vmatpush1.bf16.msra.mxu0 0
      %1691 = vmatprep.subr.bf16.mxu0 0
      %1692 = vmatpush1.bf16.msra.mxu0 0
      %1693 = vmatprep.subr.bf16.mxu0 0
      %1694 = vmatpush1.bf16.msra.mxu0 0
      %1695 = vmatprep.subr.bf16.mxu0 0
      %1696 = vmatpush1.bf16.msra.mxu0 0
      %1697 = vmatprep.subr.bf16.mxu0 0
      %1698 = vmatpush1.bf16.msra.mxu0 0
      %1699 = vmatprep.mubr.bf16.mxu0 0
      %1700 = vmatmul.mubr.bf16.gmra.mrb[0].mxu0 %v1647
      %v1701 = vpop.f32.mrb[0].mxu0
      %v1702 = vadd.f32 0.0, %v1701
      %v1703 = vpop.f32.mrb[0].mxu0
      %v1704 = vpop.f32.mrb[0].mxu0
      %v1705 = vadd.f32 0.0, %v1704
      %v1706 = vpop.f32.mrb[0].mxu0
      %1707 = vmatprep.mubr.bf16.mxu0 0
      %1708 = vmatmul.mubr.bf16.gmra.mrb[0].mxu0 %v1650
      %v1709 = vpop.f32.mrb[0].mxu0
      %v1710 = vadd.f32 0.0, %v1709
      %v1711 = vpop.f32.mrb[0].mxu0
      %v1712 = vpop.f32.mrb[0].mxu0
      %v1713 = vadd.f32 0.0, %v1712
      %v1714 = vpop.f32.mrb[0].mxu0
      %1715 = vmatprep.mubr.bf16.mxu0 0
      %1716 = vmatmul.mubr.bf16.gmra.mrb[0].mxu0 %v1653
      %v1717 = vpop.f32.mrb[0].mxu0
      %v1718 = vadd.f32 0.0, %v1717
      %v1719 = vpop.f32.mrb[0].mxu0
      %v1720 = vpop.f32.mrb[0].mxu0
      %v1721 = vadd.f32 0.0, %v1720
      %v1722 = vpop.f32.mrb[0].mxu0
      %1723 = vmatprep.mubr.bf16.mxu0 0
      %1724 = vmatmul.mubr.bf16.gmra.mrb[0].mxu0 %v1656
      %v1725 = vpop.f32.mrb[0].mxu0
      %v1726 = vadd.f32 0.0, %v1725
      %v1727 = vpop.f32.mrb[0].mxu0
      %v1728 = vpop.f32.mrb[0].mxu0
      %v1729 = vadd.f32 0.0, %v1728
      %v1730 = vpop.f32.mrb[0].mxu0
      %1731 = vmatprep.mubr.bf16.mxu0 0
      %1732 = vmatmul.mubr.bf16.gmra.mrb[0].mxu0 %v1659
      %v1733 = vpop.f32.mrb[0].mxu0
      %v1734 = vadd.f32 0.0, %v1733
      %v1735 = vpop.f32.mrb[0].mxu0
      %v1736 = vpop.f32.mrb[0].mxu0
      %v1737 = vadd.f32 0.0, %v1736
      %v1738 = vpop.f32.mrb[0].mxu0
      %1739 = vmatprep.mubr.bf16.mxu0 0
      %1740 = vmatmul.mubr.bf16.gmra.mrb[0].mxu0 %v1662
      %v1741 = vpop.f32.mrb[0].mxu0
      %v1742 = vadd.f32 0.0, %v1741
      %v1743 = vpop.f32.mrb[0].mxu0
      %v1744 = vpop.f32.mrb[0].mxu0
      %v1745 = vadd.f32 0.0, %v1744
      %v1746 = vpop.f32.mrb[0].mxu0
      %1747 = vmatprep.mubr.bf16.mxu0 0
      %1748 = vmatmul.mubr.bf16.gmra.mrb[0].mxu0 %v1665
      %v1749 = vpop.f32.mrb[0].mxu0
      %v1750 = vadd.f32 0.0, %v1749
      %v1751 = vpop.f32.mrb[0].mxu0
      %v1752 = vpop.f32.mrb[0].mxu0
      %v1753 = vpop.f32.mrb[0].mxu0
      %1754 = vdwg.mxu0
      %v1755 = vmax.f32 %v1586, %v1702
      %v1756 = vmax.f32 %v1587, %v1705
      %v1757 = vmax.f32 %v1588, %v1710
      %v1758 = vmax.f32 %v1589, %v1713
      %v1759 = vmax.f32 %v1590, %v1718
      %v1760 = vmax.f32 %v1591, %v1721
      %v1761 = vmax.f32 %v1592, %v1726
      %v1762 = vmax.f32 %v1593, %v1729
      %v1763 = vmax.f32 %v1594, %v1734
      %v1764 = vmax.f32 %v1595, %v1737
      %v1765 = vmax.f32 %v1596, %v1742
      %v1766 = vmax.f32 %v1597, %v1745
      %v1767 = vmax.f32 %v1598, %v1750
      %v1768 = vld [vmem:[%s1] sm:$0x1]
      %v1770 = vlaneseq
      %v1771 = vshrl.u32 %v1770, 7
      %v1772 = vsub.s32 0, %v1771
      %v1773 = vrot.slane %v1768, %v1772
      %v1775 = vadd.f32 %v1755, %v1773
      %v1776 = vadd.f32 %v1756, %v1773
      %v1777 = vadd.f32 %v1757, %v1773
      %v1778 = vadd.f32 %v1758, %v1773
      %v1779 = vadd.f32 %v1759, %v1773
      %v1780 = vadd.f32 %v1760, %v1773
      %v1781 = vadd.f32 %v1761, %v1773
      %v1782 = vadd.f32 %v1762, %v1773
      %v1783 = vadd.f32 %v1763, %v1773
      %v1784 = vadd.f32 %v1764, %v1773
      %v1785 = vadd.f32 %v1765, %v1773
      %v1786 = vadd.f32 %v1766, %v1773
      %v1787 = vadd.f32 %v1767, %v1773
      %v1788 = vmax.f32 %v1775, 0.0
      %v1789 = vmax.f32 %v1776, 0.0
      %v1790 = vmax.f32 %v1777, 0.0
      %v1791 = vmax.f32 %v1778, 0.0
      %v1792 = vmax.f32 %v1779, 0.0
      %v1793 = vmax.f32 %v1780, 0.0
      %v1794 = vmax.f32 %v1781, 0.0
      %v1795 = vmax.f32 %v1782, 0.0
      %v1796 = vmax.f32 %v1783, 0.0
      %v1797 = vmax.f32 %v1784, 0.0
      %v1798 = vmax.f32 %v1785, 0.0
      %v1799 = vmax.f32 %v1786, 0.0
      %v1800 = vmax.f32 %v1787, 0.0
      %v1801 = vpack.c.bf16 %v1789, %v1788
      %v1802 = vpack.c.bf16 %v1791, %v1790
      %v1803 = vpack.c.bf16 %v1793, %v1792
      %v1804 = vpack.c.bf16 %v1795, %v1794
      %v1805 = vpack.c.bf16 %v1797, %v1796
      %v1806 = vpack.c.bf16 %v1799, %v1798
      %v1807 = vpack.c.bf16 %v1800, %v1800
      %v1815 = vunpack.c.l.b16 %v1801
      %v1816 = vunpack.c.h.b16 %v1801
      %v1817 = vunpack.c.l.b16 %v1802
      %v1818 = vunpack.c.h.b16 %v1802
      %v1819 = vunpack.c.l.b16 %v1803
      %v1820 = vunpack.c.h.b16 %v1803
      %v1821 = vunpack.c.l.b16 %v1804
      %v1822 = vunpack.c.h.b16 %v1804
      %v1823 = vunpack.c.l.b16 %v1805
      %v1824 = vunpack.c.h.b16 %v1805
      %v1825 = vunpack.c.l.b16 %v1806
      %v1826 = vunpack.c.h.b16 %v1806
      %v1827 = vunpack.c.l.b16 %v1807
      %v1828 = vpack.c.b16 %v1815, %v1815
      %v1829 = vpack.c.b16 %v1816, %v1816
      %v1830 = vpack.c.b16 %v1817, %v1817
      %v1831 = vpack.c.b16 %v1818, %v1818
      %v1832 = vpack.c.b16 %v1819, %v1819
      %v1833 = vpack.c.b16 %v1820, %v1820
      %v1834 = vpack.c.b16 %v1821, %v1821
      %v1835 = vpack.c.b16 %v1822, %v1822
      %v1836 = vpack.c.b16 %v1823, %v1823
      %v1837 = vpack.c.b16 %v1824, %v1824
      %v1838 = vpack.c.b16 %v1825, %v1825
      %v1839 = vpack.c.b16 %v1826, %v1826
      %v1840 = vpack.c.b16 %v1827, %v1827
      %vm1854 = vcmask 125952
      %1855 = vst.msk [vmem:[%s198] sm:$0xf] %vm1854, %v1828
      %1856 = vst.msk [vmem:[%s198 + $0x4] sm:$0xf] %vm1854, %v1829
      %1857 = vst.msk [vmem:[%s198 + $0x8] sm:$0xf] %vm1854, %v1830
      %1858 = vst.msk [vmem:[%s198 + $0xc] sm:$0xf] %vm1854, %v1831
      %1859 = vst.msk [vmem:[%s198 + $0x10] sm:$0xf] %vm1854, %v1832
      %1860 = vst.msk [vmem:[%s198 + $0x14] sm:$0xf] %vm1854, %v1833
      %1861 = vst.msk [vmem:[%s198 + $0x18] sm:$0xf] %vm1854, %v1834
      %1862 = vst.msk [vmem:[%s198 + $0x1c] sm:$0xf] %vm1854, %v1835
      %1863 = vst.msk [vmem:[%s198 + $0x20] sm:$0xf] %vm1854, %v1836
      %1864 = vst.msk [vmem:[%s198 + $0x24] sm:$0xf] %vm1854, %v1837
      %1865 = vst.msk [vmem:[%s198 + $0x28] sm:$0xf] %vm1854, %v1838
      %1866 = vst.msk [vmem:[%s198 + $0x2c] sm:$0xf] %vm1854, %v1839
      %1867 = vst.msk [vmem:[%s198 + $0x30] sm:$0xf] %vm1854, %v1840
      %s1868 = smul.u32 13, %s20
      %p1869 = scmp.lt.s32.totalorder %s1868, 51
      %s1870 = scalar_select %p1869, %s1868, 51
      %s1871 = smul.addr %s1870, 4
      %s1872 = scalar_lea.vmem %s4, %s1871
      // Predicated region
      $region33: #{mnist_cnn_forward.6} parent=31 // pred_check
        %p1873 = pneg %p106
      $region34: #{mnist_cnn_forward.6} parent=31 // pred_check_branch
        %1875 = sbr.rel (%p1873) target = $region36
      $region35: #{mnist_cnn_forward.6} parent=31 // pred_region
        %s1876 = smul.u32 13, %s20
      $region36: #{mnist_cnn_forward.6} parent=31 // pred_fallthru
        _
    $region32: #{mnist_cnn_forward.6} parent=5 // pred_fallthru
      _
    %p1877 = scmp.le.s32.totalorder 2, %s15
    // Predicated region
    $region37: #{mnist_cnn_forward.6} parent=5 // pred_check
      %p1878 = pneg %p1877
    $region38: #{mnist_cnn_forward.6} parent=5 // pred_check_branch
      %1880 = sbr.rel (%p1878) target = $region40
    $region39: #{mnist_cnn_forward.6} parent=5 // pred_region
      %s1881 = ssub.s32 %s15, 2
      // Predicated region
      $region41: #{mnist_cnn_forward.6} parent=39 // pred_check
        %p1882 = pneg %p112
      $region42: #{mnist_cnn_forward.6} parent=39 // pred_check_branch
        %1884 = sbr.rel (%p1882) target = $region44
      $region43: #{mnist_cnn_forward.6} parent=39 // pred_region
        %s1885 = smul.u32 13, %s21
        %p1886 = scmp.lt.s32.totalorder %s1885, 51
        %s1887 = scalar_select %p1886, %s1885, 51
        %s1888 = smul.addr %s1887, 4
        %s1889 = scalar_lea.vmem %s4, %s1888
      $region44: #{mnist_cnn_forward.6} parent=39 // pred_fallthru
        _
    $region40: #{mnist_cnn_forward.6} parent=5 // pred_fallthru
      _
  $region6: #{mnist_cnn_forward.6} parent=0 // loop_footer
    %s19 = sadd.s32 1, %s15
  $region7: #{mnist_cnn_forward.6} parent=0 // loop_footer_branch
    %14 = sbr.rel target = $region3
  $region8: #{mnist_cnn_forward.6} parent=0 // loop_exit
    _

// kernel: mnist_cnn_forward.7
$region0: #{mnist_cnn_forward.7}
  #allocation0 [shape = 'u32[]', space=smem, size = 0x4, offset = 0x4, fixed_abs, tag = 'smem constant byte address 0x4 - core index']
  #allocation1 [shape = 'u32[144,128]{1,0:T(1,128)}', space=vmem, size = 0x12000, scoped, tag = 'internal scratch']
  #allocation2 [shape = 'u32[2048]{0}', space=vmem, size = 0x2000, scoped, tag = 'scoped memory for mnist_cnn_forward.7']
  #allocation3 [shape = 'u32[2048]{0}', space=vmem, size = 0x2000, scoped, tag = 'scoped memory for mnist_cnn_forward.7']
  #allocation4 [shape = 'u32[2048]{0}', space=vmem, size = 0x2000, scoped, tag = 'scoped memory for mnist_cnn_forward.7']
  #allocation5 [shape = 'u32[2048]{0}', space=vmem, size = 0x2000, scoped, tag = 'scoped memory for mnist_cnn_forward.7']
  #allocation6 [shape = 'u32[2048]{0}', space=vmem, size = 0x2000, scoped, tag = 'scoped memory for mnist_cnn_forward.7']
  %s0 = inlined_call_operand.vmem [shape: bf16[144,32], index: 0, kind: input, shape index: {}]
  %s1 = inlined_call_operand.vmem [shape: f32[1,32], index: 1, kind: input, shape index: {}]
  %s2 = inlined_call_operand.vmem [shape: bf16[4,98,144], index: 2, kind: input, shape index: {}]
  %s3 = inlined_call_operand.<no memory space> [shape: bf16[], index: 3, kind: input, shape index: {}]
  %s4 = inlined_call_operand.vmem [shape: f32[128,32], index: 4, kind: output, shape index: {}]
  %s5 = sld [smem:[#allocation0]]
  $region45: #{mnist_cnn_forward.7} parent=0
    _
  %s7 = ssub.s32 1, %s5
  %s8 = scalar_select 0, %s7, %s5
  %v9 = vstv %s3
  %v10 = vunpack.i.l.bf16 %v9
  %v12 = vunpack.i.h.bf16 %v9
  loop: start=0, step=1, limit=6
  $region2: #{mnist_cnn_forward.7} parent=0 // loop_pre_header
    _
  $region3: #{mnist_cnn_forward.7} parent=0 // loop_header
    %s15 = sphi 0, %s19
    %p16 = scmp.ge.s32.totalorder %s15, 6
    %s25 = sphi 0, %s27
    %s28 = sphi 0, %s25
    %s29 = sphi 0, %s28
    %s45 = sphi 0, %s29
    %s49 = sphi 0, %s49
    %s51 = sphi 0, %s49
    %s52 = sphi 0, %s51
    %s66 = sphi 0, %s52
    %s70 = sphi 0, %s70
    %s72 = sphi 0, %s70
    %s73 = sphi 0, %s72
    %s87 = sphi 0, %s73
    %s93 = sphi 0, %s95
    %s96 = sphi 0, %s93
    %s97 = sphi 0, %s96
    %s113 = sphi 0, %s97
  $region4: #{mnist_cnn_forward.7} parent=0 // loop_header_branch
    %18 = sbr.rel (%p16) target = $region8
  $region5: #{mnist_cnn_forward.7} parent=0 // loop_body
    %s20 = ssub.s32 %s15, 1
    %s21 = ssub.s32 %s15, 2
    %s22 = sadd.s32 %s15, 1
    %s23 = ssub.s32 %s15, %s22
    %p24 = scmp.eq.s32.totalorder %s23, 0
    %s26 = sadd.s32 %s25, 1
    %s27 = scalar_select %p24, %s25, %s26
    %p30 = pneg %p24
    %p31 = scmp.eq.s32.totalorder %s15, 3
    %p32 = por %p30, %p31
    %p33 = scmp.ne.s32.totalorder %s25, %s28
    %p34 = scmp.eq.s32.totalorder %s15, 0
    %p35 = por %p33, %p34
    %p36 = scmp.ne.s32.totalorder %s25, %s28
    %p37 = scmp.eq.s32.totalorder %s20, 3
    %p38 = por %p36, %p37
    %p39 = scmp.ne.s32.totalorder %s28, %s29
    %p40 = scmp.eq.s32.totalorder %s20, 0
    %p41 = por %p39, %p40
    %p42 = scmp.ne.s32.totalorder %s28, %s29
    %p43 = scmp.eq.s32.totalorder %s21, 3
    %p44 = por %p42, %p43
    %p46 = scmp.ne.s32.totalorder %s29, %s45
    %p47 = scmp.eq.s32.totalorder %s21, 0
    %p48 = por %p46, %p47
    %s50 = sadd.s32 %s49, 1
    %p53 = scmp.eq.s32.totalorder %s15, 3
    %p54 = scmp.ne.s32.totalorder %s49, %s51
    %p55 = scmp.eq.s32.totalorder %s15, 0
    %p56 = por %p54, %p55
    %p57 = scmp.ne.s32.totalorder %s49, %s51
    %p58 = scmp.eq.s32.totalorder %s20, 3
    %p59 = por %p57, %p58
    %p60 = scmp.ne.s32.totalorder %s51, %s52
    %p61 = scmp.eq.s32.totalorder %s20, 0
    %p62 = por %p60, %p61
    %p63 = scmp.ne.s32.totalorder %s51, %s52
    %p64 = scmp.eq.s32.totalorder %s21, 3
    %p65 = por %p63, %p64
    %p67 = scmp.ne.s32.totalorder %s52, %s66
    %p68 = scmp.eq.s32.totalorder %s21, 0
    %p69 = por %p67, %p68
    %s71 = sadd.s32 %s70, 1
    %p74 = scmp.eq.s32.totalorder %s15, 3
    %p75 = scmp.ne.s32.totalorder %s70, %s72
    %p76 = scmp.eq.s32.totalorder %s15, 0
    %p77 = por %p75, %p76
    %p78 = scmp.ne.s32.totalorder %s70, %s72
    %p79 = scmp.eq.s32.totalorder %s20, 3
    %p80 = por %p78, %p79
    %p81 = scmp.ne.s32.totalorder %s72, %s73
    %p82 = scmp.eq.s32.totalorder %s20, 0
    %p83 = por %p81, %p82
    %p84 = scmp.ne.s32.totalorder %s72, %s73
    %p85 = scmp.eq.s32.totalorder %s21, 3
    %p86 = por %p84, %p85
    %p88 = scmp.ne.s32.totalorder %s73, %s87
    %p89 = scmp.eq.s32.totalorder %s21, 0
    %p90 = por %p88, %p89
    %s91 = ssub.s32 %s15, %s22
    %p92 = scmp.eq.s32.totalorder %s91, 0
    %s94 = sadd.s32 %s93, 1
    %s95 = scalar_select %p92, %s93, %s94
    %p98 = pneg %p92
    %p99 = scmp.eq.s32.totalorder %s15, 3
    %p100 = por %p98, %p99
    %p101 = scmp.ne.s32.totalorder %s93, %s96
    %p102 = scmp.eq.s32.totalorder %s15, 0
    %p103 = por %p101, %p102
    %p104 = scmp.ne.s32.totalorder %s93, %s96
    %p105 = scmp.eq.s32.totalorder %s20, 3
    %p106 = por %p104, %p105
    %p107 = scmp.ne.s32.totalorder %s96, %s97
    %p108 = scmp.eq.s32.totalorder %s20, 0
    %p109 = por %p107, %p108
    %p110 = scmp.ne.s32.totalorder %s96, %s97
    %p111 = scmp.eq.s32.totalorder %s21, 3
    %p112 = por %p110, %p111
    %p114 = scmp.ne.s32.totalorder %s97, %s113
    %p115 = scmp.eq.s32.totalorder %s21, 0
    %p116 = por %p114, %p115
    %p117 = scmp.le.s32.totalorder 1, %s15
    %p118 = scmp.lt.s32.totalorder %s15, 5
    %p119 = pnand %p117, %p118
    %p120 = pneg %p119
    // Predicated region
    $region9: #{mnist_cnn_forward.7} parent=5 // pred_check
      _
    $region10: #{mnist_cnn_forward.7} parent=5 // pred_check_branch
      %122 = sbr.rel (%p119) target = $region12
    $region11: #{mnist_cnn_forward.7} parent=5 // pred_region
      %s123 = ssub.s32 %s15, 1
      // Predicated region
      $region13: #{mnist_cnn_forward.7} parent=11 // pred_check
        %p124 = pneg %p62
      $region14: #{mnist_cnn_forward.7} parent=11 // pred_check_branch
        %126 = sbr.rel (%p124) target = $region16
      $region15: #{mnist_cnn_forward.7} parent=11 // pred_region
        _
      $region16: #{mnist_cnn_forward.7} parent=11 // pred_fallthru
        _
      // Predicated region
      $region17: #{mnist_cnn_forward.7} parent=11 // pred_check
        %p127 = pneg %p83
      $region18: #{mnist_cnn_forward.7} parent=11 // pred_check_branch
        %129 = sbr.rel (%p127) target = $region20
      $region19: #{mnist_cnn_forward.7} parent=11 // pred_region
        _
      $region20: #{mnist_cnn_forward.7} parent=11 // pred_fallthru
        _
    $region12: #{mnist_cnn_forward.7} parent=5 // pred_fallthru
      _
    %p130 = scmp.lt.s32.totalorder %s15, 4
    // Predicated region
    $region21: #{mnist_cnn_forward.7} parent=5 // pred_check
      %p131 = pneg %p130
    $region22: #{mnist_cnn_forward.7} parent=5 // pred_check_branch
      %133 = sbr.rel (%p131) target = $region24
    $region23: #{mnist_cnn_forward.7} parent=5 // pred_region
      // Predicated region
      $region25: #{mnist_cnn_forward.7} parent=23 // pred_check
        %p134 = pneg %p35
      $region26: #{mnist_cnn_forward.7} parent=23 // pred_check_branch
        %136 = sbr.rel (%p134) target = $region28
      $region27: #{mnist_cnn_forward.7} parent=23 // pred_region
        %s137 = smul.u32 4, %s15
        %s138 = ssub.s32 13, %s137
        %p139 = scmp.lt.s32.totalorder %s138, 4
        %s140 = scalar_select %p139, %s138, 4
        %s141 = smul.u32 256, %s140
        %s142 = smul.u32 %s141, 2
        %p143 = scmp.lt.s32.totalorder %s137, 12
        %s144 = scalar_select %p143, %s137, 12
        %s145 = smul.addr %s144, 2
        %s146 = smul.addr %s145, 4
        %s147 = scalar_lea.vmem %s2, %s146
        %s148 = smul.u32 4, %s15
        %s149 = ssub.s32 13, %s148
        %p150 = scmp.lt.s32.totalorder %s149, 4
        %s151 = scalar_select %p150, %s149, 4
        %s152 = smul.u32 256, %s151
        %s153 = smul.u32 %s152, 2
      $region28: #{mnist_cnn_forward.7} parent=23 // pred_fallthru
        _
    $region24: #{mnist_cnn_forward.7} parent=5 // pred_fallthru
      _
    %p154 = scmp.le.s32.totalorder 1, %s15
    %p155 = scmp.lt.s32.totalorder %s15, 5
    %p156 = pnand %p154, %p155
    %p157 = pneg %p156
    // Predicated region
    $region29: #{mnist_cnn_forward.7} parent=5 // pred_check
      _
    $region30: #{mnist_cnn_forward.7} parent=5 // pred_check_branch
      %159 = sbr.rel (%p156) target = $region32
    $region31: #{mnist_cnn_forward.7} parent=5 // pred_region
      #allocation7 [shape = 'u8[65536]{0}', space=vmem, size = 0x10000, dematerialized = true, scoped, tag = 'FusionAdapter Buffer %fusion.3 = bf16[4,128,144]{2,1,0:T(8,128)(2,1)} fusion(%param_2.3, %param_3.1), kind=kLoop, calls=%fused_computation.3.clone, metadata={op_name="jit(mnist_cnn_forward)/jit(_pad)/pad" stack_frame_id=37}']
      %s160 = ssub.s32 %s15, 1
      %s161 = smul.u32 4, %s20
      %s162 = ssub.s32 13, %s161
      %p163 = scmp.lt.s32.totalorder %s162, 4
      %s164 = scalar_select %p163, %s162, 4
      %s165 = smul.u32 256, %s164
      %s166 = smul.u32 %s165, 2
      %p167 = scmp.lt.s32.totalorder %s161, 12
      %s168 = scalar_select %p167, %s161, 12
      %s169 = smul.addr %s168, 2
      %s170 = smul.addr %s169, 4
      %s171 = scalar_lea.vmem %s2, %s170
      %p172 = pneg %p41
      %p173 = pneg %p38
      %p174 = pneg %p62
      %p175 = pneg %p59
      %p176 = pneg %p83
      %p177 = pneg %p80
      %p178 = pneg %p109
      %p179 = pneg %p106
      %s180 = smul.u32 4, %s20
      %p181 = scmp.lt.s32.totalorder %s180, 15
      %s182 = scalar_select %p181, %s180, 15
      %s183 = smul.addr %s182, 8
      %s184 = scalar_lea.vmem %s4, %s183
      %s185 = smul.u32 4, %s20
      %s186 = ssub.s32 13, %s185
      %p187 = scmp.lt.s32.totalorder %s186, 4
      %s188 = scalar_select %p187, %s186, 4
      %s189 = smul.u32 256, %s188
      %s190 = smul.u32 %s189, 2
      %p191 = scmp.lt.s32.totalorder %s185, 12
      %s192 = scalar_select %p191, %s185, 12
      %s193 = smul.addr %s192, 2
      %s194 = smul.addr %s193, 4
      %s195 = scalar_lea.vmem %s2, %s194
      %s196 = smul.u32 4, %s20
      %s197 = ssub.s32 13, %s196
      %p198 = scmp.lt.s32.totalorder %s197, 4
      %s199 = scalar_select %p198, %s197, 4
      %s200 = smul.u32 256, %s199
      %s201 = smul.u32 %s200, 2
      %s202 = smul.u32 4, %s20
      %p203 = scmp.lt.s32.totalorder %s202, 15
      %s204 = scalar_select %p203, %s202, 15
      %s205 = smul.addr %s204, 8
      %s206 = scalar_lea.vmem %s4, %s205
      %s207 = smul.u32 4, %s20
      %s208 = ssub.s32 12, %s196
      %p209 = scmp.lt.s32.totalorder %s208, 0
      %s210 = scalar_select %p209, 0, 255
      %s211 = sshrl.u32 %s210, 1
      %s212 = sor.u32 %s210, %s211
      %s213 = sand.u32 %s212, 85
      %s214 = sshrl.u32 %s213, 1
      %s215 = sor.u32 %s213, %s214
      %s216 = sand.u32 51, %s215
      %s217 = sshrl.u32 %s216, 2
      %s218 = sor.u32 %s216, %s217
      %s219 = sand.u32 15, %s218
      %v220 = vld [vmem:[%s195] sm:%s219]
      %v221 = vunpack.c.l.bf16 %v220
      %v222 = vunpack.c.h.bf16 %v220
      %s223 = ssub.s32 12, %s196
      %v224 = vstv %s223
      %vm225 = vcmp.lt.s32.totalorder %v224, 0
      %v226 = vsel %vm225, %v10, %v221
      %s227 = smul.addr %s196, 8
      %v228 = vlaneseq
      %v229 = vshrl.u32 %v228, 7
      %v230 = vstv %s227
      %v231 = vadd.s32 %v229, %v230
      %vm232 = vcmp.lt.s32.totalorder %v231, 98
      %v233 = vsel %vm232, %v226, %v10
      %v234 = vlaneseq
      %v235 = vand.u32 %v234, 127
      %vm237 = vcmp.lt.s32.totalorder %v235, 144
      %v238 = vsel %vm237, %v233, %v10
      %v239 = vpack.c.bf16 0.0, %v238
      %241 = vst [vmem:[#allocation7] sm:$0xf] %v239
      %s242 = scalar_lea.vmem %s195, 4
      %s243 = ssub.s32 12, %s196
      %p244 = scmp.lt.s32.totalorder %s243, 0
      %s245 = scalar_select %p244, 0, 255
      %s246 = sshrl.u32 %s245, 1
      %s247 = sor.u32 %s245, %s246
      %s248 = sand.u32 %s247, 85
      %s249 = sshrl.u32 %s248, 1
      %s250 = sor.u32 %s248, %s249
      %s251 = sand.u32 51, %s250
      %s252 = sshrl.u32 %s251, 2
      %s253 = sor.u32 %s251, %s252
      %s254 = sand.u32 15, %s253
      %v255 = vld [vmem:[%s242] sm:%s254]
      %v256 = vunpack.c.l.bf16 %v255
      %v257 = vunpack.c.h.bf16 %v255
      %s258 = ssub.s32 12, %s196
      %v259 = vstv %s258
      %vm260 = vcmp.lt.s32.totalorder %v259, 0
      %v261 = vsel %vm260, %v10, %v256
      %s262 = smul.addr %s196, 8
      %v263 = vlaneseq
      %v264 = vshrl.u32 %v263, 7
      %v265 = vstv %s262
      %v266 = vadd.s32 %v264, %v265
      %vm267 = vcmp.lt.s32.totalorder %v266, 98
      %v268 = vsel %vm267, %v261, %v10
      %v269 = vlaneseq
      %v270 = vand.u32 %v269, 127
      %v271 = vadd.s32 %v270, 128
      %vm272 = vcmp.lt.s32.totalorder %v271, 144
      %v273 = vsel %vm272, %v268, %v10
      %s274 = scalar_lea.vmem [#allocation7], 4
      %v275 = vpack.c.bf16 0.0, %v273
      %277 = vst [vmem:[%s274] sm:$0xf] %v275
      %s278 = scalar_lea.vmem %s195, 8
      %s279 = sadd.s32 %s196, 1
      %s280 = ssub.s32 12, %s279
      %p281 = scmp.lt.s32.totalorder %s280, 0
      %s282 = scalar_select %p281, 0, 255
      %s283 = sshrl.u32 %s282, 1
      %s284 = sor.u32 %s282, %s283
      %s285 = sand.u32 %s284, 85
      %s286 = sshrl.u32 %s285, 1
      %s287 = sor.u32 %s285, %s286
      %s288 = sand.u32 51, %s287
      %s289 = sshrl.u32 %s288, 2
      %s290 = sor.u32 %s288, %s289
      %s291 = sand.u32 15, %s290
      %v292 = vld [vmem:[%s278] sm:%s291]
      %v293 = vunpack.c.l.bf16 %v292
      %v294 = vunpack.c.h.bf16 %v292
      %s295 = sadd.s32 %s196, 1
      %s296 = ssub.s32 12, %s295
      %v297 = vstv %s296
      %vm298 = vcmp.lt.s32.totalorder %v297, 0
      %v299 = vsel %vm298, %v10, %v293
      %s300 = sadd.s32 %s196, 1
      %s301 = smul.addr %s300, 8
      %v302 = vlaneseq
      %v303 = vshrl.u32 %v302, 7
      %v304 = vstv %s301
      %v305 = vadd.s32 %v303, %v304
      %vm306 = vcmp.lt.s32.totalorder %v305, 98
      %v307 = vsel %vm306, %v299, %v10
      %v308 = vlaneseq
      %v309 = vand.u32 %v308, 127
      %vm311 = vcmp.lt.s32.totalorder %v309, 144
      %v312 = vsel %vm311, %v307, %v10
      %s313 = scalar_lea.vmem [#allocation7], 8
      %v314 = vpack.c.bf16 0.0, %v312
      %316 = vst [vmem:[%s313] sm:$0xf] %v314
      %s317 = scalar_lea.vmem %s195, 12
      %s318 = sadd.s32 %s196, 1
      %s319 = ssub.s32 12, %s318
      %p320 = scmp.lt.s32.totalorder %s319, 0
      %s321 = scalar_select %p320, 0, 255
      %s322 = sshrl.u32 %s321, 1
      %s323 = sor.u32 %s321, %s322
      %s324 = sand.u32 %s323, 85
      %s325 = sshrl.u32 %s324, 1
      %s326 = sor.u32 %s324, %s325
      %s327 = sand.u32 51, %s326
      %s328 = sshrl.u32 %s327, 2
      %s329 = sor.u32 %s327, %s328
      %s330 = sand.u32 15, %s329
      %v331 = vld [vmem:[%s317] sm:%s330]
      %v332 = vunpack.c.l.bf16 %v331
      %v333 = vunpack.c.h.bf16 %v331
      %s334 = sadd.s32 %s196, 1
      %s335 = ssub.s32 12, %s334
      %v336 = vstv %s335
      %vm337 = vcmp.lt.s32.totalorder %v336, 0
      %v338 = vsel %vm337, %v10, %v332
      %s339 = sadd.s32 %s196, 1
      %s340 = smul.addr %s339, 8
      %v341 = vlaneseq
      %v342 = vshrl.u32 %v341, 7
      %v343 = vstv %s340
      %v344 = vadd.s32 %v342, %v343
      %vm345 = vcmp.lt.s32.totalorder %v344, 98
      %v346 = vsel %vm345, %v338, %v10
      %v347 = vlaneseq
      %v348 = vand.u32 %v347, 127
      %v349 = vadd.s32 %v348, 128
      %vm350 = vcmp.lt.s32.totalorder %v349, 144
      %v351 = vsel %vm350, %v346, %v10
      %s352 = scalar_lea.vmem [#allocation7], 12
      %v353 = vpack.c.bf16 0.0, %v351
      %355 = vst [vmem:[%s352] sm:$0xf] %v353
      %s356 = scalar_lea.vmem %s195, 16
      %s357 = sadd.s32 %s196, 2
      %s358 = ssub.s32 12, %s357
      %p359 = scmp.lt.s32.totalorder %s358, 0
      %s360 = scalar_select %p359, 0, 255
      %s361 = sshrl.u32 %s360, 1
      %s362 = sor.u32 %s360, %s361
      %s363 = sand.u32 %s362, 85
      %s364 = sshrl.u32 %s363, 1
      %s365 = sor.u32 %s363, %s364
      %s366 = sand.u32 51, %s365
      %s367 = sshrl.u32 %s366, 2
      %s368 = sor.u32 %s366, %s367
      %s369 = sand.u32 15, %s368
      %v370 = vld [vmem:[%s356] sm:%s369]
      %v371 = vunpack.c.l.bf16 %v370
      %v372 = vunpack.c.h.bf16 %v370
      %s373 = sadd.s32 %s196, 2
      %s374 = ssub.s32 12, %s373
      %v375 = vstv %s374
      %vm376 = vcmp.lt.s32.totalorder %v375, 0
      %v377 = vsel %vm376, %v10, %v371
      %s378 = sadd.s32 %s196, 2
      %s379 = smul.addr %s378, 8
      %v380 = vlaneseq
      %v381 = vshrl.u32 %v380, 7
      %v382 = vstv %s379
      %v383 = vadd.s32 %v381, %v382
      %vm384 = vcmp.lt.s32.totalorder %v383, 98
      %v385 = vsel %vm384, %v377, %v10
      %v386 = vlaneseq
      %v387 = vand.u32 %v386, 127
      %vm389 = vcmp.lt.s32.totalorder %v387, 144
      %v390 = vsel %vm389, %v385, %v10
      %s391 = scalar_lea.vmem [#allocation7], 16
      %v392 = vpack.c.bf16 0.0, %v390
      %394 = vst [vmem:[%s391] sm:$0xf] %v392
      %s395 = scalar_lea.vmem %s195, 20
      %s396 = sadd.s32 %s196, 2
      %s397 = ssub.s32 12, %s396
      %p398 = scmp.lt.s32.totalorder %s397, 0
      %s399 = scalar_select %p398, 0, 255
      %s400 = sshrl.u32 %s399, 1
      %s401 = sor.u32 %s399, %s400
      %s402 = sand.u32 %s401, 85
      %s403 = sshrl.u32 %s402, 1
      %s404 = sor.u32 %s402, %s403
      %s405 = sand.u32 51, %s404
      %s406 = sshrl.u32 %s405, 2
      %s407 = sor.u32 %s405, %s406
      %s408 = sand.u32 15, %s407
      %v409 = vld [vmem:[%s395] sm:%s408]
      %v410 = vunpack.c.l.bf16 %v409
      %v411 = vunpack.c.h.bf16 %v409
      %s412 = sadd.s32 %s196, 2
      %s413 = ssub.s32 12, %s412
      %v414 = vstv %s413
      %vm415 = vcmp.lt.s32.totalorder %v414, 0
      %v416 = vsel %vm415, %v10, %v410
      %s417 = sadd.s32 %s196, 2
      %s418 = smul.addr %s417, 8
      %v419 = vlaneseq
      %v420 = vshrl.u32 %v419, 7
      %v421 = vstv %s418
      %v422 = vadd.s32 %v420, %v421
      %vm423 = vcmp.lt.s32.totalorder %v422, 98
      %v424 = vsel %vm423, %v416, %v10
      %v425 = vlaneseq
      %v426 = vand.u32 %v425, 127
      %v427 = vadd.s32 %v426, 128
      %vm428 = vcmp.lt.s32.totalorder %v427, 144
      %v429 = vsel %vm428, %v424, %v10
      %s430 = scalar_lea.vmem [#allocation7], 20
      %v431 = vpack.c.bf16 0.0, %v429
      %433 = vst [vmem:[%s430] sm:$0xf] %v431
      %s434 = scalar_lea.vmem %s195, 24
      %s435 = sadd.s32 %s196, 3
      %s436 = ssub.s32 12, %s435
      %p437 = scmp.lt.s32.totalorder %s436, 0
      %s438 = scalar_select %p437, 0, 255
      %s439 = sshrl.u32 %s438, 1
      %s440 = sor.u32 %s438, %s439
      %s441 = sand.u32 %s440, 85
      %s442 = sshrl.u32 %s441, 1
      %s443 = sor.u32 %s441, %s442
      %s444 = sand.u32 51, %s443
      %s445 = sshrl.u32 %s444, 2
      %s446 = sor.u32 %s444, %s445
      %s447 = sand.u32 15, %s446
      %v448 = vld [vmem:[%s434] sm:%s447]
      %v449 = vunpack.c.l.bf16 %v448
      %v450 = vunpack.c.h.bf16 %v448
      %s451 = sadd.s32 %s196, 3
      %s452 = ssub.s32 12, %s451
      %v453 = vstv %s452
      %vm454 = vcmp.lt.s32.totalorder %v453, 0
      %v455 = vsel %vm454, %v10, %v449
      %s456 = sadd.s32 %s196, 3
      %s457 = smul.addr %s456, 8
      %v458 = vlaneseq
      %v459 = vshrl.u32 %v458, 7
      %v460 = vstv %s457
      %v461 = vadd.s32 %v459, %v460
      %vm462 = vcmp.lt.s32.totalorder %v461, 98
      %v463 = vsel %vm462, %v455, %v10
      %v464 = vlaneseq
      %v465 = vand.u32 %v464, 127
      %vm467 = vcmp.lt.s32.totalorder %v465, 144
      %v468 = vsel %vm467, %v463, %v10
      %s469 = scalar_lea.vmem [#allocation7], 24
      %v470 = vpack.c.bf16 0.0, %v468
      %472 = vst [vmem:[%s469] sm:$0xf] %v470
      %s473 = scalar_lea.vmem %s195, 28
      %s474 = sadd.s32 %s196, 3
      %s475 = ssub.s32 12, %s474
      %p476 = scmp.lt.s32.totalorder %s475, 0
      %s477 = scalar_select %p476, 0, 255
      %s478 = sshrl.u32 %s477, 1
      %s479 = sor.u32 %s477, %s478
      %s480 = sand.u32 %s479, 85
      %s481 = sshrl.u32 %s480, 1
      %s482 = sor.u32 %s480, %s481
      %s483 = sand.u32 51, %s482
      %s484 = sshrl.u32 %s483, 2
      %s485 = sor.u32 %s483, %s484
      %s486 = sand.u32 15, %s485
      %v487 = vld [vmem:[%s473] sm:%s486]
      %v488 = vunpack.c.l.bf16 %v487
      %v489 = vunpack.c.h.bf16 %v487
      %s490 = sadd.s32 %s196, 3
      %s491 = ssub.s32 12, %s490
      %v492 = vstv %s491
      %vm493 = vcmp.lt.s32.totalorder %v492, 0
      %v494 = vsel %vm493, %v10, %v488
      %s495 = sadd.s32 %s196, 3
      %s496 = smul.addr %s495, 8
      %v497 = vlaneseq
      %v498 = vshrl.u32 %v497, 7
      %v499 = vstv %s496
      %v500 = vadd.s32 %v498, %v499
      %vm501 = vcmp.lt.s32.totalorder %v500, 98
      %v502 = vsel %vm501, %v494, %v10
      %v503 = vlaneseq
      %v504 = vand.u32 %v503, 127
      %v505 = vadd.s32 %v504, 128
      %vm506 = vcmp.lt.s32.totalorder %v505, 144
      %v507 = vsel %vm506, %v502, %v10
      %s508 = scalar_lea.vmem [#allocation7], 28
      %v509 = vpack.c.bf16 0.0, %v507
      %511 = vst [vmem:[%s508] sm:$0xf] %v509
      %s512 = scalar_lea.vmem %s195, 104
      %s513 = ssub.s32 12, %s196
      %p514 = scmp.lt.s32.totalorder %s513, 0
      %s515 = scalar_select %p514, 0, 255
      %s516 = sshrl.u32 %s515, 1
      %s517 = sor.u32 %s515, %s516
      %s518 = sand.u32 %s517, 85
      %s519 = sshrl.u32 %s518, 1
      %s520 = sor.u32 %s518, %s519
      %s521 = sand.u32 51, %s520
      %s522 = sshrl.u32 %s521, 2
      %s523 = sor.u32 %s521, %s522
      %s524 = sand.u32 15, %s523
      %v525 = vld [vmem:[%s512] sm:%s524]
      %v526 = vunpack.c.l.bf16 %v525
      %v527 = vunpack.c.h.bf16 %v525
      %s528 = ssub.s32 12, %s196
      %v529 = vstv %s528
      %vm530 = vcmp.lt.s32.totalorder %v529, 0
      %v531 = vsel %vm530, %v10, %v526
      %s532 = smul.addr %s196, 8
      %v533 = vlaneseq
      %v534 = vshrl.u32 %v533, 7
      %v535 = vstv %s532
      %v536 = vadd.s32 %v534, %v535
      %vm537 = vcmp.lt.s32.totalorder %v536, 98
      %v538 = vsel %vm537, %v531, %v10
      %v539 = vlaneseq
      %v540 = vand.u32 %v539, 127
      %vm542 = vcmp.lt.s32.totalorder %v540, 144
      %v543 = vsel %vm542, %v538, %v10
      %s544 = scalar_lea.vmem [#allocation7], 32
      %v545 = vpack.c.bf16 0.0, %v543
      %547 = vst [vmem:[%s544] sm:$0xf] %v545
      %s548 = scalar_lea.vmem %s195, 108
      %s549 = ssub.s32 12, %s196
      %p550 = scmp.lt.s32.totalorder %s549, 0
      %s551 = scalar_select %p550, 0, 255
      %s552 = sshrl.u32 %s551, 1
      %s553 = sor.u32 %s551, %s552
      %s554 = sand.u32 %s553, 85
      %s555 = sshrl.u32 %s554, 1
      %s556 = sor.u32 %s554, %s555
      %s557 = sand.u32 51, %s556
      %s558 = sshrl.u32 %s557, 2
      %s559 = sor.u32 %s557, %s558
      %s560 = sand.u32 15, %s559
      %v561 = vld [vmem:[%s548] sm:%s560]
      %v562 = vunpack.c.l.bf16 %v561
      %v563 = vunpack.c.h.bf16 %v561
      %s564 = ssub.s32 12, %s196
      %v565 = vstv %s564
      %vm566 = vcmp.lt.s32.totalorder %v565, 0
      %v567 = vsel %vm566, %v10, %v562
      %s568 = smul.addr %s196, 8
      %v569 = vlaneseq
      %v570 = vshrl.u32 %v569, 7
      %v571 = vstv %s568
      %v572 = vadd.s32 %v570, %v571
      %vm573 = vcmp.lt.s32.totalorder %v572, 98
      %v574 = vsel %vm573, %v567, %v10
      %v575 = vlaneseq
      %v576 = vand.u32 %v575, 127
      %v577 = vadd.s32 %v576, 128
      %vm578 = vcmp.lt.s32.totalorder %v577, 144
      %v579 = vsel %vm578, %v574, %v10
      %s580 = scalar_lea.vmem [#allocation7], 36
      %v581 = vpack.c.bf16 0.0, %v579
      %583 = vst [vmem:[%s580] sm:$0xf] %v581
      %s584 = scalar_lea.vmem %s195, 112
      %s585 = sadd.s32 %s196, 1
      %s586 = ssub.s32 12, %s585
      %p587 = scmp.lt.s32.totalorder %s586, 0
      %s588 = scalar_select %p587, 0, 255
      %s589 = sshrl.u32 %s588, 1
      %s590 = sor.u32 %s588, %s589
      %s591 = sand.u32 %s590, 85
      %s592 = sshrl.u32 %s591, 1
      %s593 = sor.u32 %s591, %s592
      %s594 = sand.u32 51, %s593
      %s595 = sshrl.u32 %s594, 2
      %s596 = sor.u32 %s594, %s595
      %s597 = sand.u32 15, %s596
      %v598 = vld [vmem:[%s584] sm:%s597]
      %v599 = vunpack.c.l.bf16 %v598
      %v600 = vunpack.c.h.bf16 %v598
      %s601 = sadd.s32 %s196, 1
      %s602 = ssub.s32 12, %s601
      %v603 = vstv %s602
      %vm604 = vcmp.lt.s32.totalorder %v603, 0
      %v605 = vsel %vm604, %v10, %v599
      %s606 = sadd.s32 %s196, 1
      %s607 = smul.addr %s606, 8
      %v608 = vlaneseq
      %v609 = vshrl.u32 %v608, 7
      %v610 = vstv %s607
      %v611 = vadd.s32 %v609, %v610
      %vm612 = vcmp.lt.s32.totalorder %v611, 98
      %v613 = vsel %vm612, %v605, %v10
      %v614 = vlaneseq
      %v615 = vand.u32 %v614, 127
      %vm617 = vcmp.lt.s32.totalorder %v615, 144
      %v618 = vsel %vm617, %v613, %v10
      %s619 = scalar_lea.vmem [#allocation7], 40
      %v620 = vpack.c.bf16 0.0, %v618
      %622 = vst [vmem:[%s619] sm:$0xf] %v620
      %s623 = scalar_lea.vmem %s195, 116
      %s624 = sadd.s32 %s196, 1
      %s625 = ssub.s32 12, %s624
      %p626 = scmp.lt.s32.totalorder %s625, 0
      %s627 = scalar_select %p626, 0, 255
      %s628 = sshrl.u32 %s627, 1
      %s629 = sor.u32 %s627, %s628
      %s630 = sand.u32 %s629, 85
      %s631 = sshrl.u32 %s630, 1
      %s632 = sor.u32 %s630, %s631
      %s633 = sand.u32 51, %s632
      %s634 = sshrl.u32 %s633, 2
      %s635 = sor.u32 %s633, %s634
      %s636 = sand.u32 15, %s635
      %v637 = vld [vmem:[%s623] sm:%s636]
      %v638 = vunpack.c.l.bf16 %v637
      %v639 = vunpack.c.h.bf16 %v637
      %s640 = sadd.s32 %s196, 1
      %s641 = ssub.s32 12, %s640
      %v642 = vstv %s641
      %vm643 = vcmp.lt.s32.totalorder %v642, 0
      %v644 = vsel %vm643, %v10, %v638
      %s645 = sadd.s32 %s196, 1
      %s646 = smul.addr %s645, 8
      %v647 = vlaneseq
      %v648 = vshrl.u32 %v647, 7
      %v649 = vstv %s646
      %v650 = vadd.s32 %v648, %v649
      %vm651 = vcmp.lt.s32.totalorder %v650, 98
      %v652 = vsel %vm651, %v644, %v10
      %v653 = vlaneseq
      %v654 = vand.u32 %v653, 127
      %v655 = vadd.s32 %v654, 128
      %vm656 = vcmp.lt.s32.totalorder %v655, 144
      %v657 = vsel %vm656, %v652, %v10
      %s658 = scalar_lea.vmem [#allocation7], 44
      %v659 = vpack.c.bf16 0.0, %v657
      %661 = vst [vmem:[%s658] sm:$0xf] %v659
      %s662 = scalar_lea.vmem %s195, 120
      %s663 = sadd.s32 %s196, 2
      %s664 = ssub.s32 12, %s663
      %p665 = scmp.lt.s32.totalorder %s664, 0
      %s666 = scalar_select %p665, 0, 255
      %s667 = sshrl.u32 %s666, 1
      %s668 = sor.u32 %s666, %s667
      %s669 = sand.u32 %s668, 85
      %s670 = sshrl.u32 %s669, 1
      %s671 = sor.u32 %s669, %s670
      %s672 = sand.u32 51, %s671
      %s673 = sshrl.u32 %s672, 2
      %s674 = sor.u32 %s672, %s673
      %s675 = sand.u32 15, %s674
      %v676 = vld [vmem:[%s662] sm:%s675]
      %v677 = vunpack.c.l.bf16 %v676
      %v678 = vunpack.c.h.bf16 %v676
      %s679 = sadd.s32 %s196, 2
      %s680 = ssub.s32 12, %s679
      %v681 = vstv %s680
      %vm682 = vcmp.lt.s32.totalorder %v681, 0
      %v683 = vsel %vm682, %v10, %v677
      %s684 = sadd.s32 %s196, 2
      %s685 = smul.addr %s684, 8
      %v686 = vlaneseq
      %v687 = vshrl.u32 %v686, 7
      %v688 = vstv %s685
      %v689 = vadd.s32 %v687, %v688
      %vm690 = vcmp.lt.s32.totalorder %v689, 98
      %v691 = vsel %vm690, %v683, %v10
      %v692 = vlaneseq
      %v693 = vand.u32 %v692, 127
      %vm695 = vcmp.lt.s32.totalorder %v693, 144
      %v696 = vsel %vm695, %v691, %v10
      %s697 = scalar_lea.vmem [#allocation7], 48
      %v698 = vpack.c.bf16 0.0, %v696
      %700 = vst [vmem:[%s697] sm:$0xf] %v698
      %s701 = scalar_lea.vmem %s195, 124
      %s702 = sadd.s32 %s196, 2
      %s703 = ssub.s32 12, %s702
      %p704 = scmp.lt.s32.totalorder %s703, 0
      %s705 = scalar_select %p704, 0, 255
      %s706 = sshrl.u32 %s705, 1
      %s707 = sor.u32 %s705, %s706
      %s708 = sand.u32 %s707, 85
      %s709 = sshrl.u32 %s708, 1
      %s710 = sor.u32 %s708, %s709
      %s711 = sand.u32 51, %s710
      %s712 = sshrl.u32 %s711, 2
      %s713 = sor.u32 %s711, %s712
      %s714 = sand.u32 15, %s713
      %v715 = vld [vmem:[%s701] sm:%s714]
      %v716 = vunpack.c.l.bf16 %v715
      %v717 = vunpack.c.h.bf16 %v715
      %s718 = sadd.s32 %s196, 2
      %s719 = ssub.s32 12, %s718
      %v720 = vstv %s719
      %vm721 = vcmp.lt.s32.totalorder %v720, 0
      %v722 = vsel %vm721, %v10, %v716
      %s723 = sadd.s32 %s196, 2
      %s724 = smul.addr %s723, 8
      %v725 = vlaneseq
      %v726 = vshrl.u32 %v725, 7
      %v727 = vstv %s724
      %v728 = vadd.s32 %v726, %v727
      %vm729 = vcmp.lt.s32.totalorder %v728, 98
      %v730 = vsel %vm729, %v722, %v10
      %v731 = vlaneseq
      %v732 = vand.u32 %v731, 127
      %v733 = vadd.s32 %v732, 128
      %vm734 = vcmp.lt.s32.totalorder %v733, 144
      %v735 = vsel %vm734, %v730, %v10
      %s736 = scalar_lea.vmem [#allocation7], 52
      %v737 = vpack.c.bf16 0.0, %v735
      %739 = vst [vmem:[%s736] sm:$0xf] %v737
      %s740 = scalar_lea.vmem %s195, 128
      %s741 = sadd.s32 %s196, 3
      %s742 = ssub.s32 12, %s741
      %p743 = scmp.lt.s32.totalorder %s742, 0
      %s744 = scalar_select %p743, 0, 255
      %s745 = sshrl.u32 %s744, 1
      %s746 = sor.u32 %s744, %s745
      %s747 = sand.u32 %s746, 85
      %s748 = sshrl.u32 %s747, 1
      %s749 = sor.u32 %s747, %s748
      %s750 = sand.u32 51, %s749
      %s751 = sshrl.u32 %s750, 2
      %s752 = sor.u32 %s750, %s751
      %s753 = sand.u32 15, %s752
      %v754 = vld [vmem:[%s740] sm:%s753]
      %v755 = vunpack.c.l.bf16 %v754
      %v756 = vunpack.c.h.bf16 %v754
      %s757 = sadd.s32 %s196, 3
      %s758 = ssub.s32 12, %s757
      %v759 = vstv %s758
      %vm760 = vcmp.lt.s32.totalorder %v759, 0
      %v761 = vsel %vm760, %v10, %v755
      %s762 = sadd.s32 %s196, 3
      %s763 = smul.addr %s762, 8
      %v764 = vlaneseq
      %v765 = vshrl.u32 %v764, 7
      %v766 = vstv %s763
      %v767 = vadd.s32 %v765, %v766
      %vm768 = vcmp.lt.s32.totalorder %v767, 98
      %v769 = vsel %vm768, %v761, %v10
      %v770 = vlaneseq
      %v771 = vand.u32 %v770, 127
      %vm773 = vcmp.lt.s32.totalorder %v771, 144
      %v774 = vsel %vm773, %v769, %v10
      %s775 = scalar_lea.vmem [#allocation7], 56
      %v776 = vpack.c.bf16 0.0, %v774
      %778 = vst [vmem:[%s775] sm:$0xf] %v776
      %s779 = scalar_lea.vmem %s195, 132
      %s780 = sadd.s32 %s196, 3
      %s781 = ssub.s32 12, %s780
      %p782 = scmp.lt.s32.totalorder %s781, 0
      %s783 = scalar_select %p782, 0, 255
      %s784 = sshrl.u32 %s783, 1
      %s785 = sor.u32 %s783, %s784
      %s786 = sand.u32 %s785, 85
      %s787 = sshrl.u32 %s786, 1
      %s788 = sor.u32 %s786, %s787
      %s789 = sand.u32 51, %s788
      %s790 = sshrl.u32 %s789, 2
      %s791 = sor.u32 %s789, %s790
      %s792 = sand.u32 15, %s791
      %v793 = vld [vmem:[%s779] sm:%s792]
      %v794 = vunpack.c.l.bf16 %v793
      %v795 = vunpack.c.h.bf16 %v793
      %s796 = sadd.s32 %s196, 3
      %s797 = ssub.s32 12, %s796
      %v798 = vstv %s797
      %vm799 = vcmp.lt.s32.totalorder %v798, 0
      %v800 = vsel %vm799, %v10, %v794
      %s801 = sadd.s32 %s196, 3
      %s802 = smul.addr %s801, 8
      %v803 = vlaneseq
      %v804 = vshrl.u32 %v803, 7
      %v805 = vstv %s802
      %v806 = vadd.s32 %v804, %v805
      %vm807 = vcmp.lt.s32.totalorder %v806, 98
      %v808 = vsel %vm807, %v800, %v10
      %v809 = vlaneseq
      %v810 = vand.u32 %v809, 127
      %v811 = vadd.s32 %v810, 128
      %vm812 = vcmp.lt.s32.totalorder %v811, 144
      %v813 = vsel %vm812, %v808, %v10
      %s814 = scalar_lea.vmem [#allocation7], 60
      %v815 = vpack.c.bf16 0.0, %v813
      %817 = vst [vmem:[%s814] sm:$0xf] %v815
      %s818 = scalar_lea.vmem %s195, 208
      %s819 = ssub.s32 12, %s196
      %p820 = scmp.lt.s32.totalorder %s819, 0
      %s821 = scalar_select %p820, 0, 255
      %s822 = sshrl.u32 %s821, 1
      %s823 = sor.u32 %s821, %s822
      %s824 = sand.u32 %s823, 85
      %s825 = sshrl.u32 %s824, 1
      %s826 = sor.u32 %s824, %s825
      %s827 = sand.u32 51, %s826
      %s828 = sshrl.u32 %s827, 2
      %s829 = sor.u32 %s827, %s828
      %s830 = sand.u32 15, %s829
      %v831 = vld [vmem:[%s818] sm:%s830]
      %v832 = vunpack.c.l.bf16 %v831
      %v833 = vunpack.c.h.bf16 %v831
      %s834 = ssub.s32 12, %s196
      %v835 = vstv %s834
      %vm836 = vcmp.lt.s32.totalorder %v835, 0
      %v837 = vsel %vm836, %v10, %v832
      %s838 = smul.addr %s196, 8
      %v839 = vlaneseq
      %v840 = vshrl.u32 %v839, 7
      %v841 = vstv %s838
      %v842 = vadd.s32 %v840, %v841
      %vm843 = vcmp.lt.s32.totalorder %v842, 98
      %v844 = vsel %vm843, %v837, %v10
      %v845 = vlaneseq
      %v846 = vand.u32 %v845, 127
      %vm848 = vcmp.lt.s32.totalorder %v846, 144
      %v849 = vsel %vm848, %v844, %v10
      %s850 = scalar_lea.vmem [#allocation7], 64
      %v851 = vpack.c.bf16 0.0, %v849
      %853 = vst [vmem:[%s850] sm:$0xf] %v851
      %s854 = scalar_lea.vmem %s195, 212
      %s855 = ssub.s32 12, %s196
      %p856 = scmp.lt.s32.totalorder %s855, 0
      %s857 = scalar_select %p856, 0, 255
      %s858 = sshrl.u32 %s857, 1
      %s859 = sor.u32 %s857, %s858
      %s860 = sand.u32 %s859, 85
      %s861 = sshrl.u32 %s860, 1
      %s862 = sor.u32 %s860, %s861
      %s863 = sand.u32 51, %s862
      %s864 = sshrl.u32 %s863, 2
      %s865 = sor.u32 %s863, %s864
      %s866 = sand.u32 15, %s865
      %v867 = vld [vmem:[%s854] sm:%s866]
      %v868 = vunpack.c.l.bf16 %v867
      %v869 = vunpack.c.h.bf16 %v867
      %s870 = ssub.s32 12, %s196
      %v871 = vstv %s870
      %vm872 = vcmp.lt.s32.totalorder %v871, 0
      %v873 = vsel %vm872, %v10, %v868
      %s874 = smul.addr %s196, 8
      %v875 = vlaneseq
      %v876 = vshrl.u32 %v875, 7
      %v877 = vstv %s874
      %v878 = vadd.s32 %v876, %v877
      %vm879 = vcmp.lt.s32.totalorder %v878, 98
      %v880 = vsel %vm879, %v873, %v10
      %v881 = vlaneseq
      %v882 = vand.u32 %v881, 127
      %v883 = vadd.s32 %v882, 128
      %vm884 = vcmp.lt.s32.totalorder %v883, 144
      %v885 = vsel %vm884, %v880, %v10
      %s886 = scalar_lea.vmem [#allocation7], 68
      %v887 = vpack.c.bf16 0.0, %v885
      %889 = vst [vmem:[%s886] sm:$0xf] %v887
      %s890 = scalar_lea.vmem %s195, 216
      %s891 = sadd.s32 %s196, 1
      %s892 = ssub.s32 12, %s891
      %p893 = scmp.lt.s32.totalorder %s892, 0
      %s894 = scalar_select %p893, 0, 255
      %s895 = sshrl.u32 %s894, 1
      %s896 = sor.u32 %s894, %s895
      %s897 = sand.u32 %s896, 85
      %s898 = sshrl.u32 %s897, 1
      %s899 = sor.u32 %s897, %s898
      %s900 = sand.u32 51, %s899
      %s901 = sshrl.u32 %s900, 2
      %s902 = sor.u32 %s900, %s901
      %s903 = sand.u32 15, %s902
      %v904 = vld [vmem:[%s890] sm:%s903]
      %v905 = vunpack.c.l.bf16 %v904
      %v906 = vunpack.c.h.bf16 %v904
      %s907 = sadd.s32 %s196, 1
      %s908 = ssub.s32 12, %s907
      %v909 = vstv %s908
      %vm910 = vcmp.lt.s32.totalorder %v909, 0
      %v911 = vsel %vm910, %v10, %v905
      %s912 = sadd.s32 %s196, 1
      %s913 = smul.addr %s912, 8
      %v914 = vlaneseq
      %v915 = vshrl.u32 %v914, 7
      %v916 = vstv %s913
      %v917 = vadd.s32 %v915, %v916
      %vm918 = vcmp.lt.s32.totalorder %v917, 98
      %v919 = vsel %vm918, %v911, %v10
      %v920 = vlaneseq
      %v921 = vand.u32 %v920, 127
      %vm923 = vcmp.lt.s32.totalorder %v921, 144
      %v924 = vsel %vm923, %v919, %v10
      %s925 = scalar_lea.vmem [#allocation7], 72
      %v926 = vpack.c.bf16 0.0, %v924
      %928 = vst [vmem:[%s925] sm:$0xf] %v926
      %s929 = scalar_lea.vmem %s195, 220
      %s930 = sadd.s32 %s196, 1
      %s931 = ssub.s32 12, %s930
      %p932 = scmp.lt.s32.totalorder %s931, 0
      %s933 = scalar_select %p932, 0, 255
      %s934 = sshrl.u32 %s933, 1
      %s935 = sor.u32 %s933, %s934
      %s936 = sand.u32 %s935, 85
      %s937 = sshrl.u32 %s936, 1
      %s938 = sor.u32 %s936, %s937
      %s939 = sand.u32 51, %s938
      %s940 = sshrl.u32 %s939, 2
      %s941 = sor.u32 %s939, %s940
      %s942 = sand.u32 15, %s941
      %v943 = vld [vmem:[%s929] sm:%s942]
      %v944 = vunpack.c.l.bf16 %v943
      %v945 = vunpack.c.h.bf16 %v943
      %s946 = sadd.s32 %s196, 1
      %s947 = ssub.s32 12, %s946
      %v948 = vstv %s947
      %vm949 = vcmp.lt.s32.totalorder %v948, 0
      %v950 = vsel %vm949, %v10, %v944
      %s951 = sadd.s32 %s196, 1
      %s952 = smul.addr %s951, 8
      %v953 = vlaneseq
      %v954 = vshrl.u32 %v953, 7
      %v955 = vstv %s952
      %v956 = vadd.s32 %v954, %v955
      %vm957 = vcmp.lt.s32.totalorder %v956, 98
      %v958 = vsel %vm957, %v950, %v10
      %v959 = vlaneseq
      %v960 = vand.u32 %v959, 127
      %v961 = vadd.s32 %v960, 128
      %vm962 = vcmp.lt.s32.totalorder %v961, 144
      %v963 = vsel %vm962, %v958, %v10
      %s964 = scalar_lea.vmem [#allocation7], 76
      %v965 = vpack.c.bf16 0.0, %v963
      %967 = vst [vmem:[%s964] sm:$0xf] %v965
      %s968 = scalar_lea.vmem %s195, 224
      %s969 = sadd.s32 %s196, 2
      %s970 = ssub.s32 12, %s969
      %p971 = scmp.lt.s32.totalorder %s970, 0
      %s972 = scalar_select %p971, 0, 255
      %s973 = sshrl.u32 %s972, 1
      %s974 = sor.u32 %s972, %s973
      %s975 = sand.u32 %s974, 85
      %s976 = sshrl.u32 %s975, 1
      %s977 = sor.u32 %s975, %s976
      %s978 = sand.u32 51, %s977
      %s979 = sshrl.u32 %s978, 2
      %s980 = sor.u32 %s978, %s979
      %s981 = sand.u32 15, %s980
      %v982 = vld [vmem:[%s968] sm:%s981]
      %v983 = vunpack.c.l.bf16 %v982
      %v984 = vunpack.c.h.bf16 %v982
      %s985 = sadd.s32 %s196, 2
      %s986 = ssub.s32 12, %s985
      %v987 = vstv %s986
      %vm988 = vcmp.lt.s32.totalorder %v987, 0
      %v989 = vsel %vm988, %v10, %v983
      %s990 = sadd.s32 %s196, 2
      %s991 = smul.addr %s990, 8
      %v992 = vlaneseq
      %v993 = vshrl.u32 %v992, 7
      %v994 = vstv %s991
      %v995 = vadd.s32 %v993, %v994
      %vm996 = vcmp.lt.s32.totalorder %v995, 98
      %v997 = vsel %vm996, %v989, %v10
      %v998 = vlaneseq
      %v999 = vand.u32 %v998, 127
      %vm1001 = vcmp.lt.s32.totalorder %v999, 144
      %v1002 = vsel %vm1001, %v997, %v10
      %s1003 = scalar_lea.vmem [#allocation7], 80
      %v1004 = vpack.c.bf16 0.0, %v1002
      %1006 = vst [vmem:[%s1003] sm:$0xf] %v1004
      %s1007 = scalar_lea.vmem %s195, 228
      %s1008 = sadd.s32 %s196, 2
      %s1009 = ssub.s32 12, %s1008
      %p1010 = scmp.lt.s32.totalorder %s1009, 0
      %s1011 = scalar_select %p1010, 0, 255
      %s1012 = sshrl.u32 %s1011, 1
      %s1013 = sor.u32 %s1011, %s1012
      %s1014 = sand.u32 %s1013, 85
      %s1015 = sshrl.u32 %s1014, 1
      %s1016 = sor.u32 %s1014, %s1015
      %s1017 = sand.u32 51, %s1016
      %s1018 = sshrl.u32 %s1017, 2
      %s1019 = sor.u32 %s1017, %s1018
      %s1020 = sand.u32 15, %s1019
      %v1021 = vld [vmem:[%s1007] sm:%s1020]
      %v1022 = vunpack.c.l.bf16 %v1021
      %v1023 = vunpack.c.h.bf16 %v1021
      %s1024 = sadd.s32 %s196, 2
      %s1025 = ssub.s32 12, %s1024
      %v1026 = vstv %s1025
      %vm1027 = vcmp.lt.s32.totalorder %v1026, 0
      %v1028 = vsel %vm1027, %v10, %v1022
      %s1029 = sadd.s32 %s196, 2
      %s1030 = smul.addr %s1029, 8
      %v1031 = vlaneseq
      %v1032 = vshrl.u32 %v1031, 7
      %v1033 = vstv %s1030
      %v1034 = vadd.s32 %v1032, %v1033
      %vm1035 = vcmp.lt.s32.totalorder %v1034, 98
      %v1036 = vsel %vm1035, %v1028, %v10
      %v1037 = vlaneseq
      %v1038 = vand.u32 %v1037, 127
      %v1039 = vadd.s32 %v1038, 128
      %vm1040 = vcmp.lt.s32.totalorder %v1039, 144
      %v1041 = vsel %vm1040, %v1036, %v10
      %s1042 = scalar_lea.vmem [#allocation7], 84
      %v1043 = vpack.c.bf16 0.0, %v1041
      %1045 = vst [vmem:[%s1042] sm:$0xf] %v1043
      %s1046 = scalar_lea.vmem %s195, 232
      %s1047 = sadd.s32 %s196, 3
      %s1048 = ssub.s32 12, %s1047
      %p1049 = scmp.lt.s32.totalorder %s1048, 0
      %s1050 = scalar_select %p1049, 0, 255
      %s1051 = sshrl.u32 %s1050, 1
      %s1052 = sor.u32 %s1050, %s1051
      %s1053 = sand.u32 %s1052, 85
      %s1054 = sshrl.u32 %s1053, 1
      %s1055 = sor.u32 %s1053, %s1054
      %s1056 = sand.u32 51, %s1055
      %s1057 = sshrl.u32 %s1056, 2
      %s1058 = sor.u32 %s1056, %s1057
      %s1059 = sand.u32 15, %s1058
      %v1060 = vld [vmem:[%s1046] sm:%s1059]
      %v1061 = vunpack.c.l.bf16 %v1060
      %v1062 = vunpack.c.h.bf16 %v1060
      %s1063 = sadd.s32 %s196, 3
      %s1064 = ssub.s32 12, %s1063
      %v1065 = vstv %s1064
      %vm1066 = vcmp.lt.s32.totalorder %v1065, 0
      %v1067 = vsel %vm1066, %v10, %v1061
      %s1068 = sadd.s32 %s196, 3
      %s1069 = smul.addr %s1068, 8
      %v1070 = vlaneseq
      %v1071 = vshrl.u32 %v1070, 7
      %v1072 = vstv %s1069
      %v1073 = vadd.s32 %v1071, %v1072
      %vm1074 = vcmp.lt.s32.totalorder %v1073, 98
      %v1075 = vsel %vm1074, %v1067, %v10
      %v1076 = vlaneseq
      %v1077 = vand.u32 %v1076, 127
      %vm1079 = vcmp.lt.s32.totalorder %v1077, 144
      %v1080 = vsel %vm1079, %v1075, %v10
      %s1081 = scalar_lea.vmem [#allocation7], 88
      %v1082 = vpack.c.bf16 0.0, %v1080
      %1084 = vst [vmem:[%s1081] sm:$0xf] %v1082
      %s1085 = scalar_lea.vmem %s195, 236
      %s1086 = sadd.s32 %s196, 3
      %s1087 = ssub.s32 12, %s1086
      %p1088 = scmp.lt.s32.totalorder %s1087, 0
      %s1089 = scalar_select %p1088, 0, 255
      %s1090 = sshrl.u32 %s1089, 1
      %s1091 = sor.u32 %s1089, %s1090
      %s1092 = sand.u32 %s1091, 85
      %s1093 = sshrl.u32 %s1092, 1
      %s1094 = sor.u32 %s1092, %s1093
      %s1095 = sand.u32 51, %s1094
      %s1096 = sshrl.u32 %s1095, 2
      %s1097 = sor.u32 %s1095, %s1096
      %s1098 = sand.u32 15, %s1097
      %v1099 = vld [vmem:[%s1085] sm:%s1098]
      %v1100 = vunpack.c.l.bf16 %v1099
      %v1101 = vunpack.c.h.bf16 %v1099
      %s1102 = sadd.s32 %s196, 3
      %s1103 = ssub.s32 12, %s1102
      %v1104 = vstv %s1103
      %vm1105 = vcmp.lt.s32.totalorder %v1104, 0
      %v1106 = vsel %vm1105, %v10, %v1100
      %s1107 = sadd.s32 %s196, 3
      %s1108 = smul.addr %s1107, 8
      %v1109 = vlaneseq
      %v1110 = vshrl.u32 %v1109, 7
      %v1111 = vstv %s1108
      %v1112 = vadd.s32 %v1110, %v1111
      %vm1113 = vcmp.lt.s32.totalorder %v1112, 98
      %v1114 = vsel %vm1113, %v1106, %v10
      %v1115 = vlaneseq
      %v1116 = vand.u32 %v1115, 127
      %v1117 = vadd.s32 %v1116, 128
      %vm1118 = vcmp.lt.s32.totalorder %v1117, 144
      %v1119 = vsel %vm1118, %v1114, %v10
      %s1120 = scalar_lea.vmem [#allocation7], 92
      %v1121 = vpack.c.bf16 0.0, %v1119
      %1123 = vst [vmem:[%s1120] sm:$0xf] %v1121
      %s1124 = scalar_lea.vmem %s195, 312
      %s1125 = ssub.s32 12, %s196
      %p1126 = scmp.lt.s32.totalorder %s1125, 0
      %s1127 = scalar_select %p1126, 0, 255
      %s1128 = sshrl.u32 %s1127, 1
      %s1129 = sor.u32 %s1127, %s1128
      %s1130 = sand.u32 %s1129, 85
      %s1131 = sshrl.u32 %s1130, 1
      %s1132 = sor.u32 %s1130, %s1131
      %s1133 = sand.u32 51, %s1132
      %s1134 = sshrl.u32 %s1133, 2
      %s1135 = sor.u32 %s1133, %s1134
      %s1136 = sand.u32 15, %s1135
      %v1137 = vld [vmem:[%s1124] sm:%s1136]
      %v1138 = vunpack.c.l.bf16 %v1137
      %v1139 = vunpack.c.h.bf16 %v1137
      %s1140 = ssub.s32 12, %s196
      %v1141 = vstv %s1140
      %vm1142 = vcmp.lt.s32.totalorder %v1141, 0
      %v1143 = vsel %vm1142, %v10, %v1138
      %s1144 = smul.addr %s196, 8
      %v1145 = vlaneseq
      %v1146 = vshrl.u32 %v1145, 7
      %v1147 = vstv %s1144
      %v1148 = vadd.s32 %v1146, %v1147
      %vm1149 = vcmp.lt.s32.totalorder %v1148, 98
      %v1150 = vsel %vm1149, %v1143, %v10
      %v1151 = vlaneseq
      %v1152 = vand.u32 %v1151, 127
      %vm1154 = vcmp.lt.s32.totalorder %v1152, 144
      %v1155 = vsel %vm1154, %v1150, %v10
      %s1156 = scalar_lea.vmem [#allocation7], 96
      %v1157 = vpack.c.bf16 0.0, %v1155
      %1159 = vst [vmem:[%s1156] sm:$0xf] %v1157
      %s1160 = scalar_lea.vmem %s195, 316
      %s1161 = ssub.s32 12, %s196
      %p1162 = scmp.lt.s32.totalorder %s1161, 0
      %s1163 = scalar_select %p1162, 0, 255
      %s1164 = sshrl.u32 %s1163, 1
      %s1165 = sor.u32 %s1163, %s1164
      %s1166 = sand.u32 %s1165, 85
      %s1167 = sshrl.u32 %s1166, 1
      %s1168 = sor.u32 %s1166, %s1167
      %s1169 = sand.u32 51, %s1168
      %s1170 = sshrl.u32 %s1169, 2
      %s1171 = sor.u32 %s1169, %s1170
      %s1172 = sand.u32 15, %s1171
      %v1173 = vld [vmem:[%s1160] sm:%s1172]
      %v1174 = vunpack.c.l.bf16 %v1173
      %v1175 = vunpack.c.h.bf16 %v1173
      %s1176 = ssub.s32 12, %s196
      %v1177 = vstv %s1176
      %vm1178 = vcmp.lt.s32.totalorder %v1177, 0
      %v1179 = vsel %vm1178, %v10, %v1174
      %s1180 = smul.addr %s196, 8
      %v1181 = vlaneseq
      %v1182 = vshrl.u32 %v1181, 7
      %v1183 = vstv %s1180
      %v1184 = vadd.s32 %v1182, %v1183
      %vm1185 = vcmp.lt.s32.totalorder %v1184, 98
      %v1186 = vsel %vm1185, %v1179, %v10
      %v1187 = vlaneseq
      %v1188 = vand.u32 %v1187, 127
      %v1189 = vadd.s32 %v1188, 128
      %vm1190 = vcmp.lt.s32.totalorder %v1189, 144
      %v1191 = vsel %vm1190, %v1186, %v10
      %s1192 = scalar_lea.vmem [#allocation7], 100
      %v1193 = vpack.c.bf16 0.0, %v1191
      %1195 = vst [vmem:[%s1192] sm:$0xf] %v1193
      %s1196 = scalar_lea.vmem %s195, 320
      %s1197 = sadd.s32 %s196, 1
      %s1198 = ssub.s32 12, %s1197
      %p1199 = scmp.lt.s32.totalorder %s1198, 0
      %s1200 = scalar_select %p1199, 0, 255
      %s1201 = sshrl.u32 %s1200, 1
      %s1202 = sor.u32 %s1200, %s1201
      %s1203 = sand.u32 %s1202, 85
      %s1204 = sshrl.u32 %s1203, 1
      %s1205 = sor.u32 %s1203, %s1204
      %s1206 = sand.u32 51, %s1205
      %s1207 = sshrl.u32 %s1206, 2
      %s1208 = sor.u32 %s1206, %s1207
      %s1209 = sand.u32 15, %s1208
      %v1210 = vld [vmem:[%s1196] sm:%s1209]
      %v1211 = vunpack.c.l.bf16 %v1210
      %v1212 = vunpack.c.h.bf16 %v1210
      %s1213 = sadd.s32 %s196, 1
      %s1214 = ssub.s32 12, %s1213
      %v1215 = vstv %s1214
      %vm1216 = vcmp.lt.s32.totalorder %v1215, 0
      %v1217 = vsel %vm1216, %v10, %v1211
      %s1218 = sadd.s32 %s196, 1
      %s1219 = smul.addr %s1218, 8
      %v1220 = vlaneseq
      %v1221 = vshrl.u32 %v1220, 7
      %v1222 = vstv %s1219
      %v1223 = vadd.s32 %v1221, %v1222
      %vm1224 = vcmp.lt.s32.totalorder %v1223, 98
      %v1225 = vsel %vm1224, %v1217, %v10
      %v1226 = vlaneseq
      %v1227 = vand.u32 %v1226, 127
      %vm1229 = vcmp.lt.s32.totalorder %v1227, 144
      %v1230 = vsel %vm1229, %v1225, %v10
      %s1231 = scalar_lea.vmem [#allocation7], 104
      %v1232 = vpack.c.bf16 0.0, %v1230
      %1234 = vst [vmem:[%s1231] sm:$0xf] %v1232
      %s1235 = scalar_lea.vmem %s195, 324
      %s1236 = sadd.s32 %s196, 1
      %s1237 = ssub.s32 12, %s1236
      %p1238 = scmp.lt.s32.totalorder %s1237, 0
      %s1239 = scalar_select %p1238, 0, 255
      %s1240 = sshrl.u32 %s1239, 1
      %s1241 = sor.u32 %s1239, %s1240
      %s1242 = sand.u32 %s1241, 85
      %s1243 = sshrl.u32 %s1242, 1
      %s1244 = sor.u32 %s1242, %s1243
      %s1245 = sand.u32 51, %s1244
      %s1246 = sshrl.u32 %s1245, 2
      %s1247 = sor.u32 %s1245, %s1246
      %s1248 = sand.u32 15, %s1247
      %v1249 = vld [vmem:[%s1235] sm:%s1248]
      %v1250 = vunpack.c.l.bf16 %v1249
      %v1251 = vunpack.c.h.bf16 %v1249
      %s1252 = sadd.s32 %s196, 1
      %s1253 = ssub.s32 12, %s1252
      %v1254 = vstv %s1253
      %vm1255 = vcmp.lt.s32.totalorder %v1254, 0
      %v1256 = vsel %vm1255, %v10, %v1250
      %s1257 = sadd.s32 %s196, 1
      %s1258 = smul.addr %s1257, 8
      %v1259 = vlaneseq
      %v1260 = vshrl.u32 %v1259, 7
      %v1261 = vstv %s1258
      %v1262 = vadd.s32 %v1260, %v1261
      %vm1263 = vcmp.lt.s32.totalorder %v1262, 98
      %v1264 = vsel %vm1263, %v1256, %v10
      %v1265 = vlaneseq
      %v1266 = vand.u32 %v1265, 127
      %v1267 = vadd.s32 %v1266, 128
      %vm1268 = vcmp.lt.s32.totalorder %v1267, 144
      %v1269 = vsel %vm1268, %v1264, %v10
      %s1270 = scalar_lea.vmem [#allocation7], 108
      %v1271 = vpack.c.bf16 0.0, %v1269
      %1273 = vst [vmem:[%s1270] sm:$0xf] %v1271
      %s1274 = scalar_lea.vmem %s195, 328
      %s1275 = sadd.s32 %s196, 2
      %s1276 = ssub.s32 12, %s1275
      %p1277 = scmp.lt.s32.totalorder %s1276, 0
      %s1278 = scalar_select %p1277, 0, 255
      %s1279 = sshrl.u32 %s1278, 1
      %s1280 = sor.u32 %s1278, %s1279
      %s1281 = sand.u32 %s1280, 85
      %s1282 = sshrl.u32 %s1281, 1
      %s1283 = sor.u32 %s1281, %s1282
      %s1284 = sand.u32 51, %s1283
      %s1285 = sshrl.u32 %s1284, 2
      %s1286 = sor.u32 %s1284, %s1285
      %s1287 = sand.u32 15, %s1286
      %v1288 = vld [vmem:[%s1274] sm:%s1287]
      %v1289 = vunpack.c.l.bf16 %v1288
      %v1290 = vunpack.c.h.bf16 %v1288
      %s1291 = sadd.s32 %s196, 2
      %s1292 = ssub.s32 12, %s1291
      %v1293 = vstv %s1292
      %vm1294 = vcmp.lt.s32.totalorder %v1293, 0
      %v1295 = vsel %vm1294, %v10, %v1289
      %s1296 = sadd.s32 %s196, 2
      %s1297 = smul.addr %s1296, 8
      %v1298 = vlaneseq
      %v1299 = vshrl.u32 %v1298, 7
      %v1300 = vstv %s1297
      %v1301 = vadd.s32 %v1299, %v1300
      %vm1302 = vcmp.lt.s32.totalorder %v1301, 98
      %v1303 = vsel %vm1302, %v1295, %v10
      %v1304 = vlaneseq
      %v1305 = vand.u32 %v1304, 127
      %vm1307 = vcmp.lt.s32.totalorder %v1305, 144
      %v1308 = vsel %vm1307, %v1303, %v10
      %s1309 = scalar_lea.vmem [#allocation7], 112
      %v1310 = vpack.c.bf16 0.0, %v1308
      %1312 = vst [vmem:[%s1309] sm:$0xf] %v1310
      %s1313 = scalar_lea.vmem %s195, 332
      %s1314 = sadd.s32 %s196, 2
      %s1315 = ssub.s32 12, %s1314
      %p1316 = scmp.lt.s32.totalorder %s1315, 0
      %s1317 = scalar_select %p1316, 0, 255
      %s1318 = sshrl.u32 %s1317, 1
      %s1319 = sor.u32 %s1317, %s1318
      %s1320 = sand.u32 %s1319, 85
      %s1321 = sshrl.u32 %s1320, 1
      %s1322 = sor.u32 %s1320, %s1321
      %s1323 = sand.u32 51, %s1322
      %s1324 = sshrl.u32 %s1323, 2
      %s1325 = sor.u32 %s1323, %s1324
      %s1326 = sand.u32 15, %s1325
      %v1327 = vld [vmem:[%s1313] sm:%s1326]
      %v1328 = vunpack.c.l.bf16 %v1327
      %v1329 = vunpack.c.h.bf16 %v1327
      %s1330 = sadd.s32 %s196, 2
      %s1331 = ssub.s32 12, %s1330
      %v1332 = vstv %s1331
      %vm1333 = vcmp.lt.s32.totalorder %v1332, 0
      %v1334 = vsel %vm1333, %v10, %v1328
      %s1335 = sadd.s32 %s196, 2
      %s1336 = smul.addr %s1335, 8
      %v1337 = vlaneseq
      %v1338 = vshrl.u32 %v1337, 7
      %v1339 = vstv %s1336
      %v1340 = vadd.s32 %v1338, %v1339
      %vm1341 = vcmp.lt.s32.totalorder %v1340, 98
      %v1342 = vsel %vm1341, %v1334, %v10
      %v1343 = vlaneseq
      %v1344 = vand.u32 %v1343, 127
      %v1345 = vadd.s32 %v1344, 128
      %vm1346 = vcmp.lt.s32.totalorder %v1345, 144
      %v1347 = vsel %vm1346, %v1342, %v10
      %s1348 = scalar_lea.vmem [#allocation7], 116
      %v1349 = vpack.c.bf16 0.0, %v1347
      %1351 = vst [vmem:[%s1348] sm:$0xf] %v1349
      %s1352 = scalar_lea.vmem %s195, 336
      %s1353 = sadd.s32 %s196, 3
      %s1354 = ssub.s32 12, %s1353
      %p1355 = scmp.lt.s32.totalorder %s1354, 0
      %s1356 = scalar_select %p1355, 0, 255
      %s1357 = sshrl.u32 %s1356, 1
      %s1358 = sor.u32 %s1356, %s1357
      %s1359 = sand.u32 %s1358, 85
      %s1360 = sshrl.u32 %s1359, 1
      %s1361 = sor.u32 %s1359, %s1360
      %s1362 = sand.u32 51, %s1361
      %s1363 = sshrl.u32 %s1362, 2
      %s1364 = sor.u32 %s1362, %s1363
      %s1365 = sand.u32 15, %s1364
      %v1366 = vld [vmem:[%s1352] sm:%s1365]
      %v1367 = vunpack.c.l.bf16 %v1366
      %v1368 = vunpack.c.h.bf16 %v1366
      %s1369 = sadd.s32 %s196, 3
      %s1370 = ssub.s32 12, %s1369
      %v1371 = vstv %s1370
      %vm1372 = vcmp.lt.s32.totalorder %v1371, 0
      %v1373 = vsel %vm1372, %v10, %v1367
      %s1374 = sadd.s32 %s196, 3
      %s1375 = smul.addr %s1374, 8
      %v1376 = vlaneseq
      %v1377 = vshrl.u32 %v1376, 7
      %v1378 = vstv %s1375
      %v1379 = vadd.s32 %v1377, %v1378
      %vm1380 = vcmp.lt.s32.totalorder %v1379, 98
      %v1381 = vsel %vm1380, %v1373, %v10
      %v1382 = vlaneseq
      %v1383 = vand.u32 %v1382, 127
      %vm1385 = vcmp.lt.s32.totalorder %v1383, 144
      %v1386 = vsel %vm1385, %v1381, %v10
      %s1387 = scalar_lea.vmem [#allocation7], 120
      %v1388 = vpack.c.bf16 0.0, %v1386
      %1390 = vst [vmem:[%s1387] sm:$0xf] %v1388
      %s1391 = scalar_lea.vmem %s195, 340
      %s1392 = sadd.s32 %s196, 3
      %s1393 = ssub.s32 12, %s1392
      %p1394 = scmp.lt.s32.totalorder %s1393, 0
      %s1395 = scalar_select %p1394, 0, 255
      %s1396 = sshrl.u32 %s1395, 1
      %s1397 = sor.u32 %s1395, %s1396
      %s1398 = sand.u32 %s1397, 85
      %s1399 = sshrl.u32 %s1398, 1
      %s1400 = sor.u32 %s1398, %s1399
      %s1401 = sand.u32 51, %s1400
      %s1402 = sshrl.u32 %s1401, 2
      %s1403 = sor.u32 %s1401, %s1402
      %s1404 = sand.u32 15, %s1403
      %v1405 = vld [vmem:[%s1391] sm:%s1404]
      %v1406 = vunpack.c.l.bf16 %v1405
      %v1407 = vunpack.c.h.bf16 %v1405
      %s1408 = sadd.s32 %s196, 3
      %s1409 = ssub.s32 12, %s1408
      %v1410 = vstv %s1409
      %vm1411 = vcmp.lt.s32.totalorder %v1410, 0
      %v1412 = vsel %vm1411, %v10, %v1406
      %s1413 = sadd.s32 %s196, 3
      %s1414 = smul.addr %s1413, 8
      %v1415 = vlaneseq
      %v1416 = vshrl.u32 %v1415, 7
      %v1417 = vstv %s1414
      %v1418 = vadd.s32 %v1416, %v1417
      %vm1419 = vcmp.lt.s32.totalorder %v1418, 98
      %v1420 = vsel %vm1419, %v1412, %v10
      %v1421 = vlaneseq
      %v1422 = vand.u32 %v1421, 127
      %v1423 = vadd.s32 %v1422, 128
      %vm1424 = vcmp.lt.s32.totalorder %v1423, 144
      %v1425 = vsel %vm1424, %v1420, %v10
      %s1426 = scalar_lea.vmem [#allocation7], 124
      %v1427 = vpack.c.bf16 0.0, %v1425
      %1429 = vst [vmem:[%s1426] sm:$0xf] %v1427
      %v1431 = vld [vmem:[%s0] sm:$0xf]
      %v1432 = vld [vmem:[%s0 + $0x4] sm:$0xf]
      %v1433 = vld [vmem:[%s0 + $0x8] sm:$0xf]
      %v1434 = vld [vmem:[%s0 + $0xc] sm:$0xf]
      %v1435 = vld [vmem:[%s0 + $0x10] sm:$0xf]
      %v1436 = vld [vmem:[%s0 + $0x14] sm:$0xf]
      %v1437 = vld [vmem:[%s0 + $0x18] sm:$0xf]
      %v1438 = vld [vmem:[%s0 + $0x1c] sm:$0xf]
      %v1439 = vld [vmem:[%s0 + $0x20] sm:$0xf]
      %v1440 = vld [vmem:[%s0 + $0x24] sm:$0xf]
      %v1441 = vld [vmem:[%s0 + $0x28] sm:$0xf]
      %v1442 = vld [vmem:[%s0 + $0x2c] sm:$0xf]
      %v1443 = vld [vmem:[%s0 + $0x30] sm:$0xf]
      %v1444 = vld [vmem:[%s0 + $0x34] sm:$0xf]
      %v1445 = vld [vmem:[%s0 + $0x38] sm:$0xf]
      %v1446 = vld [vmem:[%s0 + $0x3c] sm:$0xf]
      %v1447 = vld [vmem:[%s0 + $0x40] sm:$0xf]
      %v1448 = vld [vmem:[%s0 + $0x44] sm:$0xf]
      %v1449 = vld [vmem:[#allocation7] sm:$0xff]
      %v1450 = vld [vmem:[#allocation7 + $0x8] sm:$0xff]
      %v1451 = vld [vmem:[#allocation7 + $0x10] sm:$0xff]
      %v1452 = vld [vmem:[#allocation7 + $0x18] sm:$0xff]
      %v1457 = vunpack.c.l.b16 %v1449
      %v1458 = vunpack.c.h.b16 %v1449
      %v1459 = vunpack.c.l.b16 %v1450
      %v1460 = vunpack.c.h.b16 %v1450
      %v1461 = vunpack.c.l.b16 %v1451
      %v1462 = vunpack.c.h.b16 %v1451
      %v1463 = vunpack.c.l.b16 %v1452
      %v1464 = vunpack.c.h.b16 %v1452
      %v1465 = vpack.c.b16 %v1459, %v1457
      %v1466 = vpack.c.b16 %v1460, %v1458
      %v1467 = vpack.c.b16 %v1463, %v1461
      %v1468 = vpack.c.b16 %v1464, %v1462
      %v1489 = vunpack.c.l.b16 %v1431
      %v1490 = vunpack.c.l.b16 %v1432
      %v1491 = vunpack.c.l.b16 %v1433
      %v1492 = vunpack.c.l.b16 %v1434
      %v1493 = vunpack.c.l.b16 %v1435
      %v1494 = vunpack.c.l.b16 %v1436
      %v1495 = vunpack.c.l.b16 %v1437
      %v1496 = vunpack.c.l.b16 %v1438
      %v1497 = vunpack.c.l.b16 %v1439
      %v1498 = vunpack.c.l.b16 %v1440
      %v1499 = vunpack.c.l.b16 %v1441
      %v1500 = vunpack.c.l.b16 %v1442
      %v1501 = vunpack.c.l.b16 %v1443
      %v1502 = vunpack.c.l.b16 %v1444
      %v1503 = vunpack.c.l.b16 %v1445
      %v1504 = vunpack.c.l.b16 %v1446
      %v1505 = vunpack.c.l.b16 %v1447
      %v1506 = vunpack.c.l.b16 %v1448
      %v1507 = vpack.c.b16 %v1490, %v1489
      %v1508 = vpack.c.b16 %v1492, %v1491
      %v1509 = vpack.c.b16 %v1494, %v1493
      %v1510 = vpack.c.b16 %v1496, %v1495
      %v1511 = vpack.c.b16 %v1498, %v1497
      %v1512 = vpack.c.b16 %v1500, %v1499
      %v1513 = vpack.c.b16 %v1502, %v1501
      %v1514 = vpack.c.b16 %v1504, %v1503
      %v1515 = vpack.c.b16 %v1506, %v1505
      %vm1525 = vcmask 130048
      %v1527 = vsel %vm1525, %v1466, 0
      %v1530 = vsel %vm1525, %v1468, 0
      %1532 = vmatprep.subr.bf16.mxu0 0
      %1533 = vmatpush1.bf16.msra.mxu0 %v1507
      %1534 = vmatprep.subr.bf16.mxu0 0
      %1535 = vmatpush1.bf16.msra.mxu0 %v1508
      %1536 = vmatprep.subr.bf16.mxu0 0
      %1537 = vmatpush1.bf16.msra.mxu0 %v1509
      %1538 = vmatprep.subr.bf16.mxu0 0
      %1539 = vmatpush1.bf16.msra.mxu0 %v1510
      %1540 = vmatprep.subr.bf16.mxu0 0
      %1541 = vmatpush1.bf16.msra.mxu0 %v1511
      %1542 = vmatprep.subr.bf16.mxu0 0
      %1543 = vmatpush1.bf16.msra.mxu0 %v1512
      %1544 = vmatprep.subr.bf16.mxu0 0
      %1545 = vmatpush1.bf16.msra.mxu0 %v1513
      %1546 = vmatprep.subr.bf16.mxu0 0
      %1547 = vmatpush1.bf16.msra.mxu0 %v1514
      %1548 = vmatprep.subr.bf16.mxu0 0
      %1549 = vmatpush1.bf16.msra.mxu0 %v1515
      %1550 = vmatprep.subr.bf16.mxu0 0
      %1551 = vmatpush1.bf16.msra.mxu0 0
      %1552 = vmatprep.subr.bf16.mxu0 0
      %1553 = vmatpush1.bf16.msra.mxu0 0
      %1554 = vmatprep.subr.bf16.mxu0 0
      %1555 = vmatpush1.bf16.msra.mxu0 0
      %1556 = vmatprep.subr.bf16.mxu0 0
      %1557 = vmatpush1.bf16.msra.mxu0 0
      %1558 = vmatprep.subr.bf16.mxu0 0
      %1559 = vmatpush1.bf16.msra.mxu0 0
      %1560 = vmatprep.subr.bf16.mxu0 0
      %1561 = vmatpush1.bf16.msra.mxu0 0
      %1562 = vmatprep.subr.bf16.mxu0 0
      %1563 = vmatpush1.bf16.msra.mxu0 0
      %1564 = vmatprep.mubr.bf16.mxu0 %v1527
      %1565 = vmatmul.mubr.bf16.gmra.mrb[0].mxu0 %v1465
      %v1566 = vpop.f32.mrb[0].mxu0
      %v1567 = vadd.f32 0.0, %v1566
      %v1568 = vpop.f32.mrb[0].mxu0
      %v1569 = vpop.f32.mrb[0].mxu0
      %v1570 = vadd.f32 0.0, %v1569
      %v1571 = vpop.f32.mrb[0].mxu0
      %1572 = vmatprep.mubr.bf16.mxu0 %v1530
      %1573 = vmatmul.mubr.bf16.gmra.mrb[0].mxu0 %v1467
      %v1574 = vpop.f32.mrb[0].mxu0
      %v1575 = vadd.f32 0.0, %v1574
      %v1576 = vpop.f32.mrb[0].mxu0
      %v1577 = vpop.f32.mrb[0].mxu0
      %v1578 = vadd.f32 0.0, %v1577
      %v1579 = vpop.f32.mrb[0].mxu0
      %1580 = vdwg.mxu0
      %s1581 = scalar_lea.vmem [#allocation7], 32
      %v1582 = vld [vmem:[%s1581] sm:$0xff]
      %v1583 = vld [vmem:[%s1581 + $0x8] sm:$0xff]
      %v1584 = vld [vmem:[%s1581 + $0x10] sm:$0xff]
      %v1585 = vld [vmem:[%s1581 + $0x18] sm:$0xff]
      %v1590 = vunpack.c.l.b16 %v1582
      %v1591 = vunpack.c.h.b16 %v1582
      %v1592 = vunpack.c.l.b16 %v1583
      %v1593 = vunpack.c.h.b16 %v1583
      %v1594 = vunpack.c.l.b16 %v1584
      %v1595 = vunpack.c.h.b16 %v1584
      %v1596 = vunpack.c.l.b16 %v1585
      %v1597 = vunpack.c.h.b16 %v1585
      %v1598 = vpack.c.b16 %v1592, %v1590
      %v1599 = vpack.c.b16 %v1593, %v1591
      %v1600 = vpack.c.b16 %v1596, %v1594
      %v1601 = vpack.c.b16 %v1597, %v1595
      %v1605 = vsel %vm1525, %v1599, 0
      %v1608 = vsel %vm1525, %v1601, 0
      %1610 = vmatprep.subr.bf16.mxu0 0
      %1611 = vmatpush1.bf16.msra.mxu0 %v1507
      %1612 = vmatprep.subr.bf16.mxu0 0
      %1613 = vmatpush1.bf16.msra.mxu0 %v1508
      %1614 = vmatprep.subr.bf16.mxu0 0
      %1615 = vmatpush1.bf16.msra.mxu0 %v1509
      %1616 = vmatprep.subr.bf16.mxu0 0
      %1617 = vmatpush1.bf16.msra.mxu0 %v1510
      %1618 = vmatprep.subr.bf16.mxu0 0
      %1619 = vmatpush1.bf16.msra.mxu0 %v1511
      %1620 = vmatprep.subr.bf16.mxu0 0
      %1621 = vmatpush1.bf16.msra.mxu0 %v1512
      %1622 = vmatprep.subr.bf16.mxu0 0
      %1623 = vmatpush1.bf16.msra.mxu0 %v1513
      %1624 = vmatprep.subr.bf16.mxu0 0
      %1625 = vmatpush1.bf16.msra.mxu0 %v1514
      %1626 = vmatprep.subr.bf16.mxu0 0
      %1627 = vmatpush1.bf16.msra.mxu0 %v1515
      %1628 = vmatprep.subr.bf16.mxu0 0
      %1629 = vmatpush1.bf16.msra.mxu0 0
      %1630 = vmatprep.subr.bf16.mxu0 0
      %1631 = vmatpush1.bf16.msra.mxu0 0
      %1632 = vmatprep.subr.bf16.mxu0 0
      %1633 = vmatpush1.bf16.msra.mxu0 0
      %1634 = vmatprep.subr.bf16.mxu0 0
      %1635 = vmatpush1.bf16.msra.mxu0 0
      %1636 = vmatprep.subr.bf16.mxu0 0
      %1637 = vmatpush1.bf16.msra.mxu0 0
      %1638 = vmatprep.subr.bf16.mxu0 0
      %1639 = vmatpush1.bf16.msra.mxu0 0
      %1640 = vmatprep.subr.bf16.mxu0 0
      %1641 = vmatpush1.bf16.msra.mxu0 0
      %1642 = vmatprep.mubr.bf16.mxu0 %v1605
      %1643 = vmatmul.mubr.bf16.gmra.mrb[0].mxu0 %v1598
      %v1644 = vpop.f32.mrb[0].mxu0
      %v1645 = vadd.f32 0.0, %v1644
      %v1646 = vpop.f32.mrb[0].mxu0
      %v1647 = vpop.f32.mrb[0].mxu0
      %v1648 = vadd.f32 0.0, %v1647
      %v1649 = vpop.f32.mrb[0].mxu0
      %1650 = vmatprep.mubr.bf16.mxu0 %v1608
      %1651 = vmatmul.mubr.bf16.gmra.mrb[0].mxu0 %v1600
      %v1652 = vpop.f32.mrb[0].mxu0
      %v1653 = vadd.f32 0.0, %v1652
      %v1654 = vpop.f32.mrb[0].mxu0
      %v1655 = vpop.f32.mrb[0].mxu0
      %v1656 = vadd.f32 0.0, %v1655
      %v1657 = vpop.f32.mrb[0].mxu0
      %1658 = vdwg.mxu0
      %v1659 = vmax.f32 %v1567, %v1645
      %v1660 = vmax.f32 %v1570, %v1648
      %v1661 = vmax.f32 %v1575, %v1653
      %v1662 = vmax.f32 %v1578, %v1656
      %s1663 = scalar_lea.vmem [#allocation7], 64
      %v1664 = vld [vmem:[%s1663] sm:$0xff]
      %v1665 = vld [vmem:[%s1663 + $0x8] sm:$0xff]
      %v1666 = vld [vmem:[%s1663 + $0x10] sm:$0xff]
      %v1667 = vld [vmem:[%s1663 + $0x18] sm:$0xff]
      %v1672 = vunpack.c.l.b16 %v1664
      %v1673 = vunpack.c.h.b16 %v1664
      %v1674 = vunpack.c.l.b16 %v1665
      %v1675 = vunpack.c.h.b16 %v1665
      %v1676 = vunpack.c.l.b16 %v1666
      %v1677 = vunpack.c.h.b16 %v1666
      %v1678 = vunpack.c.l.b16 %v1667
      %v1679 = vunpack.c.h.b16 %v1667
      %v1680 = vpack.c.b16 %v1674, %v1672
      %v1681 = vpack.c.b16 %v1675, %v1673
      %v1682 = vpack.c.b16 %v1678, %v1676
      %v1683 = vpack.c.b16 %v1679, %v1677
      %v1687 = vsel %vm1525, %v1681, 0
      %v1690 = vsel %vm1525, %v1683, 0
      %1692 = vmatprep.subr.bf16.mxu0 0
      %1693 = vmatpush1.bf16.msra.mxu0 %v1507
      %1694 = vmatprep.subr.bf16.mxu0 0
      %1695 = vmatpush1.bf16.msra.mxu0 %v1508
      %1696 = vmatprep.subr.bf16.mxu0 0
      %1697 = vmatpush1.bf16.msra.mxu0 %v1509
      %1698 = vmatprep.subr.bf16.mxu0 0
      %1699 = vmatpush1.bf16.msra.mxu0 %v1510
      %1700 = vmatprep.subr.bf16.mxu0 0
      %1701 = vmatpush1.bf16.msra.mxu0 %v1511
      %1702 = vmatprep.subr.bf16.mxu0 0
      %1703 = vmatpush1.bf16.msra.mxu0 %v1512
      %1704 = vmatprep.subr.bf16.mxu0 0
      %1705 = vmatpush1.bf16.msra.mxu0 %v1513
      %1706 = vmatprep.subr.bf16.mxu0 0
      %1707 = vmatpush1.bf16.msra.mxu0 %v1514
      %1708 = vmatprep.subr.bf16.mxu0 0
      %1709 = vmatpush1.bf16.msra.mxu0 %v1515
      %1710 = vmatprep.subr.bf16.mxu0 0
      %1711 = vmatpush1.bf16.msra.mxu0 0
      %1712 = vmatprep.subr.bf16.mxu0 0
      %1713 = vmatpush1.bf16.msra.mxu0 0
      %1714 = vmatprep.subr.bf16.mxu0 0
      %1715 = vmatpush1.bf16.msra.mxu0 0
      %1716 = vmatprep.subr.bf16.mxu0 0
      %1717 = vmatpush1.bf16.msra.mxu0 0
      %1718 = vmatprep.subr.bf16.mxu0 0
      %1719 = vmatpush1.bf16.msra.mxu0 0
      %1720 = vmatprep.subr.bf16.mxu0 0
      %1721 = vmatpush1.bf16.msra.mxu0 0
      %1722 = vmatprep.subr.bf16.mxu0 0
      %1723 = vmatpush1.bf16.msra.mxu0 0
      %1724 = vmatprep.mubr.bf16.mxu0 %v1687
      %1725 = vmatmul.mubr.bf16.gmra.mrb[0].mxu0 %v1680
      %v1726 = vpop.f32.mrb[0].mxu0
      %v1727 = vadd.f32 0.0, %v1726
      %v1728 = vpop.f32.mrb[0].mxu0
      %v1729 = vpop.f32.mrb[0].mxu0
      %v1730 = vadd.f32 0.0, %v1729
      %v1731 = vpop.f32.mrb[0].mxu0
      %1732 = vmatprep.mubr.bf16.mxu0 %v1690
      %1733 = vmatmul.mubr.bf16.gmra.mrb[0].mxu0 %v1682
      %v1734 = vpop.f32.mrb[0].mxu0
      %v1735 = vadd.f32 0.0, %v1734
      %v1736 = vpop.f32.mrb[0].mxu0
      %v1737 = vpop.f32.mrb[0].mxu0
      %v1738 = vadd.f32 0.0, %v1737
      %v1739 = vpop.f32.mrb[0].mxu0
      %1740 = vdwg.mxu0
      %v1741 = vmax.f32 %v1659, %v1727
      %v1742 = vmax.f32 %v1660, %v1730
      %v1743 = vmax.f32 %v1661, %v1735
      %v1744 = vmax.f32 %v1662, %v1738
      %s1745 = scalar_lea.vmem [#allocation7], 96
      %v1746 = vld [vmem:[%s1745] sm:$0xff]
      %v1747 = vld [vmem:[%s1745 + $0x8] sm:$0xff]
      %v1748 = vld [vmem:[%s1745 + $0x10] sm:$0xff]
      %v1749 = vld [vmem:[%s1745 + $0x18] sm:$0xff]
      %v1754 = vunpack.c.l.b16 %v1746
      %v1755 = vunpack.c.h.b16 %v1746
      %v1756 = vunpack.c.l.b16 %v1747
      %v1757 = vunpack.c.h.b16 %v1747
      %v1758 = vunpack.c.l.b16 %v1748
      %v1759 = vunpack.c.h.b16 %v1748
      %v1760 = vunpack.c.l.b16 %v1749
      %v1761 = vunpack.c.h.b16 %v1749
      %v1762 = vpack.c.b16 %v1756, %v1754
      %v1763 = vpack.c.b16 %v1757, %v1755
      %v1764 = vpack.c.b16 %v1760, %v1758
      %v1765 = vpack.c.b16 %v1761, %v1759
      %v1769 = vsel %vm1525, %v1763, 0
      %v1772 = vsel %vm1525, %v1765, 0
      %1774 = vmatprep.subr.bf16.mxu0 0
      %1775 = vmatpush1.bf16.msra.mxu0 %v1507
      %1776 = vmatprep.subr.bf16.mxu0 0
      %1777 = vmatpush1.bf16.msra.mxu0 %v1508
      %1778 = vmatprep.subr.bf16.mxu0 0
      %1779 = vmatpush1.bf16.msra.mxu0 %v1509
      %1780 = vmatprep.subr.bf16.mxu0 0
      %1781 = vmatpush1.bf16.msra.mxu0 %v1510
      %1782 = vmatprep.subr.bf16.mxu0 0
      %1783 = vmatpush1.bf16.msra.mxu0 %v1511
      %1784 = vmatprep.subr.bf16.mxu0 0
      %1785 = vmatpush1.bf16.msra.mxu0 %v1512
      %1786 = vmatprep.subr.bf16.mxu0 0
      %1787 = vmatpush1.bf16.msra.mxu0 %v1513
      %1788 = vmatprep.subr.bf16.mxu0 0
      %1789 = vmatpush1.bf16.msra.mxu0 %v1514
      %1790 = vmatprep.subr.bf16.mxu0 0
      %1791 = vmatpush1.bf16.msra.mxu0 %v1515
      %1792 = vmatprep.subr.bf16.mxu0 0
      %1793 = vmatpush1.bf16.msra.mxu0 0
      %1794 = vmatprep.subr.bf16.mxu0 0
      %1795 = vmatpush1.bf16.msra.mxu0 0
      %1796 = vmatprep.subr.bf16.mxu0 0
      %1797 = vmatpush1.bf16.msra.mxu0 0
      %1798 = vmatprep.subr.bf16.mxu0 0
      %1799 = vmatpush1.bf16.msra.mxu0 0
      %1800 = vmatprep.subr.bf16.mxu0 0
      %1801 = vmatpush1.bf16.msra.mxu0 0
      %1802 = vmatprep.subr.bf16.mxu0 0
      %1803 = vmatpush1.bf16.msra.mxu0 0
      %1804 = vmatprep.subr.bf16.mxu0 0
      %1805 = vmatpush1.bf16.msra.mxu0 0
      %1806 = vmatprep.mubr.bf16.mxu0 %v1769
      %1807 = vmatmul.mubr.bf16.gmra.mrb[0].mxu0 %v1762
      %v1808 = vpop.f32.mrb[0].mxu0
      %v1809 = vadd.f32 0.0, %v1808
      %v1810 = vpop.f32.mrb[0].mxu0
      %v1811 = vpop.f32.mrb[0].mxu0
      %v1812 = vadd.f32 0.0, %v1811
      %v1813 = vpop.f32.mrb[0].mxu0
      %1814 = vmatprep.mubr.bf16.mxu0 %v1772
      %1815 = vmatmul.mubr.bf16.gmra.mrb[0].mxu0 %v1764
      %v1816 = vpop.f32.mrb[0].mxu0
      %v1817 = vadd.f32 0.0, %v1816
      %v1818 = vpop.f32.mrb[0].mxu0
      %v1819 = vpop.f32.mrb[0].mxu0
      %v1820 = vadd.f32 0.0, %v1819
      %v1821 = vpop.f32.mrb[0].mxu0
      %1822 = vdwg.mxu0
      %v1823 = vmax.f32 %v1741, %v1809
      %v1824 = vmax.f32 %v1742, %v1812
      %v1825 = vmax.f32 %v1743, %v1817
      %v1826 = vmax.f32 %v1744, %v1820
      %v1827 = vld [vmem:[%s1] sm:$0x1]
      %v1829 = vlaneseq
      %v1830 = vshrl.u32 %v1829, 7
      %v1831 = vsub.s32 0, %v1830
      %v1832 = vrot.slane %v1827, %v1831
      %v1834 = vadd.f32 %v1823, %v1832
      %v1835 = vadd.f32 %v1824, %v1832
      %v1836 = vadd.f32 %v1825, %v1832
      %v1837 = vadd.f32 %v1826, %v1832
      %v1838 = vmax.f32 %v1834, 0.0
      %v1839 = vmax.f32 %v1835, 0.0
      %v1840 = vmax.f32 %v1836, 0.0
      %v1841 = vmax.f32 %v1837, 0.0
      %vm1842 = vcmask 261120
      %1843 = vst.msk [vmem:[%s206] sm:$0xff] %vm1842, %v1838
      %1844 = vst.msk [vmem:[%s206 + $0x8] sm:$0xff] %vm1842, %v1839
      %1845 = vst.msk [vmem:[%s206 + $0x10] sm:$0xff] %vm1842, %v1840
      %1846 = vst.msk [vmem:[%s206 + $0x18] sm:$0xff] %vm1842, %v1841
      %s1847 = smul.u32 4, %s20
      %p1848 = scmp.lt.s32.totalorder %s1847, 15
      %s1849 = scalar_select %p1848, %s1847, 15
      %s1850 = smul.addr %s1849, 8
      %s1851 = scalar_lea.vmem %s4, %s1850
      // Predicated region
      $region33: #{mnist_cnn_forward.7} parent=31 // pred_check
        %p1852 = pneg %p106
      $region34: #{mnist_cnn_forward.7} parent=31 // pred_check_branch
        %1854 = sbr.rel (%p1852) target = $region36
      $region35: #{mnist_cnn_forward.7} parent=31 // pred_region
        %s1855 = smul.u32 4, %s20
      $region36: #{mnist_cnn_forward.7} parent=31 // pred_fallthru
        _
    $region32: #{mnist_cnn_forward.7} parent=5 // pred_fallthru
      _
    %p1856 = scmp.le.s32.totalorder 2, %s15
    // Predicated region
    $region37: #{mnist_cnn_forward.7} parent=5 // pred_check
      %p1857 = pneg %p1856
    $region38: #{mnist_cnn_forward.7} parent=5 // pred_check_branch
      %1859 = sbr.rel (%p1857) target = $region40
    $region39: #{mnist_cnn_forward.7} parent=5 // pred_region
      %s1860 = ssub.s32 %s15, 2
      // Predicated region
      $region41: #{mnist_cnn_forward.7} parent=39 // pred_check
        %p1861 = pneg %p112
      $region42: #{mnist_cnn_forward.7} parent=39 // pred_check_branch
        %1863 = sbr.rel (%p1861) target = $region44
      $region43: #{mnist_cnn_forward.7} parent=39 // pred_region
        %s1864 = smul.u32 4, %s21
        %p1865 = scmp.lt.s32.totalorder %s1864, 15
        %s1866 = scalar_select %p1865, %s1864, 15
        %s1867 = smul.addr %s1866, 8
        %s1868 = scalar_lea.vmem %s4, %s1867
      $region44: #{mnist_cnn_forward.7} parent=39 // pred_fallthru
        _
    $region40: #{mnist_cnn_forward.7} parent=5 // pred_fallthru
      _
  $region6: #{mnist_cnn_forward.7} parent=0 // loop_footer
    %s19 = sadd.s32 1, %s15
  $region7: #{mnist_cnn_forward.7} parent=0 // loop_footer_branch
    %14 = sbr.rel target = $region3
  $region8: #{mnist_cnn_forward.7} parent=0 // loop_exit
    _

// kernel: mnist_cnn_forward.8
$region0: #{mnist_cnn_forward.8}
  #allocation0 [shape = 'u32[]', space=smem, size = 0x4, offset = 0x4, fixed_abs, tag = 'smem constant byte address 0x4 - core index']
  #allocation1 [shape = 'u32[144,128]{1,0:T(1,128)}', space=vmem, size = 0x12000, scoped, tag = 'internal scratch']
  #allocation2 [shape = 'u32[2048]{0}', space=vmem, size = 0x2000, scoped, tag = 'scoped memory for mnist_cnn_forward.8']
  #allocation3 [shape = 'u32[2048]{0}', space=vmem, size = 0x2000, scoped, tag = 'scoped memory for mnist_cnn_forward.8']
  #allocation4 [shape = 'u32[2048]{0}', space=vmem, size = 0x2000, scoped, tag = 'scoped memory for mnist_cnn_forward.8']
  #allocation5 [shape = 'u32[2048]{0}', space=vmem, size = 0x2000, scoped, tag = 'scoped memory for mnist_cnn_forward.8']
  #allocation6 [shape = 'u32[2048]{0}', space=vmem, size = 0x2000, scoped, tag = 'scoped memory for mnist_cnn_forward.8']
  %s0 = inlined_call_operand.vmem [shape: f32[1568,128], index: 0, kind: input, shape index: {}]
  %s1 = inlined_call_operand.vmem [shape: f32[1,128], index: 1, kind: input, shape index: {}]
  %s2 = inlined_call_operand.vmem [shape: f32[128,10], index: 2, kind: input, shape index: {}]
  %s3 = inlined_call_operand.vmem [shape: f32[1,10], index: 3, kind: input, shape index: {}]
  %s4 = inlined_call_operand.vmem [shape: f32[2,1568], index: 4, kind: input, shape index: {}]
  %s5 = inlined_call_operand.<no memory space> [shape: f32[], index: 5, kind: input, shape index: {}]
  %s6 = inlined_call_operand.vmem [shape: f32[8,10], index: 6, kind: output, shape index: {}]
  %s7 = sld [smem:[#allocation0]]
  $region30: #{mnist_cnn_forward.8} parent=0
    _
  %s9 = ssub.s32 1, %s7
  %s10 = scalar_select 0, %s9, %s7
  %v11 = vstv %s5
  $region1: #{mnist_cnn_forward.8} parent=0
    #allocation7 [shape = 'u8[53248]{0}', space=vmem, size = 0xd000, dematerialized = true, scoped, tag = 'FusionAdapter Buffer %fusion.5 = f32[8,1568]{1,0:T(8,128)} fusion(%param_4.1, %param_5), kind=kLoop, calls=%fused_computation.5.clone, metadata={op_name="jit(mnist_cnn_forward)/jit(_pad)/pad" stack_frame_id=42}']
    // Predicated region
    $region2: #{mnist_cnn_forward.8} parent=1 // pred_check
      _
    $region3: #{mnist_cnn_forward.8} parent=1 // pred_check_branch
      %13 = sbr.rel (0) target = $region5
    $region4: #{mnist_cnn_forward.8} parent=1 // pred_region
      _
    $region5: #{mnist_cnn_forward.8} parent=1 // pred_fallthru
      _
    // Predicated region
    $region6: #{mnist_cnn_forward.8} parent=1 // pred_check
      _
    $region7: #{mnist_cnn_forward.8} parent=1 // pred_check_branch
      %15 = sbr.rel (0) target = $region9
    $region8: #{mnist_cnn_forward.8} parent=1 // pred_region
      _
    $region9: #{mnist_cnn_forward.8} parent=1 // pred_fallthru
      _
    // Predicated region
    $region10: #{mnist_cnn_forward.8} parent=1 // pred_check
      _
    $region11: #{mnist_cnn_forward.8} parent=1 // pred_check_branch
      %17 = sbr.rel (0) target = $region13
    $region12: #{mnist_cnn_forward.8} parent=1 // pred_region
      _
    $region13: #{mnist_cnn_forward.8} parent=1 // pred_fallthru
      _
    // Predicated region
    $region14: #{mnist_cnn_forward.8} parent=1 // pred_check
      _
    $region15: #{mnist_cnn_forward.8} parent=1 // pred_check_branch
      %19 = sbr.rel (0) target = $region17
    $region16: #{mnist_cnn_forward.8} parent=1 // pred_region
      _
    $region17: #{mnist_cnn_forward.8} parent=1 // pred_fallthru
      _
    // Predicated region
    $region18: #{mnist_cnn_forward.8} parent=1 // pred_check
      _
    $region19: #{mnist_cnn_forward.8} parent=1 // pred_check_branch
      %21 = sbr.rel (0) target = $region21
    $region20: #{mnist_cnn_forward.8} parent=1 // pred_region
      _
    $region21: #{mnist_cnn_forward.8} parent=1 // pred_fallthru
      _
    %v22 = vld [vmem:[%s4] sm:$0x3]
    %v23 = vlaneseq
    %v24 = vshrl.u32 %v23, 7
    %vm26 = vcmp.lt.s32.totalorder %v24, 2
    %v27 = vsel %vm26, %v22, %v11
    %v28 = vlaneseq
    %v29 = vand.u32 %v28, 127
    %vm31 = vcmp.lt.s32.totalorder %v29, 1568
    %v32 = vsel %vm31, %v27, %v11
    %34 = vst [vmem:[#allocation7] sm:$0xff] %v32
    %s35 = scalar_lea.vmem %s4, 2
    %v36 = vld [vmem:[%s35] sm:$0x3]
    %v37 = vlaneseq
    %v38 = vshrl.u32 %v37, 7
    %vm40 = vcmp.lt.s32.totalorder %v38, 2
    %v41 = vsel %vm40, %v36, %v11
    %v42 = vlaneseq
    %v43 = vand.u32 %v42, 127
    %v44 = vadd.s32 %v43, 128
    %vm45 = vcmp.lt.s32.totalorder %v44, 1568
    %v46 = vsel %vm45, %v41, %v11
    %s47 = scalar_lea.vmem [#allocation7], 8
    %49 = vst [vmem:[%s47] sm:$0xff] %v46
    %s50 = scalar_lea.vmem %s4, 4
    %v51 = vld [vmem:[%s50] sm:$0x3]
    %v52 = vlaneseq
    %v53 = vshrl.u32 %v52, 7
    %vm55 = vcmp.lt.s32.totalorder %v53, 2
    %v56 = vsel %vm55, %v51, %v11
    %v57 = vlaneseq
    %v58 = vand.u32 %v57, 127
    %v59 = vadd.s32 %v58, 256
    %vm60 = vcmp.lt.s32.totalorder %v59, 1568
    %v61 = vsel %vm60, %v56, %v11
    %s62 = scalar_lea.vmem [#allocation7], 16
    %64 = vst [vmem:[%s62] sm:$0xff] %v61
    %s65 = scalar_lea.vmem %s4, 6
    %v66 = vld [vmem:[%s65] sm:$0x3]
    %v67 = vlaneseq
    %v68 = vshrl.u32 %v67, 7
    %vm70 = vcmp.lt.s32.totalorder %v68, 2
    %v71 = vsel %vm70, %v66, %v11
    %v72 = vlaneseq
    %v73 = vand.u32 %v72, 127
    %v74 = vadd.s32 %v73, 384
    %vm75 = vcmp.lt.s32.totalorder %v74, 1568
    %v76 = vsel %vm75, %v71, %v11
    %s77 = scalar_lea.vmem [#allocation7], 24
    %79 = vst [vmem:[%s77] sm:$0xff] %v76
    %s80 = scalar_lea.vmem %s4, 8
    %v81 = vld [vmem:[%s80] sm:$0x3]
    %v82 = vlaneseq
    %v83 = vshrl.u32 %v82, 7
    %vm85 = vcmp.lt.s32.totalorder %v83, 2
    %v86 = vsel %vm85, %v81, %v11
    %v87 = vlaneseq
    %v88 = vand.u32 %v87, 127
    %v89 = vadd.s32 %v88, 512
    %vm90 = vcmp.lt.s32.totalorder %v89, 1568
    %v91 = vsel %vm90, %v86, %v11
    %s92 = scalar_lea.vmem [#allocation7], 32
    %94 = vst [vmem:[%s92] sm:$0xff] %v91
    %s95 = scalar_lea.vmem %s4, 10
    %v96 = vld [vmem:[%s95] sm:$0x3]
    %v97 = vlaneseq
    %v98 = vshrl.u32 %v97, 7
    %vm100 = vcmp.lt.s32.totalorder %v98, 2
    %v101 = vsel %vm100, %v96, %v11
    %v102 = vlaneseq
    %v103 = vand.u32 %v102, 127
    %v104 = vadd.s32 %v103, 640
    %vm105 = vcmp.lt.s32.totalorder %v104, 1568
    %v106 = vsel %vm105, %v101, %v11
    %s107 = scalar_lea.vmem [#allocation7], 40
    %109 = vst [vmem:[%s107] sm:$0xff] %v106
    %s110 = scalar_lea.vmem %s4, 12
    %v111 = vld [vmem:[%s110] sm:$0x3]
    %v112 = vlaneseq
    %v113 = vshrl.u32 %v112, 7
    %vm115 = vcmp.lt.s32.totalorder %v113, 2
    %v116 = vsel %vm115, %v111, %v11
    %v117 = vlaneseq
    %v118 = vand.u32 %v117, 127
    %v119 = vadd.s32 %v118, 768
    %vm120 = vcmp.lt.s32.totalorder %v119, 1568
    %v121 = vsel %vm120, %v116, %v11
    %s122 = scalar_lea.vmem [#allocation7], 48
    %124 = vst [vmem:[%s122] sm:$0xff] %v121
    %s125 = scalar_lea.vmem %s4, 14
    %v126 = vld [vmem:[%s125] sm:$0x3]
    %v127 = vlaneseq
    %v128 = vshrl.u32 %v127, 7
    %vm130 = vcmp.lt.s32.totalorder %v128, 2
    %v131 = vsel %vm130, %v126, %v11
    %v132 = vlaneseq
    %v133 = vand.u32 %v132, 127
    %v134 = vadd.s32 %v133, 896
    %vm135 = vcmp.lt.s32.totalorder %v134, 1568
    %v136 = vsel %vm135, %v131, %v11
    %s137 = scalar_lea.vmem [#allocation7], 56
    %139 = vst [vmem:[%s137] sm:$0xff] %v136
    %s140 = scalar_lea.vmem %s4, 16
    %v141 = vld [vmem:[%s140] sm:$0x3]
    %v142 = vlaneseq
    %v143 = vshrl.u32 %v142, 7
    %vm145 = vcmp.lt.s32.totalorder %v143, 2
    %v146 = vsel %vm145, %v141, %v11
    %v147 = vlaneseq
    %v148 = vand.u32 %v147, 127
    %v149 = vadd.s32 %v148, 1024
    %vm150 = vcmp.lt.s32.totalorder %v149, 1568
    %v151 = vsel %vm150, %v146, %v11
    %s152 = scalar_lea.vmem [#allocation7], 64
    %154 = vst [vmem:[%s152] sm:$0xff] %v151
    %s155 = scalar_lea.vmem %s4, 18
    %v156 = vld [vmem:[%s155] sm:$0x3]
    %v157 = vlaneseq
    %v158 = vshrl.u32 %v157, 7
    %vm160 = vcmp.lt.s32.totalorder %v158, 2
    %v161 = vsel %vm160, %v156, %v11
    %v162 = vlaneseq
    %v163 = vand.u32 %v162, 127
    %v164 = vadd.s32 %v163, 1152
    %vm165 = vcmp.lt.s32.totalorder %v164, 1568
    %v166 = vsel %vm165, %v161, %v11
    %s167 = scalar_lea.vmem [#allocation7], 72
    %169 = vst [vmem:[%s167] sm:$0xff] %v166
    %s170 = scalar_lea.vmem %s4, 20
    %v171 = vld [vmem:[%s170] sm:$0x3]
    %v172 = vlaneseq
    %v173 = vshrl.u32 %v172, 7
    %vm175 = vcmp.lt.s32.totalorder %v173, 2
    %v176 = vsel %vm175, %v171, %v11
    %v177 = vlaneseq
    %v178 = vand.u32 %v177, 127
    %v179 = vadd.s32 %v178, 1280
    %vm180 = vcmp.lt.s32.totalorder %v179, 1568
    %v181 = vsel %vm180, %v176, %v11
    %s182 = scalar_lea.vmem [#allocation7], 80
    %184 = vst [vmem:[%s182] sm:$0xff] %v181
    %s185 = scalar_lea.vmem %s4, 22
    %v186 = vld [vmem:[%s185] sm:$0x3]
    %v187 = vlaneseq
    %v188 = vshrl.u32 %v187, 7
    %vm190 = vcmp.lt.s32.totalorder %v188, 2
    %v191 = vsel %vm190, %v186, %v11
    %v192 = vlaneseq
    %v193 = vand.u32 %v192, 127
    %v194 = vadd.s32 %v193, 1408
    %vm195 = vcmp.lt.s32.totalorder %v194, 1568
    %v196 = vsel %vm195, %v191, %v11
    %s197 = scalar_lea.vmem [#allocation7], 88
    %199 = vst [vmem:[%s197] sm:$0xff] %v196
    %s200 = scalar_lea.vmem %s4, 24
    %v201 = vld [vmem:[%s200] sm:$0x3]
    %v202 = vlaneseq
    %v203 = vshrl.u32 %v202, 7
    %vm205 = vcmp.lt.s32.totalorder %v203, 2
    %v206 = vsel %vm205, %v201, %v11
    %v207 = vlaneseq
    %v208 = vand.u32 %v207, 127
    %v209 = vadd.s32 %v208, 1536
    %vm210 = vcmp.lt.s32.totalorder %v209, 1568
    %v211 = vsel %vm210, %v206, %v11
    %s212 = scalar_lea.vmem [#allocation7], 96
    %214 = vst [vmem:[%s212] sm:$0xff] %v211
    %v215 = vld [vmem:[#allocation7] sm:$0xff]
    %v216 = vld [vmem:[#allocation7 + $0x8] sm:$0xff]
    %v217 = vld [vmem:[#allocation7 + $0x10] sm:$0xff]
    %v218 = vld [vmem:[#allocation7 + $0x18] sm:$0xff]
    %v219 = vld [vmem:[#allocation7 + $0x20] sm:$0xff]
    %v220 = vld [vmem:[#allocation7 + $0x28] sm:$0xff]
    %v221 = vld [vmem:[#allocation7 + $0x30] sm:$0xff]
    %v222 = vld [vmem:[#allocation7 + $0x38] sm:$0xff]
    %v223 = vld [vmem:[#allocation7 + $0x40] sm:$0xff]
    %v224 = vld [vmem:[#allocation7 + $0x48] sm:$0xff]
    %v225 = vld [vmem:[#allocation7 + $0x50] sm:$0xff]
    %v226 = vld [vmem:[#allocation7 + $0x58] sm:$0xff]
    %v227 = vld [vmem:[#allocation7 + $0x60] sm:$0xff]
    %v228 = vld [vmem:[%s0] sm:$0xff]
    %v229 = vld [vmem:[%s0 + $0x8] sm:$0xff]
    %v230 = vld [vmem:[%s0 + $0x10] sm:$0xff]
    %v231 = vld [vmem:[%s0 + $0x18] sm:$0xff]
    %v232 = vld [vmem:[%s0 + $0x20] sm:$0xff]
    %v233 = vld [vmem:[%s0 + $0x28] sm:$0xff]
    %v234 = vld [vmem:[%s0 + $0x30] sm:$0xff]
    %v235 = vld [vmem:[%s0 + $0x38] sm:$0xff]
    %v236 = vld [vmem:[%s0 + $0x40] sm:$0xff]
    %v237 = vld [vmem:[%s0 + $0x48] sm:$0xff]
    %v238 = vld [vmem:[%s0 + $0x50] sm:$0xff]
    %v239 = vld [vmem:[%s0 + $0x58] sm:$0xff]
    %v240 = vld [vmem:[%s0 + $0x60] sm:$0xff]
    %v241 = vld [vmem:[%s0 + $0x68] sm:$0xff]
    %v242 = vld [vmem:[%s0 + $0x70] sm:$0xff]
    %v243 = vld [vmem:[%s0 + $0x78] sm:$0xff]
    %v244 = vld [vmem:[%s0 + $0x80] sm:$0xff]
    %v245 = vld [vmem:[%s0 + $0x88] sm:$0xff]
    %v246 = vld [vmem:[%s0 + $0x90] sm:$0xff]
    %v247 = vld [vmem:[%s0 + $0x98] sm:$0xff]
    %v248 = vld [vmem:[%s0 + $0xa0] sm:$0xff]
    %v249 = vld [vmem:[%s0 + $0xa8] sm:$0xff]
    %v250 = vld [vmem:[%s0 + $0xb0] sm:$0xff]
    %v251 = vld [vmem:[%s0 + $0xb8] sm:$0xff]
    %v252 = vld [vmem:[%s0 + $0xc0] sm:$0xff]
    %v253 = vld [vmem:[%s0 + $0xc8] sm:$0xff]
    %v254 = vld [vmem:[%s0 + $0xd0] sm:$0xff]
    %v255 = vld [vmem:[%s0 + $0xd8] sm:$0xff]
    %v256 = vld [vmem:[%s0 + $0xe0] sm:$0xff]
    %v257 = vld [vmem:[%s0 + $0xe8] sm:$0xff]
    %v258 = vld [vmem:[%s0 + $0xf0] sm:$0xff]
    %v259 = vld [vmem:[%s0 + $0xf8] sm:$0xff]
    %v260 = vld [vmem:[%s0 + $0x100] sm:$0xff]
    %v261 = vld [vmem:[%s0 + $0x108] sm:$0xff]
    %v262 = vld [vmem:[%s0 + $0x110] sm:$0xff]
    %v263 = vld [vmem:[%s0 + $0x118] sm:$0xff]
    %v264 = vld [vmem:[%s0 + $0x120] sm:$0xff]
    %v265 = vld [vmem:[%s0 + $0x128] sm:$0xff]
    %v266 = vld [vmem:[%s0 + $0x130] sm:$0xff]
    %v267 = vld [vmem:[%s0 + $0x138] sm:$0xff]
    %v268 = vld [vmem:[%s0 + $0x140] sm:$0xff]
    %v269 = vld [vmem:[%s0 + $0x148] sm:$0xff]
    %v270 = vld [vmem:[%s0 + $0x150] sm:$0xff]
    %v271 = vld [vmem:[%s0 + $0x158] sm:$0xff]
    %v272 = vld [vmem:[%s0 + $0x160] sm:$0xff]
    %v273 = vld [vmem:[%s0 + $0x168] sm:$0xff]
    %v274 = vld [vmem:[%s0 + $0x170] sm:$0xff]
    %v275 = vld [vmem:[%s0 + $0x178] sm:$0xff]
    %v276 = vld [vmem:[%s0 + $0x180] sm:$0xff]
    %v277 = vld [vmem:[%s0 + $0x188] sm:$0xff]
    %v278 = vld [vmem:[%s0 + $0x190] sm:$0xff]
    %v279 = vld [vmem:[%s0 + $0x198] sm:$0xff]
    %v280 = vld [vmem:[%s0 + $0x1a0] sm:$0xff]
    %v281 = vld [vmem:[%s0 + $0x1a8] sm:$0xff]
    %v282 = vld [vmem:[%s0 + $0x1b0] sm:$0xff]
    %v283 = vld [vmem:[%s0 + $0x1b8] sm:$0xff]
    %v284 = vld [vmem:[%s0 + $0x1c0] sm:$0xff]
    %v285 = vld [vmem:[%s0 + $0x1c8] sm:$0xff]
    %v286 = vld [vmem:[%s0 + $0x1d0] sm:$0xff]
    %v287 = vld [vmem:[%s0 + $0x1d8] sm:$0xff]
    %v288 = vld [vmem:[%s0 + $0x1e0] sm:$0xff]
    %v289 = vld [vmem:[%s0 + $0x1e8] sm:$0xff]
    %v290 = vld [vmem:[%s0 + $0x1f0] sm:$0xff]
    %v291 = vld [vmem:[%s0 + $0x1f8] sm:$0xff]
    %v292 = vld [vmem:[%s0 + $0x200] sm:$0xff]
    %v293 = vld [vmem:[%s0 + $0x208] sm:$0xff]
    %v294 = vld [vmem:[%s0 + $0x210] sm:$0xff]
    %v295 = vld [vmem:[%s0 + $0x218] sm:$0xff]
    %v296 = vld [vmem:[%s0 + $0x220] sm:$0xff]
    %v297 = vld [vmem:[%s0 + $0x228] sm:$0xff]
    %v298 = vld [vmem:[%s0 + $0x230] sm:$0xff]
    %v299 = vld [vmem:[%s0 + $0x238] sm:$0xff]
    %v300 = vld [vmem:[%s0 + $0x240] sm:$0xff]
    %v301 = vld [vmem:[%s0 + $0x248] sm:$0xff]
    %v302 = vld [vmem:[%s0 + $0x250] sm:$0xff]
    %v303 = vld [vmem:[%s0 + $0x258] sm:$0xff]
    %v304 = vld [vmem:[%s0 + $0x260] sm:$0xff]
    %v305 = vld [vmem:[%s0 + $0x268] sm:$0xff]
    %v306 = vld [vmem:[%s0 + $0x270] sm:$0xff]
    %v307 = vld [vmem:[%s0 + $0x278] sm:$0xff]
    %v308 = vld [vmem:[%s0 + $0x280] sm:$0xff]
    %v309 = vld [vmem:[%s0 + $0x288] sm:$0xff]
    %v310 = vld [vmem:[%s0 + $0x290] sm:$0xff]
    %v311 = vld [vmem:[%s0 + $0x298] sm:$0xff]
    %v312 = vld [vmem:[%s0 + $0x2a0] sm:$0xff]
    %v313 = vld [vmem:[%s0 + $0x2a8] sm:$0xff]
    %v314 = vld [vmem:[%s0 + $0x2b0] sm:$0xff]
    %v315 = vld [vmem:[%s0 + $0x2b8] sm:$0xff]
    %v316 = vld [vmem:[%s0 + $0x2c0] sm:$0xff]
    %v317 = vld [vmem:[%s0 + $0x2c8] sm:$0xff]
    %v318 = vld [vmem:[%s0 + $0x2d0] sm:$0xff]
    %v319 = vld [vmem:[%s0 + $0x2d8] sm:$0xff]
    %v320 = vld [vmem:[%s0 + $0x2e0] sm:$0xff]
    %v321 = vld [vmem:[%s0 + $0x2e8] sm:$0xff]
    %v322 = vld [vmem:[%s0 + $0x2f0] sm:$0xff]
    %v323 = vld [vmem:[%s0 + $0x2f8] sm:$0xff]
    %v324 = vld [vmem:[%s0 + $0x300] sm:$0xff]
    %v325 = vld [vmem:[%s0 + $0x308] sm:$0xff]
    %v326 = vld [vmem:[%s0 + $0x310] sm:$0xff]
    %v327 = vld [vmem:[%s0 + $0x318] sm:$0xff]
    %v328 = vld [vmem:[%s0 + $0x320] sm:$0xff]
    %v329 = vld [vmem:[%s0 + $0x328] sm:$0xff]
    %v330 = vld [vmem:[%s0 + $0x330] sm:$0xff]
    %v331 = vld [vmem:[%s0 + $0x338] sm:$0xff]
    %v332 = vld [vmem:[%s0 + $0x340] sm:$0xff]
    %v333 = vld [vmem:[%s0 + $0x348] sm:$0xff]
    %v334 = vld [vmem:[%s0 + $0x350] sm:$0xff]
    %v335 = vld [vmem:[%s0 + $0x358] sm:$0xff]
    %v336 = vld [vmem:[%s0 + $0x360] sm:$0xff]
    %v337 = vld [vmem:[%s0 + $0x368] sm:$0xff]
    %v338 = vld [vmem:[%s0 + $0x370] sm:$0xff]
    %v339 = vld [vmem:[%s0 + $0x378] sm:$0xff]
    %v340 = vld [vmem:[%s0 + $0x380] sm:$0xff]
    %v341 = vld [vmem:[%s0 + $0x388] sm:$0xff]
    %v342 = vld [vmem:[%s0 + $0x390] sm:$0xff]
    %v343 = vld [vmem:[%s0 + $0x398] sm:$0xff]
    %v344 = vld [vmem:[%s0 + $0x3a0] sm:$0xff]
    %v345 = vld [vmem:[%s0 + $0x3a8] sm:$0xff]
    %v346 = vld [vmem:[%s0 + $0x3b0] sm:$0xff]
    %v347 = vld [vmem:[%s0 + $0x3b8] sm:$0xff]
    %v348 = vld [vmem:[%s0 + $0x3c0] sm:$0xff]
    %v349 = vld [vmem:[%s0 + $0x3c8] sm:$0xff]
    %v350 = vld [vmem:[%s0 + $0x3d0] sm:$0xff]
    %v351 = vld [vmem:[%s0 + $0x3d8] sm:$0xff]
    %v352 = vld [vmem:[%s0 + $0x3e0] sm:$0xff]
    %v353 = vld [vmem:[%s0 + $0x3e8] sm:$0xff]
    %v354 = vld [vmem:[%s0 + $0x3f0] sm:$0xff]
    %v355 = vld [vmem:[%s0 + $0x3f8] sm:$0xff]
    %v356 = vld [vmem:[%s0 + $0x400] sm:$0xff]
    %v357 = vld [vmem:[%s0 + $0x408] sm:$0xff]
    %v358 = vld [vmem:[%s0 + $0x410] sm:$0xff]
    %v359 = vld [vmem:[%s0 + $0x418] sm:$0xff]
    %v360 = vld [vmem:[%s0 + $0x420] sm:$0xff]
    %v361 = vld [vmem:[%s0 + $0x428] sm:$0xff]
    %v362 = vld [vmem:[%s0 + $0x430] sm:$0xff]
    %v363 = vld [vmem:[%s0 + $0x438] sm:$0xff]
    %v364 = vld [vmem:[%s0 + $0x440] sm:$0xff]
    %v365 = vld [vmem:[%s0 + $0x448] sm:$0xff]
    %v366 = vld [vmem:[%s0 + $0x450] sm:$0xff]
    %v367 = vld [vmem:[%s0 + $0x458] sm:$0xff]
    %v368 = vld [vmem:[%s0 + $0x460] sm:$0xff]
    %v369 = vld [vmem:[%s0 + $0x468] sm:$0xff]
    %v370 = vld [vmem:[%s0 + $0x470] sm:$0xff]
    %v371 = vld [vmem:[%s0 + $0x478] sm:$0xff]
    %v372 = vld [vmem:[%s0 + $0x480] sm:$0xff]
    %v373 = vld [vmem:[%s0 + $0x488] sm:$0xff]
    %v374 = vld [vmem:[%s0 + $0x490] sm:$0xff]
    %v375 = vld [vmem:[%s0 + $0x498] sm:$0xff]
    %v376 = vld [vmem:[%s0 + $0x4a0] sm:$0xff]
    %v377 = vld [vmem:[%s0 + $0x4a8] sm:$0xff]
    %v378 = vld [vmem:[%s0 + $0x4b0] sm:$0xff]
    %v379 = vld [vmem:[%s0 + $0x4b8] sm:$0xff]
    %v380 = vld [vmem:[%s0 + $0x4c0] sm:$0xff]
    %v381 = vld [vmem:[%s0 + $0x4c8] sm:$0xff]
    %v382 = vld [vmem:[%s0 + $0x4d0] sm:$0xff]
    %v383 = vld [vmem:[%s0 + $0x4d8] sm:$0xff]
    %v384 = vld [vmem:[%s0 + $0x4e0] sm:$0xff]
    %v385 = vld [vmem:[%s0 + $0x4e8] sm:$0xff]
    %v386 = vld [vmem:[%s0 + $0x4f0] sm:$0xff]
    %v387 = vld [vmem:[%s0 + $0x4f8] sm:$0xff]
    %v388 = vld [vmem:[%s0 + $0x500] sm:$0xff]
    %v389 = vld [vmem:[%s0 + $0x508] sm:$0xff]
    %v390 = vld [vmem:[%s0 + $0x510] sm:$0xff]
    %v391 = vld [vmem:[%s0 + $0x518] sm:$0xff]
    %v392 = vld [vmem:[%s0 + $0x520] sm:$0xff]
    %v393 = vld [vmem:[%s0 + $0x528] sm:$0xff]
    %v394 = vld [vmem:[%s0 + $0x530] sm:$0xff]
    %v395 = vld [vmem:[%s0 + $0x538] sm:$0xff]
    %v396 = vld [vmem:[%s0 + $0x540] sm:$0xff]
    %v397 = vld [vmem:[%s0 + $0x548] sm:$0xff]
    %v398 = vld [vmem:[%s0 + $0x550] sm:$0xff]
    %v399 = vld [vmem:[%s0 + $0x558] sm:$0xff]
    %v400 = vld [vmem:[%s0 + $0x560] sm:$0xff]
    %v401 = vld [vmem:[%s0 + $0x568] sm:$0xff]
    %v402 = vld [vmem:[%s0 + $0x570] sm:$0xff]
    %v403 = vld [vmem:[%s0 + $0x578] sm:$0xff]
    %v404 = vld [vmem:[%s0 + $0x580] sm:$0xff]
    %v405 = vld [vmem:[%s0 + $0x588] sm:$0xff]
    %v406 = vld [vmem:[%s0 + $0x590] sm:$0xff]
    %v407 = vld [vmem:[%s0 + $0x598] sm:$0xff]
    %v408 = vld [vmem:[%s0 + $0x5a0] sm:$0xff]
    %v409 = vld [vmem:[%s0 + $0x5a8] sm:$0xff]
    %v410 = vld [vmem:[%s0 + $0x5b0] sm:$0xff]
    %v411 = vld [vmem:[%s0 + $0x5b8] sm:$0xff]
    %v412 = vld [vmem:[%s0 + $0x5c0] sm:$0xff]
    %v413 = vld [vmem:[%s0 + $0x5c8] sm:$0xff]
    %v414 = vld [vmem:[%s0 + $0x5d0] sm:$0xff]
    %v415 = vld [vmem:[%s0 + $0x5d8] sm:$0xff]
    %v416 = vld [vmem:[%s0 + $0x5e0] sm:$0xff]
    %v417 = vld [vmem:[%s0 + $0x5e8] sm:$0xff]
    %v418 = vld [vmem:[%s0 + $0x5f0] sm:$0xff]
    %v419 = vld [vmem:[%s0 + $0x5f8] sm:$0xff]
    %v420 = vld [vmem:[%s0 + $0x600] sm:$0xff]
    %v421 = vld [vmem:[%s0 + $0x608] sm:$0xff]
    %v422 = vld [vmem:[%s0 + $0x610] sm:$0xff]
    %v423 = vld [vmem:[%s0 + $0x618] sm:$0xff]
    %v424 = vld [vmem:[%s1] sm:$0x1]
    %v426 = vlaneseq
    %v427 = vshrl.u32 %v426, 7
    %v428 = vsub.s32 0, %v427
    %v429 = vrot.slane %v424, %v428
    %vm431 = vcmask 261120
    %v433 = vsel %vm431, %v227, 0
    %435 = vmatprep.subr.mxu0 0.0
    %436 = vmatpush1.msra.mxu0 %v228
    %437 = vmatprep.subr.mxu0 0.0
    %438 = vmatpush1.msra.mxu0 %v229
    %439 = vmatprep.subr.mxu0 0.0
    %440 = vmatpush1.msra.mxu0 %v230
    %441 = vmatprep.subr.mxu0 0.0
    %442 = vmatpush1.msra.mxu0 %v231
    %443 = vmatprep.subr.mxu0 0.0
    %444 = vmatpush1.msra.mxu0 %v232
    %445 = vmatprep.subr.mxu0 0.0
    %446 = vmatpush1.msra.mxu0 %v233
    %447 = vmatprep.subr.mxu0 0.0
    %448 = vmatpush1.msra.mxu0 %v234
    %449 = vmatprep.subr.mxu0 0.0
    %450 = vmatpush1.msra.mxu0 %v235
    %451 = vmatprep.subr.mxu0 0.0
    %452 = vmatpush1.msra.mxu0 %v236
    %453 = vmatprep.subr.mxu0 0.0
    %454 = vmatpush1.msra.mxu0 %v237
    %455 = vmatprep.subr.mxu0 0.0
    %456 = vmatpush1.msra.mxu0 %v238
    %457 = vmatprep.subr.mxu0 0.0
    %458 = vmatpush1.msra.mxu0 %v239
    %459 = vmatprep.subr.mxu0 0.0
    %460 = vmatpush1.msra.mxu0 %v240
    %461 = vmatprep.subr.mxu0 0.0
    %462 = vmatpush1.msra.mxu0 %v241
    %463 = vmatprep.subr.mxu0 0.0
    %464 = vmatpush1.msra.mxu0 %v242
    %465 = vmatprep.subr.mxu0 0.0
    %466 = vmatpush1.msra.mxu0 %v243
    %467 = vmatprep.subr.mxu0 0.0
    %468 = vmatpush1.msra.mxu0 %v244
    %469 = vmatprep.subr.mxu0 0.0
    %470 = vmatpush1.msra.mxu0 %v245
    %471 = vmatprep.subr.mxu0 0.0
    %472 = vmatpush1.msra.mxu0 %v246
    %473 = vmatprep.subr.mxu0 0.0
    %474 = vmatpush1.msra.mxu0 %v247
    %475 = vmatprep.subr.mxu0 0.0
    %476 = vmatpush1.msra.mxu0 %v248
    %477 = vmatprep.subr.mxu0 0.0
    %478 = vmatpush1.msra.mxu0 %v249
    %479 = vmatprep.subr.mxu0 0.0
    %480 = vmatpush1.msra.mxu0 %v250
    %481 = vmatprep.subr.mxu0 0.0
    %482 = vmatpush1.msra.mxu0 %v251
    %483 = vmatprep.subr.mxu0 0.0
    %484 = vmatpush1.msra.mxu0 %v252
    %485 = vmatprep.subr.mxu0 0.0
    %486 = vmatpush1.msra.mxu0 %v253
    %487 = vmatprep.subr.mxu0 0.0
    %488 = vmatpush1.msra.mxu0 %v254
    %489 = vmatprep.subr.mxu0 0.0
    %490 = vmatpush1.msra.mxu0 %v255
    %491 = vmatprep.subr.mxu0 0.0
    %492 = vmatpush1.msra.mxu0 %v256
    %493 = vmatprep.subr.mxu0 0.0
    %494 = vmatpush1.msra.mxu0 %v257
    %495 = vmatprep.subr.mxu0 0.0
    %496 = vmatpush1.msra.mxu0 %v258
    %497 = vmatprep.subr.mxu0 0.0
    %498 = vmatpush1.msra.mxu0 %v259
    %499 = vmatprep.mubr.f32.mxu0 %v216
    %500 = vmatmul.mubr.f32.gmra.mrb[0].mxu0 %v215
    %v501 = vpop.f32.mrb[0].mxu0
    %v502 = vadd.f32 %v429, %v501
    %v503 = vpop.f32.mrb[0].mxu0
    %504 = vdwg.mxu0
    %505 = vmatprep.subr.mxu0 0.0
    %506 = vmatpush1.msra.mxu0 %v260
    %507 = vmatprep.subr.mxu0 0.0
    %508 = vmatpush1.msra.mxu0 %v261
    %509 = vmatprep.subr.mxu0 0.0
    %510 = vmatpush1.msra.mxu0 %v262
    %511 = vmatprep.subr.mxu0 0.0
    %512 = vmatpush1.msra.mxu0 %v263
    %513 = vmatprep.subr.mxu0 0.0
    %514 = vmatpush1.msra.mxu0 %v264
    %515 = vmatprep.subr.mxu0 0.0
    %516 = vmatpush1.msra.mxu0 %v265
    %517 = vmatprep.subr.mxu0 0.0
    %518 = vmatpush1.msra.mxu0 %v266
    %519 = vmatprep.subr.mxu0 0.0
    %520 = vmatpush1.msra.mxu0 %v267
    %521 = vmatprep.subr.mxu0 0.0
    %522 = vmatpush1.msra.mxu0 %v268
    %523 = vmatprep.subr.mxu0 0.0
    %524 = vmatpush1.msra.mxu0 %v269
    %525 = vmatprep.subr.mxu0 0.0
    %526 = vmatpush1.msra.mxu0 %v270
    %527 = vmatprep.subr.mxu0 0.0
    %528 = vmatpush1.msra.mxu0 %v271
    %529 = vmatprep.subr.mxu0 0.0
    %530 = vmatpush1.msra.mxu0 %v272
    %531 = vmatprep.subr.mxu0 0.0
    %532 = vmatpush1.msra.mxu0 %v273
    %533 = vmatprep.subr.mxu0 0.0
    %534 = vmatpush1.msra.mxu0 %v274
    %535 = vmatprep.subr.mxu0 0.0
    %536 = vmatpush1.msra.mxu0 %v275
    %537 = vmatprep.subr.mxu0 0.0
    %538 = vmatpush1.msra.mxu0 %v276
    %539 = vmatprep.subr.mxu0 0.0
    %540 = vmatpush1.msra.mxu0 %v277
    %541 = vmatprep.subr.mxu0 0.0
    %542 = vmatpush1.msra.mxu0 %v278
    %543 = vmatprep.subr.mxu0 0.0
    %544 = vmatpush1.msra.mxu0 %v279
    %545 = vmatprep.subr.mxu0 0.0
    %546 = vmatpush1.msra.mxu0 %v280
    %547 = vmatprep.subr.mxu0 0.0
    %548 = vmatpush1.msra.mxu0 %v281
    %549 = vmatprep.subr.mxu0 0.0
    %550 = vmatpush1.msra.mxu0 %v282
    %551 = vmatprep.subr.mxu0 0.0
    %552 = vmatpush1.msra.mxu0 %v283
    %553 = vmatprep.subr.mxu0 0.0
    %554 = vmatpush1.msra.mxu0 %v284
    %555 = vmatprep.subr.mxu0 0.0
    %556 = vmatpush1.msra.mxu0 %v285
    %557 = vmatprep.subr.mxu0 0.0
    %558 = vmatpush1.msra.mxu0 %v286
    %559 = vmatprep.subr.mxu0 0.0
    %560 = vmatpush1.msra.mxu0 %v287
    %561 = vmatprep.subr.mxu0 0.0
    %562 = vmatpush1.msra.mxu0 %v288
    %563 = vmatprep.subr.mxu0 0.0
    %564 = vmatpush1.msra.mxu0 %v289
    %565 = vmatprep.subr.mxu0 0.0
    %566 = vmatpush1.msra.mxu0 %v290
    %567 = vmatprep.subr.mxu0 0.0
    %568 = vmatpush1.msra.mxu0 %v291
    %569 = vmatprep.mubr.f32.mxu0 %v218
    %570 = vmatmul.mubr.f32.gmra.mrb[0].mxu0 %v217
    %v571 = vpop.f32.mrb[0].mxu0
    %v572 = vadd.f32 %v502, %v571
    %v573 = vpop.f32.mrb[0].mxu0
    %574 = vdwg.mxu0
    %575 = vmatprep.subr.mxu0 0.0
    %576 = vmatpush1.msra.mxu0 %v292
    %577 = vmatprep.subr.mxu0 0.0
    %578 = vmatpush1.msra.mxu0 %v293
    %579 = vmatprep.subr.mxu0 0.0
    %580 = vmatpush1.msra.mxu0 %v294
    %581 = vmatprep.subr.mxu0 0.0
    %582 = vmatpush1.msra.mxu0 %v295
    %583 = vmatprep.subr.mxu0 0.0
    %584 = vmatpush1.msra.mxu0 %v296
    %585 = vmatprep.subr.mxu0 0.0
    %586 = vmatpush1.msra.mxu0 %v297
    %587 = vmatprep.subr.mxu0 0.0
    %588 = vmatpush1.msra.mxu0 %v298
    %589 = vmatprep.subr.mxu0 0.0
    %590 = vmatpush1.msra.mxu0 %v299
    %591 = vmatprep.subr.mxu0 0.0
    %592 = vmatpush1.msra.mxu0 %v300
    %593 = vmatprep.subr.mxu0 0.0
    %594 = vmatpush1.msra.mxu0 %v301
    %595 = vmatprep.subr.mxu0 0.0
    %596 = vmatpush1.msra.mxu0 %v302
    %597 = vmatprep.subr.mxu0 0.0
    %598 = vmatpush1.msra.mxu0 %v303
    %599 = vmatprep.subr.mxu0 0.0
    %600 = vmatpush1.msra.mxu0 %v304
    %601 = vmatprep.subr.mxu0 0.0
    %602 = vmatpush1.msra.mxu0 %v305
    %603 = vmatprep.subr.mxu0 0.0
    %604 = vmatpush1.msra.mxu0 %v306
    %605 = vmatprep.subr.mxu0 0.0
    %606 = vmatpush1.msra.mxu0 %v307
    %607 = vmatprep.subr.mxu0 0.0
    %608 = vmatpush1.msra.mxu0 %v308
    %609 = vmatprep.subr.mxu0 0.0
    %610 = vmatpush1.msra.mxu0 %v309
    %611 = vmatprep.subr.mxu0 0.0
    %612 = vmatpush1.msra.mxu0 %v310
    %613 = vmatprep.subr.mxu0 0.0
    %614 = vmatpush1.msra.mxu0 %v311
    %615 = vmatprep.subr.mxu0 0.0
    %616 = vmatpush1.msra.mxu0 %v312
    %617 = vmatprep.subr.mxu0 0.0
    %618 = vmatpush1.msra.mxu0 %v313
    %619 = vmatprep.subr.mxu0 0.0
    %620 = vmatpush1.msra.mxu0 %v314
    %621 = vmatprep.subr.mxu0 0.0
    %622 = vmatpush1.msra.mxu0 %v315
    %623 = vmatprep.subr.mxu0 0.0
    %624 = vmatpush1.msra.mxu0 %v316
    %625 = vmatprep.subr.mxu0 0.0
    %626 = vmatpush1.msra.mxu0 %v317
    %627 = vmatprep.subr.mxu0 0.0
    %628 = vmatpush1.msra.mxu0 %v318
    %629 = vmatprep.subr.mxu0 0.0
    %630 = vmatpush1.msra.mxu0 %v319
    %631 = vmatprep.subr.mxu0 0.0
    %632 = vmatpush1.msra.mxu0 %v320
    %633 = vmatprep.subr.mxu0 0.0
    %634 = vmatpush1.msra.mxu0 %v321
    %635 = vmatprep.subr.mxu0 0.0
    %636 = vmatpush1.msra.mxu0 %v322
    %637 = vmatprep.subr.mxu0 0.0
    %638 = vmatpush1.msra.mxu0 %v323
    %639 = vmatprep.mubr.f32.mxu0 %v220
    %640 = vmatmul.mubr.f32.gmra.mrb[0].mxu0 %v219
    %v641 = vpop.f32.mrb[0].mxu0
    %v642 = vadd.f32 %v572, %v641
    %v643 = vpop.f32.mrb[0].mxu0
    %644 = vdwg.mxu0
    %645 = vmatprep.subr.mxu0 0.0
    %646 = vmatpush1.msra.mxu0 %v324
    %647 = vmatprep.subr.mxu0 0.0
    %648 = vmatpush1.msra.mxu0 %v325
    %649 = vmatprep.subr.mxu0 0.0
    %650 = vmatpush1.msra.mxu0 %v326
    %651 = vmatprep.subr.mxu0 0.0
    %652 = vmatpush1.msra.mxu0 %v327
    %653 = vmatprep.subr.mxu0 0.0
    %654 = vmatpush1.msra.mxu0 %v328
    %655 = vmatprep.subr.mxu0 0.0
    %656 = vmatpush1.msra.mxu0 %v329
    %657 = vmatprep.subr.mxu0 0.0
    %658 = vmatpush1.msra.mxu0 %v330
    %659 = vmatprep.subr.mxu0 0.0
    %660 = vmatpush1.msra.mxu0 %v331
    %661 = vmatprep.subr.mxu0 0.0
    %662 = vmatpush1.msra.mxu0 %v332
    %663 = vmatprep.subr.mxu0 0.0
    %664 = vmatpush1.msra.mxu0 %v333
    %665 = vmatprep.subr.mxu0 0.0
    %666 = vmatpush1.msra.mxu0 %v334
    %667 = vmatprep.subr.mxu0 0.0
    %668 = vmatpush1.msra.mxu0 %v335
    %669 = vmatprep.subr.mxu0 0.0
    %670 = vmatpush1.msra.mxu0 %v336
    %671 = vmatprep.subr.mxu0 0.0
    %672 = vmatpush1.msra.mxu0 %v337
    %673 = vmatprep.subr.mxu0 0.0
    %674 = vmatpush1.msra.mxu0 %v338
    %675 = vmatprep.subr.mxu0 0.0
    %676 = vmatpush1.msra.mxu0 %v339
    %677 = vmatprep.subr.mxu0 0.0
    %678 = vmatpush1.msra.mxu0 %v340
    %679 = vmatprep.subr.mxu0 0.0
    %680 = vmatpush1.msra.mxu0 %v341
    %681 = vmatprep.subr.mxu0 0.0
    %682 = vmatpush1.msra.mxu0 %v342
    %683 = vmatprep.subr.mxu0 0.0
    %684 = vmatpush1.msra.mxu0 %v343
    %685 = vmatprep.subr.mxu0 0.0
    %686 = vmatpush1.msra.mxu0 %v344
    %687 = vmatprep.subr.mxu0 0.0
    %688 = vmatpush1.msra.mxu0 %v345
    %689 = vmatprep.subr.mxu0 0.0
    %690 = vmatpush1.msra.mxu0 %v346
    %691 = vmatprep.subr.mxu0 0.0
    %692 = vmatpush1.msra.mxu0 %v347
    %693 = vmatprep.subr.mxu0 0.0
    %694 = vmatpush1.msra.mxu0 %v348
    %695 = vmatprep.subr.mxu0 0.0
    %696 = vmatpush1.msra.mxu0 %v349
    %697 = vmatprep.subr.mxu0 0.0
    %698 = vmatpush1.msra.mxu0 %v350
    %699 = vmatprep.subr.mxu0 0.0
    %700 = vmatpush1.msra.mxu0 %v351
    %701 = vmatprep.subr.mxu0 0.0
    %702 = vmatpush1.msra.mxu0 %v352
    %703 = vmatprep.subr.mxu0 0.0
    %704 = vmatpush1.msra.mxu0 %v353
    %705 = vmatprep.subr.mxu0 0.0
    %706 = vmatpush1.msra.mxu0 %v354
    %707 = vmatprep.subr.mxu0 0.0
    %708 = vmatpush1.msra.mxu0 %v355
    %709 = vmatprep.mubr.f32.mxu0 %v222
    %710 = vmatmul.mubr.f32.gmra.mrb[0].mxu0 %v221
    %v711 = vpop.f32.mrb[0].mxu0
    %v712 = vadd.f32 %v642, %v711
    %v713 = vpop.f32.mrb[0].mxu0
    %714 = vdwg.mxu0
    %715 = vmatprep.subr.mxu0 0.0
    %716 = vmatpush1.msra.mxu0 %v356
    %717 = vmatprep.subr.mxu0 0.0
    %718 = vmatpush1.msra.mxu0 %v357
    %719 = vmatprep.subr.mxu0 0.0
    %720 = vmatpush1.msra.mxu0 %v358
    %721 = vmatprep.subr.mxu0 0.0
    %722 = vmatpush1.msra.mxu0 %v359
    %723 = vmatprep.subr.mxu0 0.0
    %724 = vmatpush1.msra.mxu0 %v360
    %725 = vmatprep.subr.mxu0 0.0
    %726 = vmatpush1.msra.mxu0 %v361
    %727 = vmatprep.subr.mxu0 0.0
    %728 = vmatpush1.msra.mxu0 %v362
    %729 = vmatprep.subr.mxu0 0.0
    %730 = vmatpush1.msra.mxu0 %v363
    %731 = vmatprep.subr.mxu0 0.0
    %732 = vmatpush1.msra.mxu0 %v364
    %733 = vmatprep.subr.mxu0 0.0
    %734 = vmatpush1.msra.mxu0 %v365
    %735 = vmatprep.subr.mxu0 0.0
    %736 = vmatpush1.msra.mxu0 %v366
    %737 = vmatprep.subr.mxu0 0.0
    %738 = vmatpush1.msra.mxu0 %v367
    %739 = vmatprep.subr.mxu0 0.0
    %740 = vmatpush1.msra.mxu0 %v368
    %741 = vmatprep.subr.mxu0 0.0
    %742 = vmatpush1.msra.mxu0 %v369
    %743 = vmatprep.subr.mxu0 0.0
    %744 = vmatpush1.msra.mxu0 %v370
    %745 = vmatprep.subr.mxu0 0.0
    %746 = vmatpush1.msra.mxu0 %v371
    %747 = vmatprep.subr.mxu0 0.0
    %748 = vmatpush1.msra.mxu0 %v372
    %749 = vmatprep.subr.mxu0 0.0
    %750 = vmatpush1.msra.mxu0 %v373
    %751 = vmatprep.subr.mxu0 0.0
    %752 = vmatpush1.msra.mxu0 %v374
    %753 = vmatprep.subr.mxu0 0.0
    %754 = vmatpush1.msra.mxu0 %v375
    %755 = vmatprep.subr.mxu0 0.0
    %756 = vmatpush1.msra.mxu0 %v376
    %757 = vmatprep.subr.mxu0 0.0
    %758 = vmatpush1.msra.mxu0 %v377
    %759 = vmatprep.subr.mxu0 0.0
    %760 = vmatpush1.msra.mxu0 %v378
    %761 = vmatprep.subr.mxu0 0.0
    %762 = vmatpush1.msra.mxu0 %v379
    %763 = vmatprep.subr.mxu0 0.0
    %764 = vmatpush1.msra.mxu0 %v380
    %765 = vmatprep.subr.mxu0 0.0
    %766 = vmatpush1.msra.mxu0 %v381
    %767 = vmatprep.subr.mxu0 0.0
    %768 = vmatpush1.msra.mxu0 %v382
    %769 = vmatprep.subr.mxu0 0.0
    %770 = vmatpush1.msra.mxu0 %v383
    %771 = vmatprep.subr.mxu0 0.0
    %772 = vmatpush1.msra.mxu0 %v384
    %773 = vmatprep.subr.mxu0 0.0
    %774 = vmatpush1.msra.mxu0 %v385
    %775 = vmatprep.subr.mxu0 0.0
    %776 = vmatpush1.msra.mxu0 %v386
    %777 = vmatprep.subr.mxu0 0.0
    %778 = vmatpush1.msra.mxu0 %v387
    %779 = vmatprep.mubr.f32.mxu0 %v224
    %780 = vmatmul.mubr.f32.gmra.mrb[0].mxu0 %v223
    %v781 = vpop.f32.mrb[0].mxu0
    %v782 = vadd.f32 %v712, %v781
    %v783 = vpop.f32.mrb[0].mxu0
    %784 = vdwg.mxu0
    %785 = vmatprep.subr.mxu0 0.0
    %786 = vmatpush1.msra.mxu0 %v388
    %787 = vmatprep.subr.mxu0 0.0
    %788 = vmatpush1.msra.mxu0 %v389
    %789 = vmatprep.subr.mxu0 0.0
    %790 = vmatpush1.msra.mxu0 %v390
    %791 = vmatprep.subr.mxu0 0.0
    %792 = vmatpush1.msra.mxu0 %v391
    %793 = vmatprep.subr.mxu0 0.0
    %794 = vmatpush1.msra.mxu0 %v392
    %795 = vmatprep.subr.mxu0 0.0
    %796 = vmatpush1.msra.mxu0 %v393
    %797 = vmatprep.subr.mxu0 0.0
    %798 = vmatpush1.msra.mxu0 %v394
    %799 = vmatprep.subr.mxu0 0.0
    %800 = vmatpush1.msra.mxu0 %v395
    %801 = vmatprep.subr.mxu0 0.0
    %802 = vmatpush1.msra.mxu0 %v396
    %803 = vmatprep.subr.mxu0 0.0
    %804 = vmatpush1.msra.mxu0 %v397
    %805 = vmatprep.subr.mxu0 0.0
    %806 = vmatpush1.msra.mxu0 %v398
    %807 = vmatprep.subr.mxu0 0.0
    %808 = vmatpush1.msra.mxu0 %v399
    %809 = vmatprep.subr.mxu0 0.0
    %810 = vmatpush1.msra.mxu0 %v400
    %811 = vmatprep.subr.mxu0 0.0
    %812 = vmatpush1.msra.mxu0 %v401
    %813 = vmatprep.subr.mxu0 0.0
    %814 = vmatpush1.msra.mxu0 %v402
    %815 = vmatprep.subr.mxu0 0.0
    %816 = vmatpush1.msra.mxu0 %v403
    %817 = vmatprep.subr.mxu0 0.0
    %818 = vmatpush1.msra.mxu0 %v404
    %819 = vmatprep.subr.mxu0 0.0
    %820 = vmatpush1.msra.mxu0 %v405
    %821 = vmatprep.subr.mxu0 0.0
    %822 = vmatpush1.msra.mxu0 %v406
    %823 = vmatprep.subr.mxu0 0.0
    %824 = vmatpush1.msra.mxu0 %v407
    %825 = vmatprep.subr.mxu0 0.0
    %826 = vmatpush1.msra.mxu0 %v408
    %827 = vmatprep.subr.mxu0 0.0
    %828 = vmatpush1.msra.mxu0 %v409
    %829 = vmatprep.subr.mxu0 0.0
    %830 = vmatpush1.msra.mxu0 %v410
    %831 = vmatprep.subr.mxu0 0.0
    %832 = vmatpush1.msra.mxu0 %v411
    %833 = vmatprep.subr.mxu0 0.0
    %834 = vmatpush1.msra.mxu0 %v412
    %835 = vmatprep.subr.mxu0 0.0
    %836 = vmatpush1.msra.mxu0 %v413
    %837 = vmatprep.subr.mxu0 0.0
    %838 = vmatpush1.msra.mxu0 %v414
    %839 = vmatprep.subr.mxu0 0.0
    %840 = vmatpush1.msra.mxu0 %v415
    %841 = vmatprep.subr.mxu0 0.0
    %842 = vmatpush1.msra.mxu0 %v416
    %843 = vmatprep.subr.mxu0 0.0
    %844 = vmatpush1.msra.mxu0 %v417
    %845 = vmatprep.subr.mxu0 0.0
    %846 = vmatpush1.msra.mxu0 %v418
    %847 = vmatprep.subr.mxu0 0.0
    %848 = vmatpush1.msra.mxu0 %v419
    %849 = vmatprep.mubr.f32.mxu0 %v226
    %850 = vmatmul.mubr.f32.gmra.mrb[0].mxu0 %v225
    %v851 = vpop.f32.mrb[0].mxu0
    %v852 = vadd.f32 %v782, %v851
    %v853 = vpop.f32.mrb[0].mxu0
    %854 = vdwg.mxu0
    %855 = vmatprep.subr.mxu0 0.0
    %856 = vmatpush1.msra.mxu0 %v420
    %857 = vmatprep.subr.mxu0 0.0
    %858 = vmatpush1.msra.mxu0 %v421
    %859 = vmatprep.subr.mxu0 0.0
    %860 = vmatpush1.msra.mxu0 %v422
    %861 = vmatprep.subr.mxu0 0.0
    %862 = vmatpush1.msra.mxu0 %v423
    %863 = vmatprep.subr.mxu0 0.0
    %864 = vmatpush1.msra.mxu0 0.0
    %865 = vmatprep.subr.mxu0 0.0
    %866 = vmatpush1.msra.mxu0 0.0
    %867 = vmatprep.subr.mxu0 0.0
    %868 = vmatpush1.msra.mxu0 0.0
    %869 = vmatprep.subr.mxu0 0.0
    %870 = vmatpush1.msra.mxu0 0.0
    %871 = vmatprep.subr.mxu0 0.0
    %872 = vmatpush1.msra.mxu0 0.0
    %873 = vmatprep.subr.mxu0 0.0
    %874 = vmatpush1.msra.mxu0 0.0
    %875 = vmatprep.subr.mxu0 0.0
    %876 = vmatpush1.msra.mxu0 0.0
    %877 = vmatprep.subr.mxu0 0.0
    %878 = vmatpush1.msra.mxu0 0.0
    %879 = vmatprep.subr.mxu0 0.0
    %880 = vmatpush1.msra.mxu0 0.0
    %881 = vmatprep.subr.mxu0 0.0
    %882 = vmatpush1.msra.mxu0 0.0
    %883 = vmatprep.subr.mxu0 0.0
    %884 = vmatpush1.msra.mxu0 0.0
    %885 = vmatprep.subr.mxu0 0.0
    %886 = vmatpush1.msra.mxu0 0.0
    %887 = vmatprep.subr.mxu0 0.0
    %888 = vmatpush1.msra.mxu0 0.0
    %889 = vmatprep.subr.mxu0 0.0
    %890 = vmatpush1.msra.mxu0 0.0
    %891 = vmatprep.subr.mxu0 0.0
    %892 = vmatpush1.msra.mxu0 0.0
    %893 = vmatprep.subr.mxu0 0.0
    %894 = vmatpush1.msra.mxu0 0.0
    %895 = vmatprep.subr.mxu0 0.0
    %896 = vmatpush1.msra.mxu0 0.0
    %897 = vmatprep.subr.mxu0 0.0
    %898 = vmatpush1.msra.mxu0 0.0
    %899 = vmatprep.subr.mxu0 0.0
    %900 = vmatpush1.msra.mxu0 0.0
    %901 = vmatprep.subr.mxu0 0.0
    %902 = vmatpush1.msra.mxu0 0.0
    %903 = vmatprep.subr.mxu0 0.0
    %904 = vmatpush1.msra.mxu0 0.0
    %905 = vmatprep.subr.mxu0 0.0
    %906 = vmatpush1.msra.mxu0 0.0
    %907 = vmatprep.subr.mxu0 0.0
    %908 = vmatpush1.msra.mxu0 0.0
    %909 = vmatprep.subr.mxu0 0.0
    %910 = vmatpush1.msra.mxu0 0.0
    %911 = vmatprep.subr.mxu0 0.0
    %912 = vmatpush1.msra.mxu0 0.0
    %913 = vmatprep.subr.mxu0 0.0
    %914 = vmatpush1.msra.mxu0 0.0
    %915 = vmatprep.subr.mxu0 0.0
    %916 = vmatpush1.msra.mxu0 0.0
    %917 = vmatprep.subr.mxu0 0.0
    %918 = vmatpush1.msra.mxu0 0.0
    %919 = vmatprep.mubr.f32.mxu0 0.0
    %920 = vmatmul.mubr.f32.gmra.mrb[0].mxu0 %v433
    %v921 = vpop.f32.mrb[0].mxu0
    %v922 = vadd.f32 %v852, %v921
    %v923 = vpop.f32.mrb[0].mxu0
    %924 = vdwg.mxu0
    %v925 = vmax.f32 %v922, 0.0
    %v926 = vld [vmem:[%s2] sm:$0xff]
    %v927 = vld [vmem:[%s2 + $0x8] sm:$0xff]
    %v928 = vld [vmem:[%s2 + $0x10] sm:$0xff]
    %v929 = vld [vmem:[%s2 + $0x18] sm:$0xff]
    %v930 = vld [vmem:[%s2 + $0x20] sm:$0xff]
    %v931 = vld [vmem:[%s2 + $0x28] sm:$0xff]
    %v932 = vld [vmem:[%s2 + $0x30] sm:$0xff]
    %v933 = vld [vmem:[%s2 + $0x38] sm:$0xff]
    %v934 = vld [vmem:[%s2 + $0x40] sm:$0xff]
    %v935 = vld [vmem:[%s2 + $0x48] sm:$0xff]
    %v936 = vld [vmem:[%s2 + $0x50] sm:$0xff]
    %v937 = vld [vmem:[%s2 + $0x58] sm:$0xff]
    %v938 = vld [vmem:[%s2 + $0x60] sm:$0xff]
    %v939 = vld [vmem:[%s2 + $0x68] sm:$0xff]
    %v940 = vld [vmem:[%s2 + $0x70] sm:$0xff]
    %v941 = vld [vmem:[%s2 + $0x78] sm:$0xff]
    %v942 = vld [vmem:[%s3] sm:$0x1]
    %v944 = vlaneseq
    %v945 = vshrl.u32 %v944, 7
    %v946 = vsub.s32 0, %v945
    %v947 = vrot.slane %v942, %v946
    %949 = vmatprep.subr.mxu0 0.0
    %950 = vmatpush1.msra.mxu0 %v926
    %951 = vmatprep.subr.mxu0 0.0
    %952 = vmatpush1.msra.mxu0 %v927
    %953 = vmatprep.subr.mxu0 0.0
    %954 = vmatpush1.msra.mxu0 %v928
    %955 = vmatprep.subr.mxu0 0.0
    %956 = vmatpush1.msra.mxu0 %v929
    %957 = vmatprep.subr.mxu0 0.0
    %958 = vmatpush1.msra.mxu0 %v930
    %959 = vmatprep.subr.mxu0 0.0
    %960 = vmatpush1.msra.mxu0 %v931
    %961 = vmatprep.subr.mxu0 0.0
    %962 = vmatpush1.msra.mxu0 %v932
    %963 = vmatprep.subr.mxu0 0.0
    %964 = vmatpush1.msra.mxu0 %v933
    %965 = vmatprep.subr.mxu0 0.0
    %966 = vmatpush1.msra.mxu0 %v934
    %967 = vmatprep.subr.mxu0 0.0
    %968 = vmatpush1.msra.mxu0 %v935
    %969 = vmatprep.subr.mxu0 0.0
    %970 = vmatpush1.msra.mxu0 %v936
    %971 = vmatprep.subr.mxu0 0.0
    %972 = vmatpush1.msra.mxu0 %v937
    %973 = vmatprep.subr.mxu0 0.0
    %974 = vmatpush1.msra.mxu0 %v938
    %975 = vmatprep.subr.mxu0 0.0
    %976 = vmatpush1.msra.mxu0 %v939
    %977 = vmatprep.subr.mxu0 0.0
    %978 = vmatpush1.msra.mxu0 %v940
    %979 = vmatprep.subr.mxu0 0.0
    %980 = vmatpush1.msra.mxu0 %v941
    %981 = vmatprep.subr.mxu0 0.0
    %982 = vmatpush1.msra.mxu0 0.0
    %983 = vmatprep.subr.mxu0 0.0
    %984 = vmatpush1.msra.mxu0 0.0
    %985 = vmatprep.subr.mxu0 0.0
    %986 = vmatpush1.msra.mxu0 0.0
    %987 = vmatprep.subr.mxu0 0.0
    %988 = vmatpush1.msra.mxu0 0.0
    %989 = vmatprep.subr.mxu0 0.0
    %990 = vmatpush1.msra.mxu0 0.0
    %991 = vmatprep.subr.mxu0 0.0
    %992 = vmatpush1.msra.mxu0 0.0
    %993 = vmatprep.subr.mxu0 0.0
    %994 = vmatpush1.msra.mxu0 0.0
    %995 = vmatprep.subr.mxu0 0.0
    %996 = vmatpush1.msra.mxu0 0.0
    %997 = vmatprep.subr.mxu0 0.0
    %998 = vmatpush1.msra.mxu0 0.0
    %999 = vmatprep.subr.mxu0 0.0
    %1000 = vmatpush1.msra.mxu0 0.0
    %1001 = vmatprep.subr.mxu0 0.0
    %1002 = vmatpush1.msra.mxu0 0.0
    %1003 = vmatprep.subr.mxu0 0.0
    %1004 = vmatpush1.msra.mxu0 0.0
    %1005 = vmatprep.subr.mxu0 0.0
    %1006 = vmatpush1.msra.mxu0 0.0
    %1007 = vmatprep.subr.mxu0 0.0
    %1008 = vmatpush1.msra.mxu0 0.0
    %1009 = vmatprep.subr.mxu0 0.0
    %1010 = vmatpush1.msra.mxu0 0.0
    %1011 = vmatprep.subr.mxu0 0.0
    %1012 = vmatpush1.msra.mxu0 0.0
    %1013 = vmatprep.mubr.f32.mxu0 0.0
    %1014 = vmatmul.mubr.f32.gmra.mrb[0].mxu0 %v925
    %v1015 = vpop.f32.mrb[0].mxu0
    %v1016 = vadd.f32 %v947, %v1015
    %v1017 = vpop.f32.mrb[0].mxu0
    %1018 = vdwg.mxu0
    %vm1019 = vcmask 80896
    %1020 = vst.msk [vmem:[%s6] sm:$0xff] %vm1019, %v1016
    // Predicated region
    $region22: #{mnist_cnn_forward.8} parent=1 // pred_check
      _
    $region23: #{mnist_cnn_forward.8} parent=1 // pred_check_branch
      %1022 = sbr.rel (0) target = $region25
    $region24: #{mnist_cnn_forward.8} parent=1 // pred_region
      _
    $region25: #{mnist_cnn_forward.8} parent=1 // pred_fallthru
      _
    // Predicated region
    $region26: #{mnist_cnn_forward.8} parent=1 // pred_check
      _
    $region27: #{mnist_cnn_forward.8} parent=1 // pred_check_branch
      %1024 = sbr.rel (0) target = $region29
    $region28: #{mnist_cnn_forward.8} parent=1 // pred_region
      _
    $region29: #{mnist_cnn_forward.8} parent=1 // pred_fallthru
      _

</llo_original>
